<compile_context>
chip_gen: v5e
topology: v5e:2x2
jax: 0.10.0
libtpu: 0.0.40
codegen_flags: <defaults>
</compile_context>

<pallas_src>
import math
import numpy as np
import jax
import jax.numpy as jnp
from jax import lax
from jax.experimental import pallas as pl
from jax.experimental.pallas import tpu as pltpu


# ---------------------------------------------------------------------------
# Fused Pallas kernel:  upsample + pad + concat + (conv3x3 + BN + ReLU) x 2
# ---------------------------------------------------------------------------

def _up_double_conv_kernel(x2_ref, x1_ref, ahp_ref, awpt_ref,
                           w1_ref, s1_ref, b1_ref,
                           w2_ref, s2_ref, b2_ref,
                           o_ref, xp_ref, yp_ref, cols_ref):
    # x2_ref  : (1, C2, H, W)          skip feature (NCHW)
    # x1_ref  : (1, C1, H1, W1)        low-res feature (NCHW)
    # ahp_ref : (H+2, H1)              H-interp matrix incl. diff-pad + halo zero rows
    # awpt_ref: (W1, W+2)              W-interp matrix (transposed) incl. pad/halo cols
    # w1_ref  : (3, Cm, 3*(C2+C1))     conv1 weights, dy-major, [dx0|dx1|dx2]-stacked
    # w2_ref  : (3, Cout, 3*Cm)        conv2 weights, same layout
    # s*_ref, b*_ref : (C, 1)          fused BN scale / bias
    # o_ref   : (1, Cout, H*W)         output, spatial flattened on the lane axis
    # xp_ref  : VMEM (C2+C1, H+2, W+2) padded concat input for conv1
    # yp_ref  : VMEM (Cm, H+2, W+2)    padded conv1 output, staged for conv2
    # cols_ref: VMEM (3*(C2+C1), H*W)  per-dy im2col staging buffer
    f32 = jnp.float32
    Ctot, Hp, Wp = xp_ref.shape
    H, W = Hp - 2, Wp - 2
    C2 = x2_ref.shape[1]
    C1, H1, W1 = x1_ref.shape[1], x1_ref.shape[2], x1_ref.shape[3]
    Cm = yp_ref.shape[0]
    Cout = o_ref.shape[1]

    def zero_halo(ref, c):
        # zero only the 1-pixel halo border of channels [0:c]; interiors are
        # fully overwritten below (no full-scratch memset).
        ref[:c, 0:1, :] = jnp.zeros((c, 1, Wp), f32)
        ref[:c, Hp - 1:Hp, :] = jnp.zeros((c, 1, Wp), f32)
        ref[:c, :, 0:1] = jnp.zeros((c, Hp, 1), f32)
        ref[:c, :, Wp - 1:Wp] = jnp.zeros((c, Hp, 1), f32)

    # ---- x2 channel group: halo border + interior store ----
    zero_halo(xp_ref, C2)
    xp_ref[:C2, 1:H + 1, 1:W + 1] = x2_ref[0].astype(f32)

    # ---- x1 channel group: bilinear 2x upsample + diff-pad + halo, in VMEM ----
    # W interp: single (C1*H1, W1) @ (W1, W+2) matmul (leading-dim merge is free).
    t = jnp.dot(x1_ref[0].astype(f32).reshape(C1 * H1, W1), awpt_ref[...],
                preferred_element_type=f32).reshape(C1, H1, Wp)
    # H interp: batched contraction over H1 (the broadcast of the small (H+2, H1)
    # interp matrix is hoisted and done once; see TODO at file top).
    ahb = jnp.broadcast_to(ahp_ref[...], (C1, Hp, H1))
    xp_ref[C2:, :, :] = jnp.einsum("coh,chw->cow", ahb, t,
                                   preferred_element_type=f32)

    # ---- 3x3 conv as 3 dy-stacked matmuls: (Cout, 3*Cin) @ (3*Cin, H*W) ----
    def conv3x3(src_ref, cin, w_ref, cout):
        acc = jnp.zeros((cout, H * W), f32)
        for dy in range(3):
            slab = src_ref[:, dy:dy + H, :]                  # (cin, H, W+2), 1 load
            for dx in range(3):                              # explicit im2col rows
                cols_ref[dx * cin:(dx + 1) * cin, :] = (
                    slab[:, :, dx:dx + W].reshape(cin, H * W))
            acc += jnp.dot(w_ref[dy], cols_ref[:3 * cin, :],
                           preferred_element_type=f32)
        return acc

    # conv1 + BN + ReLU, staged into the pre-padded scratch for conv2 (no HBM trip)
    y1 = conv3x3(xp_ref, Ctot, w1_ref, Cm)
    y1 = jnp.maximum(y1 * s1_ref[...] + b1_ref[...], 0.0)
    zero_halo(yp_ref, Cm)
    yp_ref[:, 1:H + 1, 1:W + 1] = y1.reshape(Cm, H, W)

    # conv2 + BN + ReLU, single dense lane-major block store
    y2 = conv3x3(yp_ref, Cm, w2_ref, Cout)
    y2 = jnp.maximum(y2 * s2_ref[...] + b2_ref[...], 0.0)
    o_ref[0] = y2.astype(o_ref.dtype)


# ---------------------------------------------------------------------------
# Host-side helpers
# ---------------------------------------------------------------------------

def _interp_matrix(n_in, n_out):
    # PyTorch nn.Upsample(mode='bilinear', align_corners=True) along one axis.
    A = np.zeros((n_out, n_in), np.float32)
    if n_in == 1 or n_out == 1:
        A[:, 0] = 1.0
    else:
        src = np.arange(n_out) * (n_in - 1) / (n_out - 1)
        i0 = np.clip(np.floor(src).astype(np.int64), 0, n_in - 1)
        i1 = np.minimum(i0 + 1, n_in - 1)
        w1 = (src - i0).astype(np.float32)
        w0 = 1.0 - w1
        A[np.arange(n_out), i0] += w0
        A[np.arange(n_out), i1] += w1
    return A


def _padded_interp_matrices(H1, W1, H, W):
    # Interpolation matrices with the diffY/diffX pad and the conv's +1 halo folded
    # in as zero rows/cols, so no separate pad pass is ever materialized.
    H2u, W2u = 2 * H1, 2 * W1
    dY, dX = H - H2u, W - W2u
    ahp = np.zeros((H + 2, H1), np.float32)
    ahp[1 + dY // 2: 1 + dY // 2 + H2u, :] = _interp_matrix(H1, H2u)
    awp = np.zeros((W + 2, W1), np.float32)
    awp[1 + dX // 2: 1 + dX // 2 + W2u, :] = _interp_matrix(W1, W2u)
    return jnp.asarray(ahp), jnp.asarray(awp.T)


def _to_dy_stacked(w_oihw):
    # (Cout, Cin, 3, 3) -> (3, Cout, 3*Cin): index [dy, co, dx*Cin + ci].
    co, ci = w_oihw.shape[0], w_oihw.shape[1]
    return jnp.transpose(w_oihw, (2, 0, 3, 1)).reshape(3, co, 3 * ci)


def _vmem_limit_bytes(streamed, invariant, scratch, temps):
    # per-buffer sum (f32 words): streamed blocks & invariants double-buffered by
    # the pipeline, plus scratches and in-kernel temporaries, plus headroom,
    # clamped against the actual generation's VMEM capacity.
    est = 4 * (2 * streamed + 2 * invariant + scratch + temps) + (4 << 20)
    try:
        cap = int(getattr(pltpu.get_tpu_info(), "vmem_capacity_bytes", 64 << 20))
    except Exception:
        cap = 64 << 20   # v7x per-TensorCore VMEM: smallest current generation
    return int(min(max(est, 16 << 20), (cap * 9) // 10))


# ---------------------------------------------------------------------------
# Forward pass (public API is NCHW, matching PyTorch)
# ---------------------------------------------------------------------------

def up_forward(x1, x2, params):
    # x1: (N, C1, H1, W1) low-res feature; x2: (N, C2, H, W) skip feature.
    N, C1, H1, W1 = x1.shape
    N2, C2, H, W = x2.shape
    assert N == N2
    assert H >= 2 * H1 and W >= 2 * W1, (
        "Up kernel assumes diffY, diffX >= 0 (x2 spatial >= 2x upsampled x1)")
    Ctot = C2 + C1
    Hp, Wp = H + 2, W + 2
    Cm = params["w1dy"].shape[1]
    Cout = params["w2dy"].shape[1]
    ahp, awpt = _padded_interp_matrices(H1, W1, H, W)

    streamed = C2 * H * W + C1 * H1 * W1 + Cout * H * W
    invariant = (Hp * H1 + W1 * Wp + 3 * Cm * 3 * Ctot + 3 * Cout * 3 * Cm
                 + 2 * Cm + 2 * Cout)
    scratch = (Ctot + Cm) * Hp * Wp + 3 * Ctot * H * W
    temps = (C1 * Hp * H1 + C1 * H1 * Wp + C1 * Hp * Wp + Ctot * H * Wp
             + 2 * Cm * H * W + Cm * H * W + Cout * H * W)
    vmem_limit = _vmem_limit_bytes(streamed, invariant, scratch, temps)

    y = pl.pallas_call(
        _up_double_conv_kernel,
        out_shape=jax.ShapeDtypeStruct((N, Cout, H * W), x1.dtype),
        grid_spec=pltpu.PrefetchScalarGridSpec(
            num_scalar_prefetch=0,
            grid=(N,),
            in_specs=[
                pl.BlockSpec((1, C2, H, W), lambda n: (n, 0, 0, 0)),
                pl.BlockSpec((1, C1, H1, W1), lambda n: (n, 0, 0, 0)),
                pl.BlockSpec((Hp, H1), lambda n: (0, 0)),
                pl.BlockSpec((W1, Wp), lambda n: (0, 0)),
                pl.BlockSpec((3, Cm, 3 * Ctot), lambda n: (0, 0, 0)),
                pl.BlockSpec((Cm, 1), lambda n: (0, 0)),
                pl.BlockSpec((Cm, 1), lambda n: (0, 0)),
                pl.BlockSpec((3, Cout, 3 * Cm), lambda n: (0, 0, 0)),
                pl.BlockSpec((Cout, 1), lambda n: (0, 0)),
                pl.BlockSpec((Cout, 1), lambda n: (0, 0)),
            ],
            out_specs=pl.BlockSpec((1, Cout, H * W), lambda n: (n, 0, 0)),
            scratch_shapes=[
                pltpu.VMEM((Ctot, Hp, Wp), jnp.float32),
                pltpu.VMEM((Cm, Hp, Wp), jnp.float32),
                pltpu.VMEM((3 * Ctot, H * W), jnp.float32),
            ],
        ),
        compiler_params=pltpu.CompilerParams(
            dimension_semantics=("parallel",),
            vmem_limit_bytes=vmem_limit,
        ),
    )(x2, x1, ahp, awpt,
      params["w1dy"], params["scale1"], params["bias1"],
      params["w2dy"], params["scale2"], params["bias2"])

    return y.reshape(N, Cout, H, W)


# ---------------------------------------------------------------------------
# Pure-JAX reference (numerical verification of the kernel)
# ---------------------------------------------------------------------------

def up_forward_reference(x1, x2, raw):
    ah = jnp.asarray(_interp_matrix(x1.shape[2], 2 * x1.shape[2]))
    aw = jnp.asarray(_interp_matrix(x1.shape[3], 2 * x1.shape[3]))
    x1u = jnp.einsum("oh,nchw->ncow", ah, x1)
    x1u = jnp.einsum("pw,ncow->ncop", aw, x1u)
    diffY = x2.shape[2] - x1u.shape[2]
    diffX = x2.shape[3] - x1u.shape[3]
    x1u = jnp.pad(x1u, ((0, 0), (0, 0),
                        (diffY // 2, diffY - diffY // 2),
                        (diffX // 2, diffX - diffX // 2)))
    x = jnp.concatenate([x2, x1u], axis=1)

    def conv_bn_relu(z, w_oihw, scale, bias):
        z = lax.conv_general_dilated(z, w_oihw, (1, 1), "SAME",
                                     dimension_numbers=("NCHW", "OIHW", "NCHW"))
        z = z * scale.reshape(1, -1, 1, 1) + bias.reshape(1, -1, 1, 1)
        return jnp.maximum(z, 0.0)

    z = conv_bn_relu(x, raw["w1_oihw"], raw["scale1"], raw["bias1"])
    z = conv_bn_relu(z, raw["w2_oihw"], raw["scale2"], raw["bias2"])
    return z


# ---------------------------------------------------------------------------
# Main
# ---------------------------------------------------------------------------

if __name__ == "__main__":
    key = jax.random.PRNGKey(0)
    ks = jax.random.split(key, 6)

    N = 2
    C_low, C_skip = 4, 4                 # x1 / x2 channels
    in_channels = C_low + C_skip         # 8  (channels after concat)
    out_channels = 8
    mid_channels = in_channels // 2      # 4  (bilinear=True path)
    H1, W1 = 8, 8                        # x1 spatial
    H2, W2 = 16, 16                      # x2 spatial (= 2x)
    eps = 1e-5

    x1 = jax.random.normal(ks[0], (N, C_low, H1, W1), jnp.float32)
    x2 = jax.random.normal(ks[1], (N, C_skip, H2, W2), jnp.float32)

    def conv_init(k, cin, cout):
        kw, kb = jax.random.split(k)
        bound = 1.0 / math.sqrt(cin * 9)
        w = jax.random.uniform(kw, (cout, cin, 3, 3), jnp.float32, -bound, bound)
        b = jax.random.uniform(kb, (cout,), jnp.float32, -bound, bound)
        return w, b

    def bn_init(k, c):
        k1, k2, k3, k4 = jax.random.split(k, 4)
        gamma = 1.0 + 0.1 * jax.random.normal(k1, (c,), jnp.float32)
        beta = 0.1 * jax.random.normal(k2, (c,), jnp.float32)
        mean = 0.1 * jax.random.normal(k3, (c,), jnp.float32)
        var = jax.random.uniform(k4, (c,), jnp.float32, 0.5, 1.5)
        return gamma, beta, mean, var

    w1_oihw, b1 = conv_init(ks[2], in_channels, mid_channels)
    w2_oihw, b2 = conv_init(ks[3], mid_channels, out_channels)
    g1, be1, m1, v1 = bn_init(ks[4], mid_channels)
    g2, be2, m2, v2 = bn_init(ks[5], out_channels)

    def fold_bn(conv_b, gamma, beta, mean, var):
        scale = gamma / jnp.sqrt(var + eps)
        bias = beta + (conv_b - mean) * scale
        return scale, bias

    scale1, bias1 = fold_bn(b1, g1, be1, m1, v1)
    scale2, bias2 = fold_bn(b2, g2, be2, m2, v2)

    params = {
        # conv1 input-channel order matches torch.cat([x2, x1], dim=1) and the
        # kernel's concat-scratch layout (x2 rows first, upsampled x1 after).
        "w1dy": _to_dy_stacked(w1_oihw),
        "scale1": scale1.reshape(-1, 1),
        "bias1": bias1.reshape(-1, 1),
        "w2dy": _to_dy_stacked(w2_oihw),
        "scale2": scale2.reshape(-1, 1),
        "bias2": bias2.reshape(-1, 1),
    }
    raw = {"w1_oihw": w1_oihw, "scale1": scale1, "bias1": bias1,
           "w2_oihw": w2_oihw, "scale2": scale2, "bias2": bias2}

    out = jax.block_until_ready(jax.jit(up_forward)(x1, x2, params))
    ref = jax.block_until_ready(up_forward_reference(x1, x2, raw))

    assert out.shape == (N, out_channels, H2, W2), out.shape
    np.testing.assert_allclose(np.asarray(out), np.asarray(ref),
                               rtol=1e-4, atol=1e-4)

    print("KERNEL_OK")
</pallas_src>

<mosaic_0001>
module attributes {stable_mosaic.version = 11 : i64} {
  func.func @_up_double_conv_kernel(%arg0: i32, %arg1: memref<1x4x16x16xf32, #tpu.memory_space<vmem>>, %arg2: memref<1x4x8x8xf32, #tpu.memory_space<vmem>>, %arg3: memref<18x8xf32, #tpu.memory_space<vmem>>, %arg4: memref<8x18xf32, #tpu.memory_space<vmem>>, %arg5: memref<3x4x24xf32, #tpu.memory_space<vmem>>, %arg6: memref<4x1xf32, #tpu.memory_space<vmem>>, %arg7: memref<4x1xf32, #tpu.memory_space<vmem>>, %arg8: memref<3x8x12xf32, #tpu.memory_space<vmem>>, %arg9: memref<8x1xf32, #tpu.memory_space<vmem>>, %arg10: memref<8x1xf32, #tpu.memory_space<vmem>>, %arg11: memref<1x8x256xf32, #tpu.memory_space<vmem>>, %arg12: memref<8x18x18xf32, #tpu.memory_space<vmem>>, %arg13: memref<4x18x18xf32, #tpu.memory_space<vmem>>, %arg14: memref<24x256xf32, #tpu.memory_space<vmem>>) attributes {dimension_semantics = [#tpu.dimension_semantics<parallel>], iteration_bounds = array<i64: 2>, scalar_prefetch = 0 : i64, scratch_operands = 3 : i64, tpu.core_type = #tpu.core_type<tc>, window_params = [{transform_indices = @transform_0, window_bounds = array<i64: 1, 4, 16, 16>}, {transform_indices = @transform_1, window_bounds = array<i64: 1, 4, 8, 8>}, {pipeline_mode = #tpu.pipeline_mode<synchronous>, transform_indices = @transform_2, window_bounds = array<i64: 18, 8>}, {pipeline_mode = #tpu.pipeline_mode<synchronous>, transform_indices = @transform_3, window_bounds = array<i64: 8, 18>}, {pipeline_mode = #tpu.pipeline_mode<synchronous>, transform_indices = @transform_4, window_bounds = array<i64: 3, 4, 24>}, {pipeline_mode = #tpu.pipeline_mode<synchronous>, transform_indices = @transform_5, window_bounds = array<i64: 4, 1>}, {pipeline_mode = #tpu.pipeline_mode<synchronous>, transform_indices = @transform_6, window_bounds = array<i64: 4, 1>}, {pipeline_mode = #tpu.pipeline_mode<synchronous>, transform_indices = @transform_7, window_bounds = array<i64: 3, 8, 12>}, {pipeline_mode = #tpu.pipeline_mode<synchronous>, transform_indices = @transform_8, window_bounds = array<i64: 8, 1>}, {pipeline_mode = #tpu.pipeline_mode<synchronous>, transform_indices = @transform_9, window_bounds = array<i64: 8, 1>}, {transform_indices = @transform_10, window_bounds = array<i64: 1, 8, 256>}]} {
    %cst = arith.constant 0.000000e+00 : f32
    %0 = vector.broadcast %cst : f32 to vector<4x1x18xf32>
    %c0 = arith.constant 0 : index
    %c0_0 = arith.constant 0 : index
    %c0_1 = arith.constant 0 : index
    %1 = vector.load %arg12[%c0, %c0_0, %c0_1] : memref<8x18x18xf32, #tpu.memory_space<vmem>>, vector<4x1x18xf32>
    tpu.vector_store %arg12[%c0, %c0_0, %c0_1], %0 {strides = array<i32>} : memref<8x18x18xf32, #tpu.memory_space<vmem>>, vector<4x1x18xf32>,
    %cst_2 = arith.constant 0.000000e+00 : f32
    %2 = vector.broadcast %cst_2 : f32 to vector<4x1x18xf32>
    %c0_3 = arith.constant 0 : index
    %c17 = arith.constant 17 : index
    %c0_4 = arith.constant 0 : index
    %3 = vector.load %arg12[%c0_3, %c17, %c0_4] : memref<8x18x18xf32, #tpu.memory_space<vmem>>, vector<4x1x18xf32>
    tpu.vector_store %arg12[%c0_3, %c17, %c0_4], %2 {strides = array<i32>} : memref<8x18x18xf32, #tpu.memory_space<vmem>>, vector<4x1x18xf32>,
    %cst_5 = arith.constant 0.000000e+00 : f32
    %4 = vector.broadcast %cst_5 : f32 to vector<4x18x1xf32>
    %c0_6 = arith.constant 0 : index
    %c0_7 = arith.constant 0 : index
    %c0_8 = arith.constant 0 : index
    %5 = vector.load %arg12[%c0_6, %c0_7, %c0_8] : memref<8x18x18xf32, #tpu.memory_space<vmem>>, vector<4x18x1xf32>
    tpu.vector_store %arg12[%c0_6, %c0_7, %c0_8], %4 {strides = array<i32>} : memref<8x18x18xf32, #tpu.memory_space<vmem>>, vector<4x18x1xf32>,
    %cst_9 = arith.constant 0.000000e+00 : f32
    %6 = vector.broadcast %cst_9 : f32 to vector<4x18x1xf32>
    %c0_10 = arith.constant 0 : index
    %c0_11 = arith.constant 0 : index
    %c17_12 = arith.constant 17 : index
    %7 = vector.load %arg12[%c0_10, %c0_11, %c17_12] : memref<8x18x18xf32, #tpu.memory_space<vmem>>, vector<4x18x1xf32>
    tpu.vector_store %arg12[%c0_10, %c0_11, %c17_12], %6 {strides = array<i32>} : memref<8x18x18xf32, #tpu.memory_space<vmem>>, vector<4x18x1xf32>,
    %c0_13 = arith.constant 0 : index
    %c0_14 = arith.constant 0 : index
    %c0_15 = arith.constant 0 : index
    %c0_16 = arith.constant 0 : index
    %8 = vector.load %arg1[%c0_13, %c0_14, %c0_15, %c0_16] : memref<1x4x16x16xf32, #tpu.memory_space<vmem>>, vector<1x4x16x16xf32>
    %9 = vector.shape_cast %8 : vector<1x4x16x16xf32> to vector<4x16x16xf32>
    %c0_17 = arith.constant 0 : index
    %c1 = arith.constant 1 : index
    %c1_18 = arith.constant 1 : index
    %10 = vector.load %arg12[%c0_17, %c1, %c1_18] : memref<8x18x18xf32, #tpu.memory_space<vmem>>, vector<4x16x16xf32>
    tpu.vector_store %arg12[%c0_17, %c1, %c1_18], %9 {strides = array<i32>} : memref<8x18x18xf32, #tpu.memory_space<vmem>>, vector<4x16x16xf32>,
    %c0_19 = arith.constant 0 : index
    %c0_20 = arith.constant 0 : index
    %c0_21 = arith.constant 0 : index
    %c0_22 = arith.constant 0 : index
    %11 = vector.load %arg2[%c0_19, %c0_20, %c0_21, %c0_22] : memref<1x4x8x8xf32, #tpu.memory_space<vmem>>, vector<1x4x8x8xf32>
    %12 = vector.shape_cast %11 : vector<1x4x8x8xf32> to vector<4x8x8xf32>
    %13 = vector.shape_cast %12 : vector<4x8x8xf32> to vector<32x8xf32>
    %c0_23 = arith.constant 0 : index
    %c0_24 = arith.constant 0 : index
    %14 = vector.load %arg4[%c0_23, %c0_24] : memref<8x18xf32, #tpu.memory_space<vmem>>, vector<8x18xf32>
    %cst_25 = arith.constant dense<0.000000e+00> : vector<32x18xf32>
    %15 = tpu.matmul %13, %14, %cst_25 {dimension_numbers = #tpu.dot_dimension_numbers<[1], [0], [0], [1], [0, 0, 1, 1], [], []>} : vector<32x8xf32>, vector<8x18xf32>, vector<32x18xf32> -> vector<32x18xf32>
    %16 = vector.shape_cast %15 : vector<32x18xf32> to vector<4x8x18xf32>
    %c0_26 = arith.constant 0 : index
    %c0_27 = arith.constant 0 : index
    %17 = vector.load %arg3[%c0_26, %c0_27] : memref<18x8xf32, #tpu.memory_space<vmem>>, vector<18x8xf32>
    %18 = vector.shape_cast %17 : vector<18x8xf32> to vector<1x18x8xf32>
    %19 = vector.broadcast %18 : vector<1x18x8xf32> to vector<4x18x8xf32>
    "tpu.trace_start"() <{level = 10 : i32, message = "coh,chw->cow"}> : () -> ()
    %cst_28 = arith.constant dense<0.000000e+00> : vector<4x18x18xf32>
    %20 = tpu.matmul %19, %16, %cst_28 {dimension_numbers = #tpu.dot_dimension_numbers<[2], [1], [1], [2], [0, 0, 0, 1, 1, 2], [0], [0]>} : vector<4x18x8xf32>, vector<4x8x18xf32>, vector<4x18x18xf32> -> vector<4x18x18xf32>
    "tpu.trace_stop"() : () -> ()
    %c4 = arith.constant 4 : index
    %c0_29 = arith.constant 0 : index
    %c0_30 = arith.constant 0 : index
    %21 = vector.load %arg12[%c4, %c0_29, %c0_30] : memref<8x18x18xf32, #tpu.memory_space<vmem>>, vector<4x18x18xf32>
    tpu.vector_store %arg12[%c4, %c0_29, %c0_30], %20 {strides = array<i32>} : memref<8x18x18xf32, #tpu.memory_space<vmem>>, vector<4x18x18xf32>,
    %cst_31 = arith.constant 0.000000e+00 : f32
    %22 = vector.broadcast %cst_31 : f32 to vector<4x256xf32>
    %c0_32 = arith.constant 0 : index
    %c0_33 = arith.constant 0 : index
    %c0_34 = arith.constant 0 : index
    %23 = vector.load %arg12[%c0_32, %c0_33, %c0_34] : memref<8x18x18xf32, #tpu.memory_space<vmem>>, vector<8x16x18xf32>
    %24 = vector.extract_strided_slice %23 {offsets = [0, 0, 0], sizes = [8, 16, 16], strides = [1, 1, 1]} : vector<8x16x18xf32> to vector<8x16x16xf32>
    %25 = vector.shape_cast %24 : vector<8x16x16xf32> to vector<8x256xf32>
    %c0_35 = arith.constant 0 : index
    %c0_36 = arith.constant 0 : index
    %26 = vector.load %arg14[%c0_35, %c0_36] : memref<24x256xf32, #tpu.memory_space<vmem>>, vector<8x256xf32>
    tpu.vector_store %arg14[%c0_35, %c0_36], %25 {strides = array<i32>} : memref<24x256xf32, #tpu.memory_space<vmem>>, vector<8x256xf32>,
    %27 = vector.extract_strided_slice %23 {offsets = [0, 0, 1], sizes = [8, 16, 16], strides = [1, 1, 1]} : vector<8x16x18xf32> to vector<8x16x16xf32>
    %28 = vector.shape_cast %27 : vector<8x16x16xf32> to vector<8x256xf32>
    %c8 = arith.constant 8 : index
    %c0_37 = arith.constant 0 : index
    %29 = vector.load %arg14[%c8, %c0_37] : memref<24x256xf32, #tpu.memory_space<vmem>>, vector<8x256xf32>
    tpu.vector_store %arg14[%c8, %c0_37], %28 {strides = array<i32>} : memref<24x256xf32, #tpu.memory_space<vmem>>, vector<8x256xf32>,
    %30 = vector.extract_strided_slice %23 {offsets = [0, 0, 2], sizes = [8, 16, 16], strides = [1, 1, 1]} : vector<8x16x18xf32> to vector<8x16x16xf32>
    %31 = vector.shape_cast %30 : vector<8x16x16xf32> to vector<8x256xf32>
    %c16 = arith.constant 16 : index
    %c0_38 = arith.constant 0 : index
    %32 = vector.load %arg14[%c16, %c0_38] : memref<24x256xf32, #tpu.memory_space<vmem>>, vector<8x256xf32>
    tpu.vector_store %arg14[%c16, %c0_38], %31 {strides = array<i32>} : memref<24x256xf32, #tpu.memory_space<vmem>>, vector<8x256xf32>,
    %c0_39 = arith.constant 0 : index
    %c0_40 = arith.constant 0 : index
    %c0_41 = arith.constant 0 : index
    %33 = vector.load %arg5[%c0_39, %c0_40, %c0_41] : memref<3x4x24xf32, #tpu.memory_space<vmem>>, vector<1x4x24xf32>
    %34 = vector.shape_cast %33 : vector<1x4x24xf32> to vector<4x24xf32>
    %c0_42 = arith.constant 0 : index
    %c0_43 = arith.constant 0 : index
    %35 = vector.load %arg14[%c0_42, %c0_43] : memref<24x256xf32, #tpu.memory_space<vmem>>, vector<24x256xf32>
    %cst_44 = arith.constant dense<0.000000e+00> : vector<4x256xf32>
    %36 = tpu.matmul %34, %35, %cst_44 {dimension_numbers = #tpu.dot_dimension_numbers<[1], [0], [0], [1], [0, 0, 1, 1], [], []>} : vector<4x24xf32>, vector<24x256xf32>, vector<4x256xf32> -> vector<4x256xf32>
    %37 = arith.addf %22, %36 : vector<4x256xf32>
    %c0_45 = arith.constant 0 : index
    %c1_46 = arith.constant 1 : index
    %c0_47 = arith.constant 0 : index
    %38 = vector.load %arg12[%c0_45, %c1_46, %c0_47] : memref<8x18x18xf32, #tpu.memory_space<vmem>>, vector<8x16x18xf32>
    %39 = vector.extract_strided_slice %38 {offsets = [0, 0, 0], sizes = [8, 16, 16], strides = [1, 1, 1]} : vector<8x16x18xf32> to vector<8x16x16xf32>
    %40 = vector.shape_cast %39 : vector<8x16x16xf32> to vector<8x256xf32>
    %c0_48 = arith.constant 0 : index
    %c0_49 = arith.constant 0 : index
    %41 = vector.load %arg14[%c0_48, %c0_49] : memref<24x256xf32, #tpu.memory_space<vmem>>, vector<8x256xf32>
    tpu.vector_store %arg14[%c0_48, %c0_49], %40 {strides = array<i32>} : memref<24x256xf32, #tpu.memory_space<vmem>>, vector<8x256xf32>,
    %42 = vector.extract_strided_slice %38 {offsets = [0, 0, 1], sizes = [8, 16, 16], strides = [1, 1, 1]} : vector<8x16x18xf32> to vector<8x16x16xf32>
    %43 = vector.shape_cast %42 : vector<8x16x16xf32> to vector<8x256xf32>
    %c8_50 = arith.constant 8 : index
    %c0_51 = arith.constant 0 : index
    %44 = vector.load %arg14[%c8_50, %c0_51] : memref<24x256xf32, #tpu.memory_space<vmem>>, vector<8x256xf32>
    tpu.vector_store %arg14[%c8_50, %c0_51], %43 {strides = array<i32>} : memref<24x256xf32, #tpu.memory_space<vmem>>, vector<8x256xf32>,
    %45 = vector.extract_strided_slice %38 {offsets = [0, 0, 2], sizes = [8, 16, 16], strides = [1, 1, 1]} : vector<8x16x18xf32> to vector<8x16x16xf32>
    %46 = vector.shape_cast %45 : vector<8x16x16xf32> to vector<8x256xf32>
    %c16_52 = arith.constant 16 : index
    %c0_53 = arith.constant 0 : index
    %47 = vector.load %arg14[%c16_52, %c0_53] : memref<24x256xf32, #tpu.memory_space<vmem>>, vector<8x256xf32>
    tpu.vector_store %arg14[%c16_52, %c0_53], %46 {strides = array<i32>} : memref<24x256xf32, #tpu.memory_space<vmem>>, vector<8x256xf32>,
    %c1_54 = arith.constant 1 : index
    %c0_55 = arith.constant 0 : index
    %c0_56 = arith.constant 0 : index
    %48 = vector.load %arg5[%c1_54, %c0_55, %c0_56] : memref<3x4x24xf32, #tpu.memory_space<vmem>>, vector<1x4x24xf32>
    %49 = vector.shape_cast %48 : vector<1x4x24xf32> to vector<4x24xf32>
    %c0_57 = arith.constant 0 : index
    %c0_58 = arith.constant 0 : index
    %50 = vector.load %arg14[%c0_57, %c0_58] : memref<24x256xf32, #tpu.memory_space<vmem>>, vector<24x256xf32>
    %cst_59 = arith.constant dense<0.000000e+00> : vector<4x256xf32>
    %51 = tpu.matmul %49, %50, %cst_59 {dimension_numbers = #tpu.dot_dimension_numbers<[1], [0], [0], [1], [0, 0, 1, 1], [], []>} : vector<4x24xf32>, vector<24x256xf32>, vector<4x256xf32> -> vector<4x256xf32>
    %52 = arith.addf %37, %51 : vector<4x256xf32>
    %c0_60 = arith.constant 0 : index
    %c2 = arith.constant 2 : index
    %c0_61 = arith.constant 0 : index
    %53 = vector.load %arg12[%c0_60, %c2, %c0_61] : memref<8x18x18xf32, #tpu.memory_space<vmem>>, vector<8x16x18xf32>
    %54 = vector.extract_strided_slice %53 {offsets = [0, 0, 0], sizes = [8, 16, 16], strides = [1, 1, 1]} : vector<8x16x18xf32> to vector<8x16x16xf32>
    %55 = vector.shape_cast %54 : vector<8x16x16xf32> to vector<8x256xf32>
    %c0_62 = arith.constant 0 : index
    %c0_63 = arith.constant 0 : index
    %56 = vector.load %arg14[%c0_62, %c0_63] : memref<24x256xf32, #tpu.memory_space<vmem>>, vector<8x256xf32>
    tpu.vector_store %arg14[%c0_62, %c0_63], %55 {strides = array<i32>} : memref<24x256xf32, #tpu.memory_space<vmem>>, vector<8x256xf32>,
    %57 = vector.extract_strided_slice %53 {offsets = [0, 0, 1], sizes = [8, 16, 16], strides = [1, 1, 1]} : vector<8x16x18xf32> to vector<8x16x16xf32>
    %58 = vector.shape_cast %57 : vector<8x16x16xf32> to vector<8x256xf32>
    %c8_64 = arith.constant 8 : index
    %c0_65 = arith.constant 0 : index
    %59 = vector.load %arg14[%c8_64, %c0_65] : memref<24x256xf32, #tpu.memory_space<vmem>>, vector<8x256xf32>
    tpu.vector_store %arg14[%c8_64, %c0_65], %58 {strides = array<i32>} : memref<24x256xf32, #tpu.memory_space<vmem>>, vector<8x256xf32>,
    %60 = vector.extract_strided_slice %53 {offsets = [0, 0, 2], sizes = [8, 16, 16], strides = [1, 1, 1]} : vector<8x16x18xf32> to vector<8x16x16xf32>
    %61 = vector.shape_cast %60 : vector<8x16x16xf32> to vector<8x256xf32>
    %c16_66 = arith.constant 16 : index
    %c0_67 = arith.constant 0 : index
    %62 = vector.load %arg14[%c16_66, %c0_67] : memref<24x256xf32, #tpu.memory_space<vmem>>, vector<8x256xf32>
    tpu.vector_store %arg14[%c16_66, %c0_67], %61 {strides = array<i32>} : memref<24x256xf32, #tpu.memory_space<vmem>>, vector<8x256xf32>,
    %c2_68 = arith.constant 2 : index
    %c0_69 = arith.constant 0 : index
    %c0_70 = arith.constant 0 : index
    %63 = vector.load %arg5[%c2_68, %c0_69, %c0_70] : memref<3x4x24xf32, #tpu.memory_space<vmem>>, vector<1x4x24xf32>
    %64 = vector.shape_cast %63 : vector<1x4x24xf32> to vector<4x24xf32>
    %c0_71 = arith.constant 0 : index
    %c0_72 = arith.constant 0 : index
    %65 = vector.load %arg14[%c0_71, %c0_72] : memref<24x256xf32, #tpu.memory_space<vmem>>, vector<24x256xf32>
    %cst_73 = arith.constant dense<0.000000e+00> : vector<4x256xf32>
    %66 = tpu.matmul %64, %65, %cst_73 {dimension_numbers = #tpu.dot_dimension_numbers<[1], [0], [0], [1], [0, 0, 1, 1], [], []>} : vector<4x24xf32>, vector<24x256xf32>, vector<4x256xf32> -> vector<4x256xf32>
    %67 = arith.addf %52, %66 : vector<4x256xf32>
    %c0_74 = arith.constant 0 : index
    %c0_75 = arith.constant 0 : index
    %68 = vector.load %arg6[%c0_74, %c0_75] : memref<4x1xf32, #tpu.memory_space<vmem>>, vector<4x1xf32>
    %69 = vector.broadcast %68 : vector<4x1xf32> to vector<4x256xf32>
    %70 = arith.mulf %67, %69 : vector<4x256xf32>
    %c0_76 = arith.constant 0 : index
    %c0_77 = arith.constant 0 : index
    %71 = vector.load %arg7[%c0_76, %c0_77] : memref<4x1xf32, #tpu.memory_space<vmem>>, vector<4x1xf32>
    %72 = vector.broadcast %71 : vector<4x1xf32> to vector<4x256xf32>
    %73 = arith.addf %70, %72 : vector<4x256xf32>
    %cst_78 = arith.constant 0.000000e+00 : f32
    %74 = vector.broadcast %cst_78 : f32 to vector<4x256xf32>
    %75 = arith.maximumf %73, %74 : vector<4x256xf32>
    %cst_79 = arith.constant 0.000000e+00 : f32
    %76 = vector.broadcast %cst_79 : f32 to vector<4x1x18xf32>
    %c0_80 = arith.constant 0 : index
    %c0_81 = arith.constant 0 : index
    %c0_82 = arith.constant 0 : index
    %77 = vector.load %arg13[%c0_80, %c0_81, %c0_82] : memref<4x18x18xf32, #tpu.memory_space<vmem>>, vector<4x1x18xf32>
    tpu.vector_store %arg13[%c0_80, %c0_81, %c0_82], %76 {strides = array<i32>} : memref<4x18x18xf32, #tpu.memory_space<vmem>>, vector<4x1x18xf32>,
    %cst_83 = arith.constant 0.000000e+00 : f32
    %78 = vector.broadcast %cst_83 : f32 to vector<4x1x18xf32>
    %c0_84 = arith.constant 0 : index
    %c17_85 = arith.constant 17 : index
    %c0_86 = arith.constant 0 : index
    %79 = vector.load %arg13[%c0_84, %c17_85, %c0_86] : memref<4x18x18xf32, #tpu.memory_space<vmem>>, vector<4x1x18xf32>
    tpu.vector_store %arg13[%c0_84, %c17_85, %c0_86], %78 {strides = array<i32>} : memref<4x18x18xf32, #tpu.memory_space<vmem>>, vector<4x1x18xf32>,
    %cst_87 = arith.constant 0.000000e+00 : f32
    %80 = vector.broadcast %cst_87 : f32 to vector<4x18x1xf32>
    %c0_88 = arith.constant 0 : index
    %c0_89 = arith.constant 0 : index
    %c0_90 = arith.constant 0 : index
    %81 = vector.load %arg13[%c0_88, %c0_89, %c0_90] : memref<4x18x18xf32, #tpu.memory_space<vmem>>, vector<4x18x1xf32>
    tpu.vector_store %arg13[%c0_88, %c0_89, %c0_90], %80 {strides = array<i32>} : memref<4x18x18xf32, #tpu.memory_space<vmem>>, vector<4x18x1xf32>,
    %cst_91 = arith.constant 0.000000e+00 : f32
    %82 = vector.broadcast %cst_91 : f32 to vector<4x18x1xf32>
    %c0_92 = arith.constant 0 : index
    %c0_93 = arith.constant 0 : index
    %c17_94 = arith.constant 17 : index
    %83 = vector.load %arg13[%c0_92, %c0_93, %c17_94] : memref<4x18x18xf32, #tpu.memory_space<vmem>>, vector<4x18x1xf32>
    tpu.vector_store %arg13[%c0_92, %c0_93, %c17_94], %82 {strides = array<i32>} : memref<4x18x18xf32, #tpu.memory_space<vmem>>, vector<4x18x1xf32>,
    %84 = vector.shape_cast %75 : vector<4x256xf32> to vector<4x16x16xf32>
    %c0_95 = arith.constant 0 : index
    %c1_96 = arith.constant 1 : index
    %c1_97 = arith.constant 1 : index
    %85 = vector.load %arg13[%c0_95, %c1_96, %c1_97] : memref<4x18x18xf32, #tpu.memory_space<vmem>>, vector<4x16x16xf32>
    tpu.vector_store %arg13[%c0_95, %c1_96, %c1_97], %84 {strides = array<i32>} : memref<4x18x18xf32, #tpu.memory_space<vmem>>, vector<4x16x16xf32>,
    %cst_98 = arith.constant 0.000000e+00 : f32
    %86 = vector.broadcast %cst_98 : f32 to vector<8x256xf32>
    %c0_99 = arith.constant 0 : index
    %c0_100 = arith.constant 0 : index
    %c0_101 = arith.constant 0 : index
    %87 = vector.load %arg13[%c0_99, %c0_100, %c0_101] : memref<4x18x18xf32, #tpu.memory_space<vmem>>, vector<4x16x18xf32>
    %88 = vector.extract_strided_slice %87 {offsets = [0, 0, 0], sizes = [4, 16, 16], strides = [1, 1, 1]} : vector<4x16x18xf32> to vector<4x16x16xf32>
    %89 = vector.shape_cast %88 : vector<4x16x16xf32> to vector<4x256xf32>
    %c0_102 = arith.constant 0 : index
    %c0_103 = arith.constant 0 : index
    %90 = vector.load %arg14[%c0_102, %c0_103] : memref<24x256xf32, #tpu.memory_space<vmem>>, vector<4x256xf32>
    tpu.vector_store %arg14[%c0_102, %c0_103], %89 {strides = array<i32>} : memref<24x256xf32, #tpu.memory_space<vmem>>, vector<4x256xf32>,
    %91 = vector.extract_strided_slice %87 {offsets = [0, 0, 1], sizes = [4, 16, 16], strides = [1, 1, 1]} : vector<4x16x18xf32> to vector<4x16x16xf32>
    %92 = vector.shape_cast %91 : vector<4x16x16xf32> to vector<4x256xf32>
    %c4_104 = arith.constant 4 : index
    %c0_105 = arith.constant 0 : index
    %93 = vector.load %arg14[%c4_104, %c0_105] : memref<24x256xf32, #tpu.memory_space<vmem>>, vector<4x256xf32>
    tpu.vector_store %arg14[%c4_104, %c0_105], %92 {strides = array<i32>} : memref<24x256xf32, #tpu.memory_space<vmem>>, vector<4x256xf32>,
    %94 = vector.extract_strided_slice %87 {offsets = [0, 0, 2], sizes = [4, 16, 16], strides = [1, 1, 1]} : vector<4x16x18xf32> to vector<4x16x16xf32>
    %95 = vector.shape_cast %94 : vector<4x16x16xf32> to vector<4x256xf32>
    %c8_106 = arith.constant 8 : index
    %c0_107 = arith.constant 0 : index
    %96 = vector.load %arg14[%c8_106, %c0_107] : memref<24x256xf32, #tpu.memory_space<vmem>>, vector<4x256xf32>
    tpu.vector_store %arg14[%c8_106, %c0_107], %95 {strides = array<i32>} : memref<24x256xf32, #tpu.memory_space<vmem>>, vector<4x256xf32>,
    %c0_108 = arith.constant 0 : index
    %c0_109 = arith.constant 0 : index
    %c0_110 = arith.constant 0 : index
    %97 = vector.load %arg8[%c0_108, %c0_109, %c0_110] : memref<3x8x12xf32, #tpu.memory_space<vmem>>, vector<1x8x12xf32>
    %98 = vector.shape_cast %97 : vector<1x8x12xf32> to vector<8x12xf32>
    %c0_111 = arith.constant 0 : index
    %c0_112 = arith.constant 0 : index
    %99 = vector.load %arg14[%c0_111, %c0_112] : memref<24x256xf32, #tpu.memory_space<vmem>>, vector<12x256xf32>
    %cst_113 = arith.constant dense<0.000000e+00> : vector<8x256xf32>
    %100 = tpu.matmul %98, %99, %cst_113 {dimension_numbers = #tpu.dot_dimension_numbers<[1], [0], [0], [1], [0, 0, 1, 1], [], []>} : vector<8x12xf32>, vector<12x256xf32>, vector<8x256xf32> -> vector<8x256xf32>
    %101 = arith.addf %86, %100 : vector<8x256xf32>
    %c0_114 = arith.constant 0 : index
    %c1_115 = arith.constant 1 : index
    %c0_116 = arith.constant 0 : index
    %102 = vector.load %arg13[%c0_114, %c1_115, %c0_116] : memref<4x18x18xf32, #tpu.memory_space<vmem>>, vector<4x16x18xf32>
    %103 = vector.extract_strided_slice %102 {offsets = [0, 0, 0], sizes = [4, 16, 16], strides = [1, 1, 1]} : vector<4x16x18xf32> to vector<4x16x16xf32>
    %104 = vector.shape_cast %103 : vector<4x16x16xf32> to vector<4x256xf32>
    %c0_117 = arith.constant 0 : index
    %c0_118 = arith.constant 0 : index
    %105 = vector.load %arg14[%c0_117, %c0_118] : memref<24x256xf32, #tpu.memory_space<vmem>>, vector<4x256xf32>
    tpu.vector_store %arg14[%c0_117, %c0_118], %104 {strides = array<i32>} : memref<24x256xf32, #tpu.memory_space<vmem>>, vector<4x256xf32>,
    %106 = vector.extract_strided_slice %102 {offsets = [0, 0, 1], sizes = [4, 16, 16], strides = [1, 1, 1]} : vector<4x16x18xf32> to vector<4x16x16xf32>
    %107 = vector.shape_cast %106 : vector<4x16x16xf32> to vector<4x256xf32>
    %c4_119 = arith.constant 4 : index
    %c0_120 = arith.constant 0 : index
    %108 = vector.load %arg14[%c4_119, %c0_120] : memref<24x256xf32, #tpu.memory_space<vmem>>, vector<4x256xf32>
    tpu.vector_store %arg14[%c4_119, %c0_120], %107 {strides = array<i32>} : memref<24x256xf32, #tpu.memory_space<vmem>>, vector<4x256xf32>,
    %109 = vector.extract_strided_slice %102 {offsets = [0, 0, 2], sizes = [4, 16, 16], strides = [1, 1, 1]} : vector<4x16x18xf32> to vector<4x16x16xf32>
    %110 = vector.shape_cast %109 : vector<4x16x16xf32> to vector<4x256xf32>
    %c8_121 = arith.constant 8 : index
    %c0_122 = arith.constant 0 : index
    %111 = vector.load %arg14[%c8_121, %c0_122] : memref<24x256xf32, #tpu.memory_space<vmem>>, vector<4x256xf32>
    tpu.vector_store %arg14[%c8_121, %c0_122], %110 {strides = array<i32>} : memref<24x256xf32, #tpu.memory_space<vmem>>, vector<4x256xf32>,
    %c1_123 = arith.constant 1 : index
    %c0_124 = arith.constant 0 : index
    %c0_125 = arith.constant 0 : index
    %112 = vector.load %arg8[%c1_123, %c0_124, %c0_125] : memref<3x8x12xf32, #tpu.memory_space<vmem>>, vector<1x8x12xf32>
    %113 = vector.shape_cast %112 : vector<1x8x12xf32> to vector<8x12xf32>
    %c0_126 = arith.constant 0 : index
    %c0_127 = arith.constant 0 : index
    %114 = vector.load %arg14[%c0_126, %c0_127] : memref<24x256xf32, #tpu.memory_space<vmem>>, vector<12x256xf32>
    %cst_128 = arith.constant dense<0.000000e+00> : vector<8x256xf32>
    %115 = tpu.matmul %113, %114, %cst_128 {dimension_numbers = #tpu.dot_dimension_numbers<[1], [0], [0], [1], [0, 0, 1, 1], [], []>} : vector<8x12xf32>, vector<12x256xf32>, vector<8x256xf32> -> vector<8x256xf32>
    %116 = arith.addf %101, %115 : vector<8x256xf32>
    %c0_129 = arith.constant 0 : index
    %c2_130 = arith.constant 2 : index
    %c0_131 = arith.constant 0 : index
    %117 = vector.load %arg13[%c0_129, %c2_130, %c0_131] : memref<4x18x18xf32, #tpu.memory_space<vmem>>, vector<4x16x18xf32>
    %118 = vector.extract_strided_slice %117 {offsets = [0, 0, 0], sizes = [4, 16, 16], strides = [1, 1, 1]} : vector<4x16x18xf32> to vector<4x16x16xf32>
    %119 = vector.shape_cast %118 : vector<4x16x16xf32> to vector<4x256xf32>
    %c0_132 = arith.constant 0 : index
    %c0_133 = arith.constant 0 : index
    %120 = vector.load %arg14[%c0_132, %c0_133] : memref<24x256xf32, #tpu.memory_space<vmem>>, vector<4x256xf32>
    tpu.vector_store %arg14[%c0_132, %c0_133], %119 {strides = array<i32>} : memref<24x256xf32, #tpu.memory_space<vmem>>, vector<4x256xf32>,
    %121 = vector.extract_strided_slice %117 {offsets = [0, 0, 1], sizes = [4, 16, 16], strides = [1, 1, 1]} : vector<4x16x18xf32> to vector<4x16x16xf32>
    %122 = vector.shape_cast %121 : vector<4x16x16xf32> to vector<4x256xf32>
    %c4_134 = arith.constant 4 : index
    %c0_135 = arith.constant 0 : index
    %123 = vector.load %arg14[%c4_134, %c0_135] : memref<24x256xf32, #tpu.memory_space<vmem>>, vector<4x256xf32>
    tpu.vector_store %arg14[%c4_134, %c0_135], %122 {strides = array<i32>} : memref<24x256xf32, #tpu.memory_space<vmem>>, vector<4x256xf32>,
    %124 = vector.extract_strided_slice %117 {offsets = [0, 0, 2], sizes = [4, 16, 16], strides = [1, 1, 1]} : vector<4x16x18xf32> to vector<4x16x16xf32>
    %125 = vector.shape_cast %124 : vector<4x16x16xf32> to vector<4x256xf32>
    %c8_136 = arith.constant 8 : index
    %c0_137 = arith.constant 0 : index
    %126 = vector.load %arg14[%c8_136, %c0_137] : memref<24x256xf32, #tpu.memory_space<vmem>>, vector<4x256xf32>
    tpu.vector_store %arg14[%c8_136, %c0_137], %125 {strides = array<i32>} : memref<24x256xf32, #tpu.memory_space<vmem>>, vector<4x256xf32>,
    %c2_138 = arith.constant 2 : index
    %c0_139 = arith.constant 0 : index
    %c0_140 = arith.constant 0 : index
    %127 = vector.load %arg8[%c2_138, %c0_139, %c0_140] : memref<3x8x12xf32, #tpu.memory_space<vmem>>, vector<1x8x12xf32>
    %128 = vector.shape_cast %127 : vector<1x8x12xf32> to vector<8x12xf32>
    %c0_141 = arith.constant 0 : index
    %c0_142 = arith.constant 0 : index
    %129 = vector.load %arg14[%c0_141, %c0_142] : memref<24x256xf32, #tpu.memory_space<vmem>>, vector<12x256xf32>
    %cst_143 = arith.constant dense<0.000000e+00> : vector<8x256xf32>
    %130 = tpu.matmul %128, %129, %cst_143 {dimension_numbers = #tpu.dot_dimension_numbers<[1], [0], [0], [1], [0, 0, 1, 1], [], []>} : vector<8x12xf32>, vector<12x256xf32>, vector<8x256xf32> -> vector<8x256xf32>
    %131 = arith.addf %116, %130 : vector<8x256xf32>
    %c0_144 = arith.constant 0 : index
    %c0_145 = arith.constant 0 : index
    %132 = vector.load %arg9[%c0_144, %c0_145] : memref<8x1xf32, #tpu.memory_space<vmem>>, vector<8x1xf32>
    %133 = vector.broadcast %132 : vector<8x1xf32> to vector<8x256xf32>
    %134 = arith.mulf %131, %133 : vector<8x256xf32>
    %c0_146 = arith.constant 0 : index
    %c0_147 = arith.constant 0 : index
    %135 = vector.load %arg10[%c0_146, %c0_147] : memref<8x1xf32, #tpu.memory_space<vmem>>, vector<8x1xf32>
    %136 = vector.broadcast %135 : vector<8x1xf32> to vector<8x256xf32>
    %137 = arith.addf %134, %136 : vector<8x256xf32>
    %cst_148 = arith.constant 0.000000e+00 : f32
    %138 = vector.broadcast %cst_148 : f32 to vector<8x256xf32>
    %139 = arith.maximumf %137, %138 : vector<8x256xf32>
    %c0_149 = arith.constant 0 : index
    %c0_150 = arith.constant 0 : index
    %c0_151 = arith.constant 0 : index
    %140 = vector.load %arg11[%c0_149, %c0_150, %c0_151] : memref<1x8x256xf32, #tpu.memory_space<vmem>>, vector<1x8x256xf32>
    %141 = vector.shape_cast %140 : vector<1x8x256xf32> to vector<8x256xf32>
    %142 = vector.shape_cast %139 : vector<8x256xf32> to vector<1x8x256xf32>
    tpu.vector_store %arg11[%c0_149, %c0_150, %c0_151], %142 {strides = array<i32>} : memref<1x8x256xf32, #tpu.memory_space<vmem>>, vector<1x8x256xf32>,
    return
  }
  func.func @transform_0(%arg0: i32) -> (i32, i32, i32, i32) {
    %c0_i32 = arith.constant 0 : i32
    %c0_i32_0 = arith.constant 0 : i32
    %c0_i32_1 = arith.constant 0 : i32
    %c0_i32_2 = arith.constant 0 : i32
    return %arg0, %c0_i32, %c0_i32_0, %c0_i32_1 : i32, i32, i32, i32
  }
  func.func @transform_1(%arg0: i32) -> (i32, i32, i32, i32) {
    %c0_i32 = arith.constant 0 : i32
    %c0_i32_0 = arith.constant 0 : i32
    %c0_i32_1 = arith.constant 0 : i32
    %c0_i32_2 = arith.constant 0 : i32
    return %arg0, %c0_i32, %c0_i32_0, %c0_i32_1 : i32, i32, i32, i32
  }
  func.func @transform_2(%arg0: i32) -> (i32, i32) {
    %c0_i32 = arith.constant 0 : i32
    %c0_i32_0 = arith.constant 0 : i32
    %c0_i32_1 = arith.constant 0 : i32
    return %c0_i32, %c0_i32_0 : i32, i32
  }
  func.func @transform_3(%arg0: i32) -> (i32, i32) {
    %c0_i32 = arith.constant 0 : i32
    %c0_i32_0 = arith.constant 0 : i32
    %c0_i32_1 = arith.constant 0 : i32
    return %c0_i32, %c0_i32_0 : i32, i32
  }
  func.func @transform_4(%arg0: i32) -> (i32, i32, i32) {
    %c0_i32 = arith.constant 0 : i32
    %c0_i32_0 = arith.constant 0 : i32
    %c0_i32_1 = arith.constant 0 : i32
    %c0_i32_2 = arith.constant 0 : i32
    return %c0_i32, %c0_i32_0, %c0_i32_1 : i32, i32, i32
  }
  func.func @transform_5(%arg0: i32) -> (i32, i32) {
    %c0_i32 = arith.constant 0 : i32
    %c0_i32_0 = arith.constant 0 : i32
    %c0_i32_1 = arith.constant 0 : i32
    return %c0_i32, %c0_i32_0 : i32, i32
  }
  func.func @transform_6(%arg0: i32) -> (i32, i32) {
    %c0_i32 = arith.constant 0 : i32
    %c0_i32_0 = arith.constant 0 : i32
    %c0_i32_1 = arith.constant 0 : i32
    return %c0_i32, %c0_i32_0 : i32, i32
  }
  func.func @transform_7(%arg0: i32) -> (i32, i32, i32) {
    %c0_i32 = arith.constant 0 : i32
    %c0_i32_0 = arith.constant 0 : i32
    %c0_i32_1 = arith.constant 0 : i32
    %c0_i32_2 = arith.constant 0 : i32
    return %c0_i32, %c0_i32_0, %c0_i32_1 : i32, i32, i32
  }
  func.func @transform_8(%arg0: i32) -> (i32, i32) {
    %c0_i32 = arith.constant 0 : i32
    %c0_i32_0 = arith.constant 0 : i32
    %c0_i32_1 = arith.constant 0 : i32
    return %c0_i32, %c0_i32_0 : i32, i32
  }
  func.func @transform_9(%arg0: i32) -> (i32, i32) {
    %c0_i32 = arith.constant 0 : i32
    %c0_i32_0 = arith.constant 0 : i32
    %c0_i32_1 = arith.constant 0 : i32
    return %c0_i32, %c0_i32_0 : i32, i32
  }
  func.func @transform_10(%arg0: i32) -> (i32, i32, i32) {
    %c0_i32 = arith.constant 0 : i32
    %c0_i32_0 = arith.constant 0 : i32
    %c0_i32_1 = arith.constant 0 : i32
    return %arg0, %c0_i32, %c0_i32_0 : i32, i32, i32
  }
}

</mosaic_0001>

<llo_original>
// kernel: up_forward.1
$region0: #{up_forward.1}
  #allocation0 [shape = 'u32[]', space=smem, size = 0x4, offset = 0x4, fixed_abs, tag = 'smem constant byte address 0x4 - core index']
  #allocation1 [shape = 'u32[72,128]{1,0:T(1,128)}', space=vmem, size = 0x9000, scoped, tag = 'internal scratch']
  #allocation2 [shape = 'f32[8,18,18]{2,1,0:T(8,128)}', space=vmem, size = 0x18000, scoped, tag = 'scratch operand']
  #allocation3 [shape = 'f32[4,18,18]{2,1,0:T(8,128)}', space=vmem, size = 0xc000, scoped, tag = 'scratch operand']
  #allocation4 [shape = 'f32[24,256]{1,0:T(8,128)}', space=vmem, size = 0x6000, scoped, tag = 'scratch operand']
  %s0 = inlined_call_operand.hbm [shape: f32[2,4,16,16], index: 0, kind: input, shape index: {}]
  %s1 = inlined_call_operand.hbm [shape: f32[2,4,8,8], index: 1, kind: input, shape index: {}]
  %s2 = inlined_call_operand.hbm [shape: f32[18,8], index: 2, kind: input, shape index: {}]
  %s3 = inlined_call_operand.vmem [shape: f32[8,18], index: 3, kind: input, shape index: {}]
  %s4 = inlined_call_operand.vmem [shape: f32[3,4,24], index: 4, kind: input, shape index: {}]
  %s5 = inlined_call_operand.vmem [shape: f32[4,1], index: 5, kind: input, shape index: {}]
  %s6 = inlined_call_operand.vmem [shape: f32[4,1], index: 6, kind: input, shape index: {}]
  %s7 = inlined_call_operand.hbm [shape: f32[3,8,12], index: 7, kind: input, shape index: {}]
  %s8 = inlined_call_operand.vmem [shape: f32[8,1], index: 8, kind: input, shape index: {}]
  %s9 = inlined_call_operand.vmem [shape: f32[8,1], index: 9, kind: input, shape index: {}]
  %s10 = inlined_call_operand.vmem [shape: f32[2,8,256], index: 10, kind: output, shape index: {}]
  %s11 = sld [smem:[#allocation0]]
  $region89: #{up_forward.1} parent=0
    _
  %s13 = ssub.s32 1, %s11
  %s14 = scalar_select 0, %s13, %s11
  $region1: #{up_forward.1} parent=0
    #allocation5 [shape = 'u8[65536]{0}', space=vmem, size = 0x10000, scoped, tag = 'input window, operand 0']
    #allocation6 [shape = 's32[2]{0}', space=sflag, size = 0x8, scoped, tag = 'scoped memory for up_forward.1']
    #allocation7 [shape = 'u8[32768]{0}', space=vmem, size = 0x8000, scoped, tag = 'input window, operand 1']
    #allocation8 [shape = 's32[2]{0}', space=sflag, size = 0x8, scoped, tag = 'scoped memory for up_forward.1']
    #allocation9 [shape = 'u8[12288]{0}', space=vmem, size = 0x3000, scoped, tag = 'input window, operand 2, single buffered']
    #allocation10 [shape = 'u8[12288]{0}', space=vmem, size = 0x3000, scoped, tag = 'input window, operand 7, single buffered']
    #allocation11 [shape = 's32[1]{0}', space=sflag, size = 0x4, scoped, tag = 'scoped memory for up_forward.1']
    %15 = vsyncpa [#allocation6], 0
    %s16 = scalar_lea.sflag [#allocation6], 1
    %17 = vsyncpa %s16, 0
    %18 = vsyncpa [#allocation8], 0
    %s19 = scalar_lea.sflag [#allocation8], 1
    %20 = vsyncpa %s19, 0
    %21 = vsyncpa [#allocation11], 0
    loop: start=0, step=1, limit=4
    $region2: #{up_forward.1} parent=1 // loop_pre_header
      _
    $region3: #{up_forward.1} parent=1 // loop_header
      %s23 = sphi 0, %s27
      %p24 = scmp.ge.s32.totalorder %s23, 4
      %s33 = sphi 0, %s35
      %s36 = sphi 0, %s33
      %s37 = sphi 0, %s36
      %s53 = sphi 0, %s37
      %s59 = sphi 0, %s61
      %s62 = sphi 0, %s59
      %s63 = sphi 0, %s62
      %s79 = sphi 0, %s63
      %s83 = sphi 0, %s83
      %s85 = sphi 0, %s83
      %s86 = sphi 0, %s85
      %s100 = sphi 0, %s86
      %s104 = sphi 0, %s104
      %s106 = sphi 0, %s104
      %s107 = sphi 0, %s106
      %s121 = sphi 0, %s107
      %s125 = sphi 0, %s125
      %s127 = sphi 0, %s125
      %s128 = sphi 0, %s127
      %s142 = sphi 0, %s128
      %s146 = sphi 0, %s146
      %s148 = sphi 0, %s146
      %s149 = sphi 0, %s148
      %s163 = sphi 0, %s149
      %s167 = sphi 0, %s167
      %s169 = sphi 0, %s167
      %s170 = sphi 0, %s169
      %s184 = sphi 0, %s170
      %s188 = sphi 0, %s188
      %s190 = sphi 0, %s188
      %s191 = sphi 0, %s190
      %s205 = sphi 0, %s191
      %s209 = sphi 0, %s209
      %s211 = sphi 0, %s209
      %s212 = sphi 0, %s211
      %s226 = sphi 0, %s212
      %s230 = sphi 0, %s230
      %s232 = sphi 0, %s230
      %s233 = sphi 0, %s232
      %s247 = sphi 0, %s233
      %s253 = sphi 0, %s255
      %s256 = sphi 0, %s253
      %s257 = sphi 0, %s256
      %s273 = sphi 0, %s257
    $region4: #{up_forward.1} parent=1 // loop_header_branch
      %26 = sbr.rel (%p24) target = $region8
    $region5: #{up_forward.1} parent=1 // loop_body
      %s28 = ssub.s32 %s23, 1
      %s29 = ssub.s32 %s23, 2
      %s30 = sadd.s32 %s23, 1
      %s31 = ssub.s32 %s23, %s30
      %p32 = scmp.eq.s32.totalorder %s31, 0
      %s34 = sadd.s32 %s33, 1
      %s35 = scalar_select %p32, %s33, %s34
      %p38 = pneg %p32
      %p39 = scmp.eq.s32.totalorder %s23, 1
      %p40 = por %p38, %p39
      %p41 = scmp.ne.s32.totalorder %s33, %s36
      %p42 = scmp.eq.s32.totalorder %s23, 0
      %p43 = por %p41, %p42
      %p44 = scmp.ne.s32.totalorder %s33, %s36
      %p45 = scmp.eq.s32.totalorder %s28, 1
      %p46 = por %p44, %p45
      %p47 = scmp.ne.s32.totalorder %s36, %s37
      %p48 = scmp.eq.s32.totalorder %s28, 0
      %p49 = por %p47, %p48
      %p50 = scmp.ne.s32.totalorder %s36, %s37
      %p51 = scmp.eq.s32.totalorder %s29, 1
      %p52 = por %p50, %p51
      %p54 = scmp.ne.s32.totalorder %s37, %s53
      %p55 = scmp.eq.s32.totalorder %s29, 0
      %p56 = por %p54, %p55
      %s57 = ssub.s32 %s23, %s30
      %p58 = scmp.eq.s32.totalorder %s57, 0
      %s60 = sadd.s32 %s59, 1
      %s61 = scalar_select %p58, %s59, %s60
      %p64 = pneg %p58
      %p65 = scmp.eq.s32.totalorder %s23, 1
      %p66 = por %p64, %p65
      %p67 = scmp.ne.s32.totalorder %s59, %s62
      %p68 = scmp.eq.s32.totalorder %s23, 0
      %p69 = por %p67, %p68
      %p70 = scmp.ne.s32.totalorder %s59, %s62
      %p71 = scmp.eq.s32.totalorder %s28, 1
      %p72 = por %p70, %p71
      %p73 = scmp.ne.s32.totalorder %s62, %s63
      %p74 = scmp.eq.s32.totalorder %s28, 0
      %p75 = por %p73, %p74
      %p76 = scmp.ne.s32.totalorder %s62, %s63
      %p77 = scmp.eq.s32.totalorder %s29, 1
      %p78 = por %p76, %p77
      %p80 = scmp.ne.s32.totalorder %s63, %s79
      %p81 = scmp.eq.s32.totalorder %s29, 0
      %p82 = por %p80, %p81
      %s84 = sadd.s32 %s83, 1
      %p87 = scmp.eq.s32.totalorder %s23, 1
      %p88 = scmp.ne.s32.totalorder %s83, %s85
      %p89 = scmp.eq.s32.totalorder %s23, 0
      %p90 = por %p88, %p89
      %p91 = scmp.ne.s32.totalorder %s83, %s85
      %p92 = scmp.eq.s32.totalorder %s28, 1
      %p93 = por %p91, %p92
      %p94 = scmp.ne.s32.totalorder %s85, %s86
      %p95 = scmp.eq.s32.totalorder %s28, 0
      %p96 = por %p94, %p95
      %p97 = scmp.ne.s32.totalorder %s85, %s86
      %p98 = scmp.eq.s32.totalorder %s29, 1
      %p99 = por %p97, %p98
      %p101 = scmp.ne.s32.totalorder %s86, %s100
      %p102 = scmp.eq.s32.totalorder %s29, 0
      %p103 = por %p101, %p102
      %s105 = sadd.s32 %s104, 1
      %p108 = scmp.eq.s32.totalorder %s23, 1
      %p109 = scmp.ne.s32.totalorder %s104, %s106
      %p110 = scmp.eq.s32.totalorder %s23, 0
      %p111 = por %p109, %p110
      %p112 = scmp.ne.s32.totalorder %s104, %s106
      %p113 = scmp.eq.s32.totalorder %s28, 1
      %p114 = por %p112, %p113
      %p115 = scmp.ne.s32.totalorder %s106, %s107
      %p116 = scmp.eq.s32.totalorder %s28, 0
      %p117 = por %p115, %p116
      %p118 = scmp.ne.s32.totalorder %s106, %s107
      %p119 = scmp.eq.s32.totalorder %s29, 1
      %p120 = por %p118, %p119
      %p122 = scmp.ne.s32.totalorder %s107, %s121
      %p123 = scmp.eq.s32.totalorder %s29, 0
      %p124 = por %p122, %p123
      %s126 = sadd.s32 %s125, 1
      %p129 = scmp.eq.s32.totalorder %s23, 1
      %p130 = scmp.ne.s32.totalorder %s125, %s127
      %p131 = scmp.eq.s32.totalorder %s23, 0
      %p132 = por %p130, %p131
      %p133 = scmp.ne.s32.totalorder %s125, %s127
      %p134 = scmp.eq.s32.totalorder %s28, 1
      %p135 = por %p133, %p134
      %p136 = scmp.ne.s32.totalorder %s127, %s128
      %p137 = scmp.eq.s32.totalorder %s28, 0
      %p138 = por %p136, %p137
      %p139 = scmp.ne.s32.totalorder %s127, %s128
      %p140 = scmp.eq.s32.totalorder %s29, 1
      %p141 = por %p139, %p140
      %p143 = scmp.ne.s32.totalorder %s128, %s142
      %p144 = scmp.eq.s32.totalorder %s29, 0
      %p145 = por %p143, %p144
      %s147 = sadd.s32 %s146, 1
      %p150 = scmp.eq.s32.totalorder %s23, 1
      %p151 = scmp.ne.s32.totalorder %s146, %s148
      %p152 = scmp.eq.s32.totalorder %s23, 0
      %p153 = por %p151, %p152
      %p154 = scmp.ne.s32.totalorder %s146, %s148
      %p155 = scmp.eq.s32.totalorder %s28, 1
      %p156 = por %p154, %p155
      %p157 = scmp.ne.s32.totalorder %s148, %s149
      %p158 = scmp.eq.s32.totalorder %s28, 0
      %p159 = por %p157, %p158
      %p160 = scmp.ne.s32.totalorder %s148, %s149
      %p161 = scmp.eq.s32.totalorder %s29, 1
      %p162 = por %p160, %p161
      %p164 = scmp.ne.s32.totalorder %s149, %s163
      %p165 = scmp.eq.s32.totalorder %s29, 0
      %p166 = por %p164, %p165
      %s168 = sadd.s32 %s167, 1
      %p171 = scmp.eq.s32.totalorder %s23, 1
      %p172 = scmp.ne.s32.totalorder %s167, %s169
      %p173 = scmp.eq.s32.totalorder %s23, 0
      %p174 = por %p172, %p173
      %p175 = scmp.ne.s32.totalorder %s167, %s169
      %p176 = scmp.eq.s32.totalorder %s28, 1
      %p177 = por %p175, %p176
      %p178 = scmp.ne.s32.totalorder %s169, %s170
      %p179 = scmp.eq.s32.totalorder %s28, 0
      %p180 = por %p178, %p179
      %p181 = scmp.ne.s32.totalorder %s169, %s170
      %p182 = scmp.eq.s32.totalorder %s29, 1
      %p183 = por %p181, %p182
      %p185 = scmp.ne.s32.totalorder %s170, %s184
      %p186 = scmp.eq.s32.totalorder %s29, 0
      %p187 = por %p185, %p186
      %s189 = sadd.s32 %s188, 1
      %p192 = scmp.eq.s32.totalorder %s23, 1
      %p193 = scmp.ne.s32.totalorder %s188, %s190
      %p194 = scmp.eq.s32.totalorder %s23, 0
      %p195 = por %p193, %p194
      %p196 = scmp.ne.s32.totalorder %s188, %s190
      %p197 = scmp.eq.s32.totalorder %s28, 1
      %p198 = por %p196, %p197
      %p199 = scmp.ne.s32.totalorder %s190, %s191
      %p200 = scmp.eq.s32.totalorder %s28, 0
      %p201 = por %p199, %p200
      %p202 = scmp.ne.s32.totalorder %s190, %s191
      %p203 = scmp.eq.s32.totalorder %s29, 1
      %p204 = por %p202, %p203
      %p206 = scmp.ne.s32.totalorder %s191, %s205
      %p207 = scmp.eq.s32.totalorder %s29, 0
      %p208 = por %p206, %p207
      %s210 = sadd.s32 %s209, 1
      %p213 = scmp.eq.s32.totalorder %s23, 1
      %p214 = scmp.ne.s32.totalorder %s209, %s211
      %p215 = scmp.eq.s32.totalorder %s23, 0
      %p216 = por %p214, %p215
      %p217 = scmp.ne.s32.totalorder %s209, %s211
      %p218 = scmp.eq.s32.totalorder %s28, 1
      %p219 = por %p217, %p218
      %p220 = scmp.ne.s32.totalorder %s211, %s212
      %p221 = scmp.eq.s32.totalorder %s28, 0
      %p222 = por %p220, %p221
      %p223 = scmp.ne.s32.totalorder %s211, %s212
      %p224 = scmp.eq.s32.totalorder %s29, 1
      %p225 = por %p223, %p224
      %p227 = scmp.ne.s32.totalorder %s212, %s226
      %p228 = scmp.eq.s32.totalorder %s29, 0
      %p229 = por %p227, %p228
      %s231 = sadd.s32 %s230, 1
      %p234 = scmp.eq.s32.totalorder %s23, 1
      %p235 = scmp.ne.s32.totalorder %s230, %s232
      %p236 = scmp.eq.s32.totalorder %s23, 0
      %p237 = por %p235, %p236
      %p238 = scmp.ne.s32.totalorder %s230, %s232
      %p239 = scmp.eq.s32.totalorder %s28, 1
      %p240 = por %p238, %p239
      %p241 = scmp.ne.s32.totalorder %s232, %s233
      %p242 = scmp.eq.s32.totalorder %s28, 0
      %p243 = por %p241, %p242
      %p244 = scmp.ne.s32.totalorder %s232, %s233
      %p245 = scmp.eq.s32.totalorder %s29, 1
      %p246 = por %p244, %p245
      %p248 = scmp.ne.s32.totalorder %s233, %s247
      %p249 = scmp.eq.s32.totalorder %s29, 0
      %p250 = por %p248, %p249
      %s251 = ssub.s32 %s23, %s30
      %p252 = scmp.eq.s32.totalorder %s251, 0
      %s254 = sadd.s32 %s253, 1
      %s255 = scalar_select %p252, %s253, %s254
      %p258 = pneg %p252
      %p259 = scmp.eq.s32.totalorder %s23, 1
      %p260 = por %p258, %p259
      %p261 = scmp.ne.s32.totalorder %s253, %s256
      %p262 = scmp.eq.s32.totalorder %s23, 0
      %p263 = por %p261, %p262
      %p264 = scmp.ne.s32.totalorder %s253, %s256
      %p265 = scmp.eq.s32.totalorder %s28, 1
      %p266 = por %p264, %p265
      %p267 = scmp.ne.s32.totalorder %s256, %s257
      %p268 = scmp.eq.s32.totalorder %s28, 0
      %p269 = por %p267, %p268
      %p270 = scmp.ne.s32.totalorder %s256, %s257
      %p271 = scmp.eq.s32.totalorder %s29, 1
      %p272 = por %p270, %p271
      %p274 = scmp.ne.s32.totalorder %s257, %s273
      %p275 = scmp.eq.s32.totalorder %s29, 0
      %p276 = por %p274, %p275
      %p277 = scmp.le.s32.totalorder 1, %s23
      %p278 = scmp.lt.s32.totalorder %s23, 3
      %p279 = pnand %p277, %p278
      %p280 = pneg %p279
      // Predicated region
      $region9: #{up_forward.1} parent=5 // pred_check
        _
      $region10: #{up_forward.1} parent=5 // pred_check_branch
        %282 = sbr.rel (%p279) target = $region12
      $region11: #{up_forward.1} parent=5 // pred_region
        %s283 = ssub.s32 %s23, 1
        // Predicated region
        $region13: #{up_forward.1} parent=11 // pred_check
          %p284 = pneg %p96
        $region14: #{up_forward.1} parent=11 // pred_check_branch
          %286 = sbr.rel (%p284) target = $region16
        $region15: #{up_forward.1} parent=11 // pred_region
          %288 = vsyncadd [#allocation8], 0
          %s289 = sshll.u32 %s2, 4
          %s290 = int_to_ptr.hbm [resolvable:$true] %s289
          %s291 = sshll.u32 [#allocation9], 4
          %s292 = int_to_ptr.vmem [resolvable:$true] %s291
          %297 = dma.hbm_to_vmem [thread:$0]  %s290, 384, %s292, [#allocation8], 128, 128, 8
        $region16: #{up_forward.1} parent=11 // pred_fallthru
          _
        // Predicated region
        $region17: #{up_forward.1} parent=11 // pred_check
          %p298 = pneg %p117
        $region18: #{up_forward.1} parent=11 // pred_check_branch
          %300 = sbr.rel (%p298) target = $region20
        $region19: #{up_forward.1} parent=11 // pred_region
          _
        $region20: #{up_forward.1} parent=11 // pred_fallthru
          _
        // Predicated region
        $region21: #{up_forward.1} parent=11 // pred_check
          %p301 = pneg %p138
        $region22: #{up_forward.1} parent=11 // pred_check_branch
          %303 = sbr.rel (%p301) target = $region24
        $region23: #{up_forward.1} parent=11 // pred_region
          _
        $region24: #{up_forward.1} parent=11 // pred_fallthru
          _
        // Predicated region
        $region25: #{up_forward.1} parent=11 // pred_check
          %p304 = pneg %p159
        $region26: #{up_forward.1} parent=11 // pred_check_branch
          %306 = sbr.rel (%p304) target = $region28
        $region27: #{up_forward.1} parent=11 // pred_region
          _
        $region28: #{up_forward.1} parent=11 // pred_fallthru
          _
        // Predicated region
        $region29: #{up_forward.1} parent=11 // pred_check
          %p307 = pneg %p180
        $region30: #{up_forward.1} parent=11 // pred_check_branch
          %309 = sbr.rel (%p307) target = $region32
        $region31: #{up_forward.1} parent=11 // pred_region
          _
        $region32: #{up_forward.1} parent=11 // pred_fallthru
          _
        // Predicated region
        $region33: #{up_forward.1} parent=11 // pred_check
          %p310 = pneg %p201
        $region34: #{up_forward.1} parent=11 // pred_check_branch
          %312 = sbr.rel (%p310) target = $region36
        $region35: #{up_forward.1} parent=11 // pred_region
          %314 = vsyncadd [#allocation11], 0
          %s315 = sshll.u32 %s7, 4
          %s316 = int_to_ptr.hbm [resolvable:$true] %s315
          %s317 = sshll.u32 [#allocation10], 4
          %s318 = int_to_ptr.vmem [resolvable:$true] %s317
          %323 = dma.hbm_to_vmem [thread:$0]  %s316, 384, %s318, [#allocation11], 128, 128, 8
        $region36: #{up_forward.1} parent=11 // pred_fallthru
          _
        // Predicated region
        $region37: #{up_forward.1} parent=11 // pred_check
          %p324 = pneg %p222
        $region38: #{up_forward.1} parent=11 // pred_check_branch
          %326 = sbr.rel (%p324) target = $region40
        $region39: #{up_forward.1} parent=11 // pred_region
          _
        $region40: #{up_forward.1} parent=11 // pred_fallthru
          _
        // Predicated region
        $region41: #{up_forward.1} parent=11 // pred_check
          %p327 = pneg %p243
        $region42: #{up_forward.1} parent=11 // pred_check_branch
          %329 = sbr.rel (%p327) target = $region44
        $region43: #{up_forward.1} parent=11 // pred_region
          _
        $region44: #{up_forward.1} parent=11 // pred_fallthru
          _
      $region12: #{up_forward.1} parent=5 // pred_fallthru
        _
      %p330 = scmp.lt.s32.totalorder %s23, 2
      // Predicated region
      $region45: #{up_forward.1} parent=5 // pred_check
        %p331 = pneg %p330
      $region46: #{up_forward.1} parent=5 // pred_check_branch
        %333 = sbr.rel (%p331) target = $region48
      $region47: #{up_forward.1} parent=5 // pred_region
        // Predicated region
        $region49: #{up_forward.1} parent=47 // pred_check
          %p334 = pneg %p43
        $region50: #{up_forward.1} parent=47 // pred_check_branch
          %336 = sbr.rel (%p334) target = $region52
        $region51: #{up_forward.1} parent=47 // pred_region
          %s337 = sand.u32 %s33, 1
          %s338 = scalar_lea.sflag [#allocation6], %s337
          %s339 = sand.u32 %s33, 1
          %s340 = smul.addr %s339, 64
          %s341 = scalar_lea.vmem [#allocation5], %s340
          %343 = vsyncadd %s338, 0
          %s344 = smul.addr %s23, 8
          %s345 = smul.addr %s344, 8
          %s346 = scalar_lea.hbm %s0, %s345
          %s347 = sshll.u32 %s346, 4
          %s348 = int_to_ptr.hbm [resolvable:$true] %s347
          %s349 = sshll.u32 %s341, 4
          %s350 = int_to_ptr.vmem [resolvable:$true] %s349
          %355 = dma.hbm_to_vmem [thread:$0]  %s348, 1024, %s350, %s338, 128, 128, 8
        $region52: #{up_forward.1} parent=47 // pred_fallthru
          _
        // Predicated region
        $region53: #{up_forward.1} parent=47 // pred_check
          %p356 = pneg %p69
        $region54: #{up_forward.1} parent=47 // pred_check_branch
          %358 = sbr.rel (%p356) target = $region56
        $region55: #{up_forward.1} parent=47 // pred_region
          %s359 = sand.u32 %s23, 1
          %s360 = scalar_lea.sflag [#allocation8], %s359
          %s361 = sand.u32 %s59, 1
          %s362 = smul.addr %s361, 32
          %s363 = scalar_lea.vmem [#allocation7], %s362
          %365 = vsyncadd %s360, 0
          %s366 = smul.addr %s23, 4
          %s367 = smul.addr %s366, 8
          %s368 = scalar_lea.hbm %s1, %s367
          %s369 = sshll.u32 %s368, 4
          %s370 = int_to_ptr.hbm [resolvable:$true] %s369
          %s371 = sshll.u32 %s363, 4
          %s372 = int_to_ptr.vmem [resolvable:$true] %s371
          %377 = dma.hbm_to_vmem [thread:$0]  %s370, 512, %s372, %s360, 128, 128, 8
        $region56: #{up_forward.1} parent=47 // pred_fallthru
          _
      $region48: #{up_forward.1} parent=5 // pred_fallthru
        _
      %p378 = scmp.le.s32.totalorder 1, %s23
      %p379 = scmp.lt.s32.totalorder %s23, 3
      %p380 = pnand %p378, %p379
      %p381 = pneg %p380
      // Predicated region
      $region57: #{up_forward.1} parent=5 // pred_check
        _
      $region58: #{up_forward.1} parent=5 // pred_check_branch
        %383 = sbr.rel (%p380) target = $region60
      $region59: #{up_forward.1} parent=5 // pred_region
        %s384 = ssub.s32 %s23, 1
        %s385 = sand.u32 %s36, 1
        %s386 = scalar_lea.sflag [#allocation6], %s385
        %s387 = sand.u32 %s36, 1
        %s388 = smul.addr %s387, 64
        %s389 = scalar_lea.vmem [#allocation5], %s388
        // Predicated region
        $region61: #{up_forward.1} parent=59 // pred_check
          %p390 = pneg %p49
        $region62: #{up_forward.1} parent=59 // pred_check_branch
          %392 = sbr.rel (%p390) target = $region64
        $region63: #{up_forward.1} parent=59 // pred_region
          %394 = dma.done %s386, 1024
        $region64: #{up_forward.1} parent=59 // pred_fallthru
          _
        %s395 = sand.u32 %s28, 1
        %s396 = scalar_lea.sflag [#allocation8], %s395
        %s397 = sand.u32 %s62, 1
        %s398 = smul.addr %s397, 32
        %s399 = scalar_lea.vmem [#allocation7], %s398
        // Predicated region
        $region65: #{up_forward.1} parent=59 // pred_check
          %p400 = pneg %p75
        $region66: #{up_forward.1} parent=59 // pred_check_branch
          %402 = sbr.rel (%p400) target = $region68
        $region67: #{up_forward.1} parent=59 // pred_region
          %404 = dma.done %s396, 512
        $region68: #{up_forward.1} parent=59 // pred_fallthru
          _
        // Predicated region
        $region69: #{up_forward.1} parent=59 // pred_check
          %p405 = pneg %p96
        $region70: #{up_forward.1} parent=59 // pred_check_branch
          %407 = sbr.rel (%p405) target = $region72
        $region71: #{up_forward.1} parent=59 // pred_region
          %409 = dma.done [#allocation8], 384
        $region72: #{up_forward.1} parent=59 // pred_fallthru
          _
        // Predicated region
        $region73: #{up_forward.1} parent=59 // pred_check
          %p410 = pneg %p201
        $region74: #{up_forward.1} parent=59 // pred_check_branch
          %412 = sbr.rel (%p410) target = $region76
        $region75: #{up_forward.1} parent=59 // pred_region
          %414 = dma.done [#allocation11], 384
        $region76: #{up_forward.1} parent=59 // pred_fallthru
          _
        %s415 = sand.u32 %s36, 1
        %s416 = scalar_lea.sflag [#allocation6], %s415
        %s417 = sand.u32 %s36, 1
        %s418 = smul.addr %s417, 64
        %s419 = scalar_lea.vmem [#allocation5], %s418
        %p420 = pneg %p49
        %p421 = pneg %p46
        %s422 = sand.u32 %s28, 1
        %s423 = scalar_lea.sflag [#allocation8], %s422
        %s424 = sand.u32 %s62, 1
        %s425 = smul.addr %s424, 32
        %s426 = scalar_lea.vmem [#allocation7], %s425
        %p427 = pneg %p75
        %p428 = pneg %p72
        %p429 = pneg %p96
        %p430 = pneg %p93
        %p431 = pneg %p117
        %p432 = pneg %p114
        %p433 = pneg %p138
        %p434 = pneg %p135
        %p435 = pneg %p159
        %p436 = pneg %p156
        %p437 = pneg %p180
        %p438 = pneg %p177
        %p439 = pneg %p201
        %p440 = pneg %p198
        %p441 = pneg %p222
        %p442 = pneg %p219
        %p443 = pneg %p243
        %p444 = pneg %p240
        %p445 = pneg %p269
        %p446 = pneg %p266
        %p447 = scmp.lt.s32.totalorder %s28, 1
        %s448 = scalar_select %p447, %s28, 1
        %s449 = smul.addr %s448, 2
        %s450 = smul.addr %s449, 8
        %s451 = scalar_lea.vmem %s10, %s450
        %p452 = scmp.lt.s32.totalorder %s28, 1
        %s453 = scalar_select %p452, %s28, 1
        %s454 = smul.addr %s453, 2
        %s455 = smul.addr %s454, 8
        %s456 = scalar_lea.vmem %s10, %s455
        %vm457 = vcmask 139264
        %458 = vst.msk [vmem:[#allocation2] sm:$0x1] %vm457, 0.0
        %459 = vst.msk [vmem:[#allocation2 + $0x18] sm:$0x1] %vm457, 0.0
        %460 = vst.msk [vmem:[#allocation2 + $0x30] sm:$0x1] %vm457, 0.0
        %461 = vst.msk [vmem:[#allocation2 + $0x48] sm:$0x1] %vm457, 0.0
        %462 = vst.msk [vmem:[#allocation2 + $0x11] sm:$0x1] %vm457, 0.0
        %463 = vst.msk [vmem:[#allocation2 + $0x29] sm:$0x1] %vm457, 0.0
        %464 = vst.msk [vmem:[#allocation2 + $0x41] sm:$0x1] %vm457, 0.0
        %465 = vst.msk [vmem:[#allocation2 + $0x59] sm:$0x1] %vm457, 0.0
        %vm466 = vcmask 7168
        %467 = vst.msk [vmem:[#allocation2] sm:$0xff] %vm466, 0.0
        %468 = vst.msk [vmem:[#allocation2 + $0x8] sm:$0xff] %vm466, 0.0
        %vm469 = vcmask 1024
        %470 = vst.msk [vmem:[#allocation2 + $0x10] sm:$0x3] %vm469, 0.0
        %471 = vst.msk [vmem:[#allocation2 + $0x18] sm:$0xff] %vm466, 0.0
        %472 = vst.msk [vmem:[#allocation2 + $0x20] sm:$0xff] %vm466, 0.0
        %473 = vst.msk [vmem:[#allocation2 + $0x28] sm:$0x3] %vm469, 0.0
        %474 = vst.msk [vmem:[#allocation2 + $0x30] sm:$0xff] %vm466, 0.0
        %475 = vst.msk [vmem:[#allocation2 + $0x38] sm:$0xff] %vm466, 0.0
        %476 = vst.msk [vmem:[#allocation2 + $0x40] sm:$0x3] %vm469, 0.0
        %477 = vst.msk [vmem:[#allocation2 + $0x48] sm:$0xff] %vm466, 0.0
        %478 = vst.msk [vmem:[#allocation2 + $0x50] sm:$0xff] %vm466, 0.0
        %479 = vst.msk [vmem:[#allocation2 + $0x58] sm:$0x3] %vm469, 0.0
        %vm480 = vcmask 146568
        %481 = vst.msk [vmem:[#allocation2] sm:$0xff] %vm480, 0.0
        %482 = vst.msk [vmem:[#allocation2 + $0x8] sm:$0xff] %vm480, 0.0
        %vm483 = vcmask 140424
        %484 = vst.msk [vmem:[#allocation2 + $0x10] sm:$0x3] %vm483, 0.0
        %485 = vst.msk [vmem:[#allocation2 + $0x18] sm:$0xff] %vm480, 0.0
        %486 = vst.msk [vmem:[#allocation2 + $0x20] sm:$0xff] %vm480, 0.0
        %487 = vst.msk [vmem:[#allocation2 + $0x28] sm:$0x3] %vm483, 0.0
        %488 = vst.msk [vmem:[#allocation2 + $0x30] sm:$0xff] %vm480, 0.0
        %489 = vst.msk [vmem:[#allocation2 + $0x38] sm:$0xff] %vm480, 0.0
        %490 = vst.msk [vmem:[#allocation2 + $0x40] sm:$0x3] %vm483, 0.0
        %491 = vst.msk [vmem:[#allocation2 + $0x48] sm:$0xff] %vm480, 0.0
        %492 = vst.msk [vmem:[#allocation2 + $0x50] sm:$0xff] %vm480, 0.0
        %493 = vst.msk [vmem:[#allocation2 + $0x58] sm:$0x3] %vm483, 0.0
        %v494 = vld [vmem:[%s389] sm:$0xff]
        %v495 = vld [vmem:[%s389 + $0x8] sm:$0xff]
        %v496 = vld [vmem:[%s389 + $0x10] sm:$0xff]
        %v497 = vld [vmem:[%s389 + $0x18] sm:$0xff]
        %v498 = vld [vmem:[%s389 + $0x20] sm:$0xff]
        %v499 = vld [vmem:[%s389 + $0x28] sm:$0xff]
        %v500 = vld [vmem:[%s389 + $0x30] sm:$0xff]
        %v501 = vld [vmem:[%s389 + $0x38] sm:$0xff]
        %510 = vrot.lane.b32.xlu0 %v494, 1
        %v511 = vpop.permute.xlu0 %510
        %512 = vrot.lane.b32.xlu0 %v495, 1
        %v513 = vpop.permute.xlu0 %512
        %514 = vrot.lane.b32.xlu0 %v496, 1
        %v515 = vpop.permute.xlu0 %514
        %516 = vrot.lane.b32.xlu0 %v497, 1
        %v517 = vpop.permute.xlu0 %516
        %518 = vrot.lane.b32.xlu0 %v498, 1
        %v519 = vpop.permute.xlu0 %518
        %520 = vrot.lane.b32.xlu0 %v499, 1
        %v521 = vpop.permute.xlu0 %520
        %522 = vrot.lane.b32.xlu0 %v500, 1
        %v523 = vpop.permute.xlu0 %522
        %524 = vrot.lane.b32.xlu0 %v501, 1
        %v525 = vpop.permute.xlu0 %524
        %vm534 = vcmask 138248
        %535 = vst.msk [vmem:[#allocation2 + $0x1] sm:$0xff] %vm534, %v511
        %536 = vst.msk [vmem:[#allocation2 + $0x9] sm:$0xff] %vm534, %v513
        %537 = vst.msk [vmem:[#allocation2 + $0x19] sm:$0xff] %vm534, %v515
        %538 = vst.msk [vmem:[#allocation2 + $0x21] sm:$0xff] %vm534, %v517
        %539 = vst.msk [vmem:[#allocation2 + $0x31] sm:$0xff] %vm534, %v519
        %540 = vst.msk [vmem:[#allocation2 + $0x39] sm:$0xff] %vm534, %v521
        %541 = vst.msk [vmem:[#allocation2 + $0x49] sm:$0xff] %vm534, %v523
        %542 = vst.msk [vmem:[#allocation2 + $0x51] sm:$0xff] %vm534, %v525
        %v543 = vld [vmem:[%s399] sm:$0xff]
        %v544 = vld [vmem:[%s399 + $0x8] sm:$0xff]
        %v545 = vld [vmem:[%s399 + $0x10] sm:$0xff]
        %v546 = vld [vmem:[%s399 + $0x18] sm:$0xff]
        %v547 = vld [vmem:[%s3] sm:$0xff]
        %vm548 = vcmask 64512
        %v550 = vsel %vm548, %v543, 0
        %v553 = vsel %vm548, %v544, 0
        %v556 = vsel %vm548, %v545, 0
        %v559 = vsel %vm548, %v546, 0
        %561 = vmatpush.msra.mxu0 0.0
        %562 = vmatpush.msra.mxu0 0.0
        %563 = vmatpush.msra.mxu0 0.0
        %564 = vmatpush.msra.mxu0 0.0
        %565 = vmatpush.msra.mxu0 0.0
        %566 = vmatpush.msra.mxu0 0.0
        %567 = vmatpush.msra.mxu0 0.0
        %568 = vmatpush.msra.mxu0 0.0
        %569 = vmatpush.msra.mxu0 0.0
        %570 = vmatpush.msra.mxu0 0.0
        %571 = vmatpush.msra.mxu0 0.0
        %572 = vmatpush.msra.mxu0 0.0
        %573 = vmatpush.msra.mxu0 0.0
        %574 = vmatpush.msra.mxu0 0.0
        %575 = vmatpush.msra.mxu0 0.0
        %576 = vmatpush.msra.mxu0 %v547
        %577 = vmatmul.f32.gmra.mxu0 %v550
        %v578 = vpop.f32.mrf.mxu0
        %v579 = vadd.f32 0.0, %v578
        %580 = vmatmul.f32.gmra.mxu0 %v553
        %v581 = vpop.f32.mrf.mxu0
        %v582 = vadd.f32 0.0, %v581
        %583 = vmatmul.f32.gmra.mxu0 %v556
        %v584 = vpop.f32.mrf.mxu0
        %v585 = vadd.f32 0.0, %v584
        %586 = vmatmul.f32.gmra.mxu0 %v559
        %v587 = vpop.f32.mrf.mxu0
        %v588 = vadd.f32 0.0, %v587
        %589 = vdwg.mxu0
        %v590 = vld [vmem:[#allocation9] sm:$0xff]
        %v591 = vld [vmem:[#allocation9 + $0x8] sm:$0xff]
        %v592 = vld [vmem:[#allocation9 + $0x10] sm:$0x3]
        %v594 = vsel %vm548, %v590, 0
        %v597 = vsel %vm548, %v591, 0
        %v600 = vsel %vm548, %v592, 0
        %602 = vmatpush.msra.mxu0 0.0
        %603 = vmatpush.msra.mxu0 0.0
        %604 = vmatpush.msra.mxu0 0.0
        %605 = vmatpush.msra.mxu0 0.0
        %606 = vmatpush.msra.mxu0 0.0
        %607 = vmatpush.msra.mxu0 0.0
        %608 = vmatpush.msra.mxu0 0.0
        %609 = vmatpush.msra.mxu0 0.0
        %610 = vmatpush.msra.mxu0 0.0
        %611 = vmatpush.msra.mxu0 0.0
        %612 = vmatpush.msra.mxu0 0.0
        %613 = vmatpush.msra.mxu0 0.0
        %614 = vmatpush.msra.mxu0 0.0
        %615 = vmatpush.msra.mxu0 0.0
        %616 = vmatpush.msra.mxu0 0.0
        %617 = vmatpush.msra.mxu0 %v579
        %618 = vmatmul.f32.gmra.mxu0 %v594
        %v619 = vpop.f32.mrf.mxu0
        %v620 = vadd.f32 0.0, %v619
        %621 = vmatmul.f32.gmra.mxu0 %v597
        %v622 = vpop.f32.mrf.mxu0
        %v623 = vadd.f32 0.0, %v622
        %624 = vmatmul.f32.gmra.mxu0 %v600
        %v625 = vpop.f32.mrf.mxu0
        %v626 = vadd.f32 0.0, %v625
        %627 = vdwg.mxu0
        %628 = vmatpush.msra.mxu0 0.0
        %629 = vmatpush.msra.mxu0 0.0
        %630 = vmatpush.msra.mxu0 0.0
        %631 = vmatpush.msra.mxu0 0.0
        %632 = vmatpush.msra.mxu0 0.0
        %633 = vmatpush.msra.mxu0 0.0
        %634 = vmatpush.msra.mxu0 0.0
        %635 = vmatpush.msra.mxu0 0.0
        %636 = vmatpush.msra.mxu0 0.0
        %637 = vmatpush.msra.mxu0 0.0
        %638 = vmatpush.msra.mxu0 0.0
        %639 = vmatpush.msra.mxu0 0.0
        %640 = vmatpush.msra.mxu0 0.0
        %641 = vmatpush.msra.mxu0 0.0
        %642 = vmatpush.msra.mxu0 0.0
        %643 = vmatpush.msra.mxu0 %v582
        %644 = vmatmul.f32.gmra.mxu0 %v594
        %v645 = vpop.f32.mrf.mxu0
        %v646 = vadd.f32 0.0, %v645
        %647 = vmatmul.f32.gmra.mxu0 %v597
        %v648 = vpop.f32.mrf.mxu0
        %v649 = vadd.f32 0.0, %v648
        %650 = vmatmul.f32.gmra.mxu0 %v600
        %v651 = vpop.f32.mrf.mxu0
        %v652 = vadd.f32 0.0, %v651
        %653 = vdwg.mxu0
        %654 = vmatpush.msra.mxu0 0.0
        %655 = vmatpush.msra.mxu0 0.0
        %656 = vmatpush.msra.mxu0 0.0
        %657 = vmatpush.msra.mxu0 0.0
        %658 = vmatpush.msra.mxu0 0.0
        %659 = vmatpush.msra.mxu0 0.0
        %660 = vmatpush.msra.mxu0 0.0
        %661 = vmatpush.msra.mxu0 0.0
        %662 = vmatpush.msra.mxu0 0.0
        %663 = vmatpush.msra.mxu0 0.0
        %664 = vmatpush.msra.mxu0 0.0
        %665 = vmatpush.msra.mxu0 0.0
        %666 = vmatpush.msra.mxu0 0.0
        %667 = vmatpush.msra.mxu0 0.0
        %668 = vmatpush.msra.mxu0 0.0
        %669 = vmatpush.msra.mxu0 %v585
        %670 = vmatmul.f32.gmra.mxu0 %v594
        %v671 = vpop.f32.mrf.mxu0
        %v672 = vadd.f32 0.0, %v671
        %673 = vmatmul.f32.gmra.mxu0 %v597
        %v674 = vpop.f32.mrf.mxu0
        %v675 = vadd.f32 0.0, %v674
        %676 = vmatmul.f32.gmra.mxu0 %v600
        %v677 = vpop.f32.mrf.mxu0
        %v678 = vadd.f32 0.0, %v677
        %679 = vdwg.mxu0
        %680 = vmatpush.msra.mxu0 0.0
        %681 = vmatpush.msra.mxu0 0.0
        %682 = vmatpush.msra.mxu0 0.0
        %683 = vmatpush.msra.mxu0 0.0
        %684 = vmatpush.msra.mxu0 0.0
        %685 = vmatpush.msra.mxu0 0.0
        %686 = vmatpush.msra.mxu0 0.0
        %687 = vmatpush.msra.mxu0 0.0
        %688 = vmatpush.msra.mxu0 0.0
        %689 = vmatpush.msra.mxu0 0.0
        %690 = vmatpush.msra.mxu0 0.0
        %691 = vmatpush.msra.mxu0 0.0
        %692 = vmatpush.msra.mxu0 0.0
        %693 = vmatpush.msra.mxu0 0.0
        %694 = vmatpush.msra.mxu0 0.0
        %695 = vmatpush.msra.mxu0 %v588
        %696 = vmatmul.f32.gmra.mxu0 %v594
        %v697 = vpop.f32.mrf.mxu0
        %v698 = vadd.f32 0.0, %v697
        %699 = vmatmul.f32.gmra.mxu0 %v597
        %v700 = vpop.f32.mrf.mxu0
        %v701 = vadd.f32 0.0, %v700
        %702 = vmatmul.f32.gmra.mxu0 %v600
        %v703 = vpop.f32.mrf.mxu0
        %v704 = vadd.f32 0.0, %v703
        %705 = vdwg.mxu0
        %s706 = scalar_lea.vmem [#allocation2], 96
        %vm707 = vcmask 146432
        %708 = vst.msk [vmem:[%s706] sm:$0xff] %vm707, %v620
        %709 = vst.msk [vmem:[%s706 + $0x8] sm:$0xff] %vm707, %v623
        %vm710 = vcmask 140288
        %711 = vst.msk [vmem:[%s706 + $0x10] sm:$0x3] %vm710, %v626
        %712 = vst.msk [vmem:[%s706 + $0x18] sm:$0xff] %vm707, %v646
        %713 = vst.msk [vmem:[%s706 + $0x20] sm:$0xff] %vm707, %v649
        %714 = vst.msk [vmem:[%s706 + $0x28] sm:$0x3] %vm710, %v652
        %715 = vst.msk [vmem:[%s706 + $0x30] sm:$0xff] %vm707, %v672
        %716 = vst.msk [vmem:[%s706 + $0x38] sm:$0xff] %vm707, %v675
        %717 = vst.msk [vmem:[%s706 + $0x40] sm:$0x3] %vm710, %v678
        %718 = vst.msk [vmem:[%s706 + $0x48] sm:$0xff] %vm707, %v698
        %719 = vst.msk [vmem:[%s706 + $0x50] sm:$0xff] %vm707, %v701
        %720 = vst.msk [vmem:[%s706 + $0x58] sm:$0x3] %vm710, %v704
        %v721 = vld [vmem:[#allocation2] sm:$0xff]
        %v722 = vld [vmem:[#allocation2 + $0x8] sm:$0xff]
        %v723 = vld [vmem:[#allocation2 + $0x18] sm:$0xff]
        %v724 = vld [vmem:[#allocation2 + $0x20] sm:$0xff]
        %v725 = vld [vmem:[#allocation2 + $0x30] sm:$0xff]
        %v726 = vld [vmem:[#allocation2 + $0x38] sm:$0xff]
        %v727 = vld [vmem:[#allocation2 + $0x48] sm:$0xff]
        %v728 = vld [vmem:[#allocation2 + $0x50] sm:$0xff]
        %v729 = vld [vmem:[#allocation2 + $0x60] sm:$0xff]
        %v730 = vld [vmem:[#allocation2 + $0x68] sm:$0xff]
        %v731 = vld [vmem:[#allocation2 + $0x78] sm:$0xff]
        %v732 = vld [vmem:[#allocation2 + $0x80] sm:$0xff]
        %v733 = vld [vmem:[#allocation2 + $0x90] sm:$0xff]
        %v734 = vld [vmem:[#allocation2 + $0x98] sm:$0xff]
        %v735 = vld [vmem:[#allocation2 + $0xa8] sm:$0xff]
        %v736 = vld [vmem:[#allocation2 + $0xb0] sm:$0xff]
        %v737 = vrot.slane %v725, 4
        %vm738 = vcmask 1047556
        %v739 = vsel %vm738, %v737, %v721
        %v740 = vrot.slane %v721, 4
        %v741 = vsel %vm738, %v725, %v740
        %v743 = vunpack.c.l.s4 1983009808
        %v744 = vunpack.c.0.s8 %v743
        %v745 = vperm.slane %v739, %v744
        %v747 = vunpack.c.l.s4 1983009808
        %v748 = vunpack.c.0.s8 %v747
        %v749 = vperm.slane %v741, %v748
        %v750 = vrot.slane %v727, 4
        %v751 = vsel %vm738, %v750, %v723
        %v752 = vrot.slane %v723, 4
        %v753 = vsel %vm738, %v727, %v752
        %v755 = vunpack.c.l.s4 1983009808
        %v756 = vunpack.c.0.s8 %v755
        %v757 = vperm.slane %v751, %v756
        %v759 = vunpack.c.l.s4 1983009808
        %v760 = vunpack.c.0.s8 %v759
        %v761 = vperm.slane %v753, %v760
        %v762 = vrot.slane %v733, 4
        %v763 = vsel %vm738, %v762, %v729
        %v764 = vrot.slane %v729, 4
        %v765 = vsel %vm738, %v733, %v764
        %v767 = vunpack.c.l.s4 1983009808
        %v768 = vunpack.c.0.s8 %v767
        %v769 = vperm.slane %v763, %v768
        %v771 = vunpack.c.l.s4 1983009808
        %v772 = vunpack.c.0.s8 %v771
        %v773 = vperm.slane %v765, %v772
        %v774 = vrot.slane %v735, 4
        %v775 = vsel %vm738, %v774, %v731
        %v776 = vrot.slane %v731, 4
        %v777 = vsel %vm738, %v735, %v776
        %v779 = vunpack.c.l.s4 1983009808
        %v780 = vunpack.c.0.s8 %v779
        %v781 = vperm.slane %v775, %v780
        %v783 = vunpack.c.l.s4 1983009808
        %v784 = vunpack.c.0.s8 %v783
        %v785 = vperm.slane %v777, %v784
        %v786 = vrot.slane %v757, 4
        %v787 = vsel %vm738, %v786, %v745
        %v788 = vrot.slane %v745, 4
        %v789 = vsel %vm738, %v757, %v788
        %v791 = vunpack.c.l.s4 1934713408
        %v792 = vunpack.c.0.s8 %v791
        %v793 = vperm.slane %v787, %v792
        %v795 = vunpack.c.l.s4 1934713408
        %v796 = vunpack.c.0.s8 %v795
        %v797 = vperm.slane %v789, %v796
        %v798 = vrot.slane %v761, 4
        %v799 = vsel %vm738, %v798, %v749
        %v800 = vrot.slane %v749, 4
        %v801 = vsel %vm738, %v761, %v800
        %v803 = vunpack.c.l.s4 1934713408
        %v804 = vunpack.c.0.s8 %v803
        %v805 = vperm.slane %v799, %v804
        %v807 = vunpack.c.l.s4 1934713408
        %v808 = vunpack.c.0.s8 %v807
        %v809 = vperm.slane %v801, %v808
        %v810 = vrot.slane %v781, 4
        %v811 = vsel %vm738, %v810, %v769
        %v812 = vrot.slane %v769, 4
        %v813 = vsel %vm738, %v781, %v812
        %v815 = vunpack.c.l.s4 1934713408
        %v816 = vunpack.c.0.s8 %v815
        %v817 = vperm.slane %v811, %v816
        %v819 = vunpack.c.l.s4 1934713408
        %v820 = vunpack.c.0.s8 %v819
        %v821 = vperm.slane %v813, %v820
        %v822 = vrot.slane %v785, 4
        %v823 = vsel %vm738, %v822, %v773
        %v824 = vrot.slane %v773, 4
        %v825 = vsel %vm738, %v785, %v824
        %v827 = vunpack.c.l.s4 1934713408
        %v828 = vunpack.c.0.s8 %v827
        %v829 = vperm.slane %v823, %v828
        %v831 = vunpack.c.l.s4 1934713408
        %v832 = vunpack.c.0.s8 %v831
        %v833 = vperm.slane %v825, %v832
        %v834 = vrot.slane %v817, 4
        %v835 = vsel %vm738, %v834, %v793
        %v836 = vrot.slane %v793, 4
        %v837 = vsel %vm738, %v817, %v836
        %v838 = vrot.slane %v821, 4
        %v839 = vsel %vm738, %v838, %v797
        %v840 = vrot.slane %v797, 4
        %v841 = vsel %vm738, %v821, %v840
        %v842 = vrot.slane %v829, 4
        %v843 = vsel %vm738, %v842, %v805
        %v844 = vrot.slane %v805, 4
        %v845 = vsel %vm738, %v829, %v844
        %v846 = vrot.slane %v833, 4
        %v847 = vsel %vm738, %v846, %v809
        %v848 = vrot.slane %v809, 4
        %v849 = vsel %vm738, %v833, %v848
        %v850 = vrot.slane %v726, 4
        %v851 = vsel %vm738, %v850, %v722
        %v852 = vrot.slane %v722, 4
        %v853 = vsel %vm738, %v726, %v852
        %v855 = vunpack.c.l.s4 1983009808
        %v856 = vunpack.c.0.s8 %v855
        %v857 = vperm.slane %v851, %v856
        %v859 = vunpack.c.l.s4 1983009808
        %v860 = vunpack.c.0.s8 %v859
        %v861 = vperm.slane %v853, %v860
        %v862 = vrot.slane %v728, 4
        %v863 = vsel %vm738, %v862, %v724
        %v864 = vrot.slane %v724, 4
        %v865 = vsel %vm738, %v728, %v864
        %v867 = vunpack.c.l.s4 1983009808
        %v868 = vunpack.c.0.s8 %v867
        %v869 = vperm.slane %v863, %v868
        %v871 = vunpack.c.l.s4 1983009808
        %v872 = vunpack.c.0.s8 %v871
        %v873 = vperm.slane %v865, %v872
        %v874 = vrot.slane %v734, 4
        %v875 = vsel %vm738, %v874, %v730
        %v876 = vrot.slane %v730, 4
        %v877 = vsel %vm738, %v734, %v876
        %v879 = vunpack.c.l.s4 1983009808
        %v880 = vunpack.c.0.s8 %v879
        %v881 = vperm.slane %v875, %v880
        %v883 = vunpack.c.l.s4 1983009808
        %v884 = vunpack.c.0.s8 %v883
        %v885 = vperm.slane %v877, %v884
        %v886 = vrot.slane %v736, 4
        %v887 = vsel %vm738, %v886, %v732
        %v888 = vrot.slane %v732, 4
        %v889 = vsel %vm738, %v736, %v888
        %v891 = vunpack.c.l.s4 1983009808
        %v892 = vunpack.c.0.s8 %v891
        %v893 = vperm.slane %v887, %v892
        %v895 = vunpack.c.l.s4 1983009808
        %v896 = vunpack.c.0.s8 %v895
        %v897 = vperm.slane %v889, %v896
        %v898 = vrot.slane %v869, 4
        %v899 = vsel %vm738, %v898, %v857
        %v900 = vrot.slane %v857, 4
        %v901 = vsel %vm738, %v869, %v900
        %v903 = vunpack.c.l.s4 1934713408
        %v904 = vunpack.c.0.s8 %v903
        %v905 = vperm.slane %v899, %v904
        %v907 = vunpack.c.l.s4 1934713408
        %v908 = vunpack.c.0.s8 %v907
        %v909 = vperm.slane %v901, %v908
        %v910 = vrot.slane %v873, 4
        %v911 = vsel %vm738, %v910, %v861
        %v912 = vrot.slane %v861, 4
        %v913 = vsel %vm738, %v873, %v912
        %v915 = vunpack.c.l.s4 1934713408
        %v916 = vunpack.c.0.s8 %v915
        %v917 = vperm.slane %v911, %v916
        %v919 = vunpack.c.l.s4 1934713408
        %v920 = vunpack.c.0.s8 %v919
        %v921 = vperm.slane %v913, %v920
        %v922 = vrot.slane %v893, 4
        %v923 = vsel %vm738, %v922, %v881
        %v924 = vrot.slane %v881, 4
        %v925 = vsel %vm738, %v893, %v924
        %v927 = vunpack.c.l.s4 1934713408
        %v928 = vunpack.c.0.s8 %v927
        %v929 = vperm.slane %v923, %v928
        %v931 = vunpack.c.l.s4 1934713408
        %v932 = vunpack.c.0.s8 %v931
        %v933 = vperm.slane %v925, %v932
        %v934 = vrot.slane %v897, 4
        %v935 = vsel %vm738, %v934, %v885
        %v936 = vrot.slane %v885, 4
        %v937 = vsel %vm738, %v897, %v936
        %v939 = vunpack.c.l.s4 1934713408
        %v940 = vunpack.c.0.s8 %v939
        %v941 = vperm.slane %v935, %v940
        %v943 = vunpack.c.l.s4 1934713408
        %v944 = vunpack.c.0.s8 %v943
        %v945 = vperm.slane %v937, %v944
        %v946 = vrot.slane %v929, 4
        %v947 = vsel %vm738, %v946, %v905
        %v948 = vrot.slane %v905, 4
        %v949 = vsel %vm738, %v929, %v948
        %v950 = vrot.slane %v933, 4
        %v951 = vsel %vm738, %v950, %v909
        %v952 = vrot.slane %v909, 4
        %v953 = vsel %vm738, %v933, %v952
        %v954 = vrot.slane %v941, 4
        %v955 = vsel %vm738, %v954, %v917
        %v956 = vrot.slane %v917, 4
        %v957 = vsel %vm738, %v941, %v956
        %v958 = vrot.slane %v945, 4
        %v959 = vsel %vm738, %v958, %v921
        %v960 = vrot.slane %v921, 4
        %v961 = vsel %vm738, %v945, %v960
        %963 = vrot.lane.b32.xlu0 %v837, 16
        %v964 = vpop.permute.xlu0 %963
        %967 = vrot.lane.b32.xlu0 %v839, 32
        %v968 = vpop.permute.xlu0 %967
        %971 = vrot.lane.b32.xlu0 %v841, 48
        %v972 = vpop.permute.xlu0 %971
        %975 = vrot.lane.b32.xlu0 %v843, 64
        %v976 = vpop.permute.xlu0 %975
        %979 = vrot.lane.b32.xlu0 %v845, 80
        %v980 = vpop.permute.xlu0 %979
        %983 = vrot.lane.b32.xlu0 %v847, 96
        %v984 = vpop.permute.xlu0 %983
        %987 = vrot.lane.b32.xlu0 %v849, 112
        %v988 = vpop.permute.xlu0 %987
        %991 = vrot.lane.b32.xlu0 %v949, 16
        %v992 = vpop.permute.xlu0 %991
        %995 = vrot.lane.b32.xlu0 %v951, 32
        %v996 = vpop.permute.xlu0 %995
        %999 = vrot.lane.b32.xlu0 %v953, 48
        %v1000 = vpop.permute.xlu0 %999
        %1003 = vrot.lane.b32.xlu0 %v955, 64
        %v1004 = vpop.permute.xlu0 %1003
        %1007 = vrot.lane.b32.xlu0 %v957, 80
        %v1008 = vpop.permute.xlu0 %1007
        %1011 = vrot.lane.b32.xlu0 %v959, 96
        %v1012 = vpop.permute.xlu0 %1011
        %1015 = vrot.lane.b32.xlu0 %v961, 112
        %v1016 = vpop.permute.xlu0 %1015
        %vm1018 = vcmask 130048
        %v1019 = vsel %vm1018, %v835, %v964
        %vm1020 = vcmask 261120
        %v1021 = vsel %vm1020, %v1019, %v968
        %vm1022 = vcmask 392192
        %v1023 = vsel %vm1022, %v1021, %v972
        %vm1024 = vcmask 523264
        %v1025 = vsel %vm1024, %v1023, %v976
        %vm1026 = vcmask 654336
        %v1027 = vsel %vm1026, %v1025, %v980
        %vm1028 = vcmask 785408
        %v1029 = vsel %vm1028, %v1027, %v984
        %vm1030 = vcmask 916480
        %v1031 = vsel %vm1030, %v1029, %v988
        %v1032 = vsel %vm1018, %v947, %v992
        %v1033 = vsel %vm1020, %v1032, %v996
        %v1034 = vsel %vm1022, %v1033, %v1000
        %v1035 = vsel %vm1024, %v1034, %v1004
        %v1036 = vsel %vm1026, %v1035, %v1008
        %v1037 = vsel %vm1028, %v1036, %v1012
        %v1038 = vsel %vm1030, %v1037, %v1016
        %1039 = vst [vmem:[#allocation4] sm:$0xff] %v1031
        %1040 = vst [vmem:[#allocation4 + $0x8] sm:$0xff] %v1038
        %1057 = vrot.lane.b32.xlu0 %v721, 127
        %v1058 = vpop.permute.xlu0 %1057
        %1059 = vrot.lane.b32.xlu0 %v722, 127
        %v1060 = vpop.permute.xlu0 %1059
        %1061 = vrot.lane.b32.xlu0 %v723, 127
        %v1062 = vpop.permute.xlu0 %1061
        %1063 = vrot.lane.b32.xlu0 %v724, 127
        %v1064 = vpop.permute.xlu0 %1063
        %1065 = vrot.lane.b32.xlu0 %v725, 127
        %v1066 = vpop.permute.xlu0 %1065
        %1067 = vrot.lane.b32.xlu0 %v726, 127
        %v1068 = vpop.permute.xlu0 %1067
        %1069 = vrot.lane.b32.xlu0 %v727, 127
        %v1070 = vpop.permute.xlu0 %1069
        %1071 = vrot.lane.b32.xlu0 %v728, 127
        %v1072 = vpop.permute.xlu0 %1071
        %1073 = vrot.lane.b32.xlu0 %v729, 127
        %v1074 = vpop.permute.xlu0 %1073
        %1075 = vrot.lane.b32.xlu0 %v730, 127
        %v1076 = vpop.permute.xlu0 %1075
        %1077 = vrot.lane.b32.xlu0 %v731, 127
        %v1078 = vpop.permute.xlu0 %1077
        %1079 = vrot.lane.b32.xlu0 %v732, 127
        %v1080 = vpop.permute.xlu0 %1079
        %1081 = vrot.lane.b32.xlu0 %v733, 127
        %v1082 = vpop.permute.xlu0 %1081
        %1083 = vrot.lane.b32.xlu0 %v734, 127
        %v1084 = vpop.permute.xlu0 %1083
        %1085 = vrot.lane.b32.xlu0 %v735, 127
        %v1086 = vpop.permute.xlu0 %1085
        %1087 = vrot.lane.b32.xlu0 %v736, 127
        %v1088 = vpop.permute.xlu0 %1087
        %v1105 = vrot.slane %v1066, 4
        %v1106 = vsel %vm738, %v1105, %v1058
        %v1107 = vrot.slane %v1058, 4
        %v1108 = vsel %vm738, %v1066, %v1107
        %v1110 = vunpack.c.l.s4 1983009808
        %v1111 = vunpack.c.0.s8 %v1110
        %v1112 = vperm.slane %v1106, %v1111
        %v1114 = vunpack.c.l.s4 1983009808
        %v1115 = vunpack.c.0.s8 %v1114
        %v1116 = vperm.slane %v1108, %v1115
        %v1117 = vrot.slane %v1070, 4
        %v1118 = vsel %vm738, %v1117, %v1062
        %v1119 = vrot.slane %v1062, 4
        %v1120 = vsel %vm738, %v1070, %v1119
        %v1122 = vunpack.c.l.s4 1983009808
        %v1123 = vunpack.c.0.s8 %v1122
        %v1124 = vperm.slane %v1118, %v1123
        %v1126 = vunpack.c.l.s4 1983009808
        %v1127 = vunpack.c.0.s8 %v1126
        %v1128 = vperm.slane %v1120, %v1127
        %v1129 = vrot.slane %v1082, 4
        %v1130 = vsel %vm738, %v1129, %v1074
        %v1131 = vrot.slane %v1074, 4
        %v1132 = vsel %vm738, %v1082, %v1131
        %v1134 = vunpack.c.l.s4 1983009808
        %v1135 = vunpack.c.0.s8 %v1134
        %v1136 = vperm.slane %v1130, %v1135
        %v1138 = vunpack.c.l.s4 1983009808
        %v1139 = vunpack.c.0.s8 %v1138
        %v1140 = vperm.slane %v1132, %v1139
        %v1141 = vrot.slane %v1086, 4
        %v1142 = vsel %vm738, %v1141, %v1078
        %v1143 = vrot.slane %v1078, 4
        %v1144 = vsel %vm738, %v1086, %v1143
        %v1146 = vunpack.c.l.s4 1983009808
        %v1147 = vunpack.c.0.s8 %v1146
        %v1148 = vperm.slane %v1142, %v1147
        %v1150 = vunpack.c.l.s4 1983009808
        %v1151 = vunpack.c.0.s8 %v1150
        %v1152 = vperm.slane %v1144, %v1151
        %v1153 = vrot.slane %v1124, 4
        %v1154 = vsel %vm738, %v1153, %v1112
        %v1155 = vrot.slane %v1112, 4
        %v1156 = vsel %vm738, %v1124, %v1155
        %v1158 = vunpack.c.l.s4 1934713408
        %v1159 = vunpack.c.0.s8 %v1158
        %v1160 = vperm.slane %v1154, %v1159
        %v1162 = vunpack.c.l.s4 1934713408
        %v1163 = vunpack.c.0.s8 %v1162
        %v1164 = vperm.slane %v1156, %v1163
        %v1165 = vrot.slane %v1128, 4
        %v1166 = vsel %vm738, %v1165, %v1116
        %v1167 = vrot.slane %v1116, 4
        %v1168 = vsel %vm738, %v1128, %v1167
        %v1170 = vunpack.c.l.s4 1934713408
        %v1171 = vunpack.c.0.s8 %v1170
        %v1172 = vperm.slane %v1166, %v1171
        %v1174 = vunpack.c.l.s4 1934713408
        %v1175 = vunpack.c.0.s8 %v1174
        %v1176 = vperm.slane %v1168, %v1175
        %v1177 = vrot.slane %v1148, 4
        %v1178 = vsel %vm738, %v1177, %v1136
        %v1179 = vrot.slane %v1136, 4
        %v1180 = vsel %vm738, %v1148, %v1179
        %v1182 = vunpack.c.l.s4 1934713408
        %v1183 = vunpack.c.0.s8 %v1182
        %v1184 = vperm.slane %v1178, %v1183
        %v1186 = vunpack.c.l.s4 1934713408
        %v1187 = vunpack.c.0.s8 %v1186
        %v1188 = vperm.slane %v1180, %v1187
        %v1189 = vrot.slane %v1152, 4
        %v1190 = vsel %vm738, %v1189, %v1140
        %v1191 = vrot.slane %v1140, 4
        %v1192 = vsel %vm738, %v1152, %v1191
        %v1194 = vunpack.c.l.s4 1934713408
        %v1195 = vunpack.c.0.s8 %v1194
        %v1196 = vperm.slane %v1190, %v1195
        %v1198 = vunpack.c.l.s4 1934713408
        %v1199 = vunpack.c.0.s8 %v1198
        %v1200 = vperm.slane %v1192, %v1199
        %v1201 = vrot.slane %v1184, 4
        %v1202 = vsel %vm738, %v1201, %v1160
        %v1203 = vrot.slane %v1160, 4
        %v1204 = vsel %vm738, %v1184, %v1203
        %v1205 = vrot.slane %v1188, 4
        %v1206 = vsel %vm738, %v1205, %v1164
        %v1207 = vrot.slane %v1164, 4
        %v1208 = vsel %vm738, %v1188, %v1207
        %v1209 = vrot.slane %v1196, 4
        %v1210 = vsel %vm738, %v1209, %v1172
        %v1211 = vrot.slane %v1172, 4
        %v1212 = vsel %vm738, %v1196, %v1211
        %v1213 = vrot.slane %v1200, 4
        %v1214 = vsel %vm738, %v1213, %v1176
        %v1215 = vrot.slane %v1176, 4
        %v1216 = vsel %vm738, %v1200, %v1215
        %v1217 = vrot.slane %v1068, 4
        %v1218 = vsel %vm738, %v1217, %v1060
        %v1219 = vrot.slane %v1060, 4
        %v1220 = vsel %vm738, %v1068, %v1219
        %v1222 = vunpack.c.l.s4 1983009808
        %v1223 = vunpack.c.0.s8 %v1222
        %v1224 = vperm.slane %v1218, %v1223
        %v1226 = vunpack.c.l.s4 1983009808
        %v1227 = vunpack.c.0.s8 %v1226
        %v1228 = vperm.slane %v1220, %v1227
        %v1229 = vrot.slane %v1072, 4
        %v1230 = vsel %vm738, %v1229, %v1064
        %v1231 = vrot.slane %v1064, 4
        %v1232 = vsel %vm738, %v1072, %v1231
        %v1234 = vunpack.c.l.s4 1983009808
        %v1235 = vunpack.c.0.s8 %v1234
        %v1236 = vperm.slane %v1230, %v1235
        %v1238 = vunpack.c.l.s4 1983009808
        %v1239 = vunpack.c.0.s8 %v1238
        %v1240 = vperm.slane %v1232, %v1239
        %v1241 = vrot.slane %v1084, 4
        %v1242 = vsel %vm738, %v1241, %v1076
        %v1243 = vrot.slane %v1076, 4
        %v1244 = vsel %vm738, %v1084, %v1243
        %v1246 = vunpack.c.l.s4 1983009808
        %v1247 = vunpack.c.0.s8 %v1246
        %v1248 = vperm.slane %v1242, %v1247
        %v1250 = vunpack.c.l.s4 1983009808
        %v1251 = vunpack.c.0.s8 %v1250
        %v1252 = vperm.slane %v1244, %v1251
        %v1253 = vrot.slane %v1088, 4
        %v1254 = vsel %vm738, %v1253, %v1080
        %v1255 = vrot.slane %v1080, 4
        %v1256 = vsel %vm738, %v1088, %v1255
        %v1258 = vunpack.c.l.s4 1983009808
        %v1259 = vunpack.c.0.s8 %v1258
        %v1260 = vperm.slane %v1254, %v1259
        %v1262 = vunpack.c.l.s4 1983009808
        %v1263 = vunpack.c.0.s8 %v1262
        %v1264 = vperm.slane %v1256, %v1263
        %v1265 = vrot.slane %v1236, 4
        %v1266 = vsel %vm738, %v1265, %v1224
        %v1267 = vrot.slane %v1224, 4
        %v1268 = vsel %vm738, %v1236, %v1267
        %v1270 = vunpack.c.l.s4 1934713408
        %v1271 = vunpack.c.0.s8 %v1270
        %v1272 = vperm.slane %v1266, %v1271
        %v1274 = vunpack.c.l.s4 1934713408
        %v1275 = vunpack.c.0.s8 %v1274
        %v1276 = vperm.slane %v1268, %v1275
        %v1277 = vrot.slane %v1240, 4
        %v1278 = vsel %vm738, %v1277, %v1228
        %v1279 = vrot.slane %v1228, 4
        %v1280 = vsel %vm738, %v1240, %v1279
        %v1282 = vunpack.c.l.s4 1934713408
        %v1283 = vunpack.c.0.s8 %v1282
        %v1284 = vperm.slane %v1278, %v1283
        %v1286 = vunpack.c.l.s4 1934713408
        %v1287 = vunpack.c.0.s8 %v1286
        %v1288 = vperm.slane %v1280, %v1287
        %v1289 = vrot.slane %v1260, 4
        %v1290 = vsel %vm738, %v1289, %v1248
        %v1291 = vrot.slane %v1248, 4
        %v1292 = vsel %vm738, %v1260, %v1291
        %v1294 = vunpack.c.l.s4 1934713408
        %v1295 = vunpack.c.0.s8 %v1294
        %v1296 = vperm.slane %v1290, %v1295
        %v1298 = vunpack.c.l.s4 1934713408
        %v1299 = vunpack.c.0.s8 %v1298
        %v1300 = vperm.slane %v1292, %v1299
        %v1301 = vrot.slane %v1264, 4
        %v1302 = vsel %vm738, %v1301, %v1252
        %v1303 = vrot.slane %v1252, 4
        %v1304 = vsel %vm738, %v1264, %v1303
        %v1306 = vunpack.c.l.s4 1934713408
        %v1307 = vunpack.c.0.s8 %v1306
        %v1308 = vperm.slane %v1302, %v1307
        %v1310 = vunpack.c.l.s4 1934713408
        %v1311 = vunpack.c.0.s8 %v1310
        %v1312 = vperm.slane %v1304, %v1311
        %v1313 = vrot.slane %v1296, 4
        %v1314 = vsel %vm738, %v1313, %v1272
        %v1315 = vrot.slane %v1272, 4
        %v1316 = vsel %vm738, %v1296, %v1315
        %v1317 = vrot.slane %v1300, 4
        %v1318 = vsel %vm738, %v1317, %v1276
        %v1319 = vrot.slane %v1276, 4
        %v1320 = vsel %vm738, %v1300, %v1319
        %v1321 = vrot.slane %v1308, 4
        %v1322 = vsel %vm738, %v1321, %v1284
        %v1323 = vrot.slane %v1284, 4
        %v1324 = vsel %vm738, %v1308, %v1323
        %v1325 = vrot.slane %v1312, 4
        %v1326 = vsel %vm738, %v1325, %v1288
        %v1327 = vrot.slane %v1288, 4
        %v1328 = vsel %vm738, %v1312, %v1327
        %1330 = vrot.lane.b32.xlu0 %v1204, 16
        %v1331 = vpop.permute.xlu0 %1330
        %1334 = vrot.lane.b32.xlu0 %v1206, 32
        %v1335 = vpop.permute.xlu0 %1334
        %1338 = vrot.lane.b32.xlu0 %v1208, 48
        %v1339 = vpop.permute.xlu0 %1338
        %1342 = vrot.lane.b32.xlu0 %v1210, 64
        %v1343 = vpop.permute.xlu0 %1342
        %1346 = vrot.lane.b32.xlu0 %v1212, 80
        %v1347 = vpop.permute.xlu0 %1346
        %1350 = vrot.lane.b32.xlu0 %v1214, 96
        %v1351 = vpop.permute.xlu0 %1350
        %1354 = vrot.lane.b32.xlu0 %v1216, 112
        %v1355 = vpop.permute.xlu0 %1354
        %1358 = vrot.lane.b32.xlu0 %v1316, 16
        %v1359 = vpop.permute.xlu0 %1358
        %1362 = vrot.lane.b32.xlu0 %v1318, 32
        %v1363 = vpop.permute.xlu0 %1362
        %1366 = vrot.lane.b32.xlu0 %v1320, 48
        %v1367 = vpop.permute.xlu0 %1366
        %1370 = vrot.lane.b32.xlu0 %v1322, 64
        %v1371 = vpop.permute.xlu0 %1370
        %1374 = vrot.lane.b32.xlu0 %v1324, 80
        %v1375 = vpop.permute.xlu0 %1374
        %1378 = vrot.lane.b32.xlu0 %v1326, 96
        %v1379 = vpop.permute.xlu0 %1378
        %1382 = vrot.lane.b32.xlu0 %v1328, 112
        %v1383 = vpop.permute.xlu0 %1382
        %v1385 = vsel %vm1018, %v1202, %v1331
        %v1386 = vsel %vm1020, %v1385, %v1335
        %v1387 = vsel %vm1022, %v1386, %v1339
        %v1388 = vsel %vm1024, %v1387, %v1343
        %v1389 = vsel %vm1026, %v1388, %v1347
        %v1390 = vsel %vm1028, %v1389, %v1351
        %v1391 = vsel %vm1030, %v1390, %v1355
        %v1392 = vsel %vm1018, %v1314, %v1359
        %v1393 = vsel %vm1020, %v1392, %v1363
        %v1394 = vsel %vm1022, %v1393, %v1367
        %v1395 = vsel %vm1024, %v1394, %v1371
        %v1396 = vsel %vm1026, %v1395, %v1375
        %v1397 = vsel %vm1028, %v1396, %v1379
        %v1398 = vsel %vm1030, %v1397, %v1383
        %1399 = vst [vmem:[#allocation4 + $0x10] sm:$0xff] %v1391
        %1400 = vst [vmem:[#allocation4 + $0x18] sm:$0xff] %v1398
        %1401 = vrot.lane.b32.xlu0 %v721, 126
        %v1402 = vpop.permute.xlu0 %1401
        %1403 = vrot.lane.b32.xlu0 %v722, 126
        %v1404 = vpop.permute.xlu0 %1403
        %1405 = vrot.lane.b32.xlu0 %v723, 126
        %v1406 = vpop.permute.xlu0 %1405
        %1407 = vrot.lane.b32.xlu0 %v724, 126
        %v1408 = vpop.permute.xlu0 %1407
        %1409 = vrot.lane.b32.xlu0 %v725, 126
        %v1410 = vpop.permute.xlu0 %1409
        %1411 = vrot.lane.b32.xlu0 %v726, 126
        %v1412 = vpop.permute.xlu0 %1411
        %1413 = vrot.lane.b32.xlu0 %v727, 126
        %v1414 = vpop.permute.xlu0 %1413
        %1415 = vrot.lane.b32.xlu0 %v728, 126
        %v1416 = vpop.permute.xlu0 %1415
        %1417 = vrot.lane.b32.xlu0 %v729, 126
        %v1418 = vpop.permute.xlu0 %1417
        %1419 = vrot.lane.b32.xlu0 %v730, 126
        %v1420 = vpop.permute.xlu0 %1419
        %1421 = vrot.lane.b32.xlu0 %v731, 126
        %v1422 = vpop.permute.xlu0 %1421
        %1423 = vrot.lane.b32.xlu0 %v732, 126
        %v1424 = vpop.permute.xlu0 %1423
        %1425 = vrot.lane.b32.xlu0 %v733, 126
        %v1426 = vpop.permute.xlu0 %1425
        %1427 = vrot.lane.b32.xlu0 %v734, 126
        %v1428 = vpop.permute.xlu0 %1427
        %1429 = vrot.lane.b32.xlu0 %v735, 126
        %v1430 = vpop.permute.xlu0 %1429
        %1431 = vrot.lane.b32.xlu0 %v736, 126
        %v1432 = vpop.permute.xlu0 %1431
        %v1449 = vrot.slane %v1410, 4
        %v1450 = vsel %vm738, %v1449, %v1402
        %v1451 = vrot.slane %v1402, 4
        %v1452 = vsel %vm738, %v1410, %v1451
        %v1454 = vunpack.c.l.s4 1983009808
        %v1455 = vunpack.c.0.s8 %v1454
        %v1456 = vperm.slane %v1450, %v1455
        %v1458 = vunpack.c.l.s4 1983009808
        %v1459 = vunpack.c.0.s8 %v1458
        %v1460 = vperm.slane %v1452, %v1459
        %v1461 = vrot.slane %v1414, 4
        %v1462 = vsel %vm738, %v1461, %v1406
        %v1463 = vrot.slane %v1406, 4
        %v1464 = vsel %vm738, %v1414, %v1463
        %v1466 = vunpack.c.l.s4 1983009808
        %v1467 = vunpack.c.0.s8 %v1466
        %v1468 = vperm.slane %v1462, %v1467
        %v1470 = vunpack.c.l.s4 1983009808
        %v1471 = vunpack.c.0.s8 %v1470
        %v1472 = vperm.slane %v1464, %v1471
        %v1473 = vrot.slane %v1426, 4
        %v1474 = vsel %vm738, %v1473, %v1418
        %v1475 = vrot.slane %v1418, 4
        %v1476 = vsel %vm738, %v1426, %v1475
        %v1478 = vunpack.c.l.s4 1983009808
        %v1479 = vunpack.c.0.s8 %v1478
        %v1480 = vperm.slane %v1474, %v1479
        %v1482 = vunpack.c.l.s4 1983009808
        %v1483 = vunpack.c.0.s8 %v1482
        %v1484 = vperm.slane %v1476, %v1483
        %v1485 = vrot.slane %v1430, 4
        %v1486 = vsel %vm738, %v1485, %v1422
        %v1487 = vrot.slane %v1422, 4
        %v1488 = vsel %vm738, %v1430, %v1487
        %v1490 = vunpack.c.l.s4 1983009808
        %v1491 = vunpack.c.0.s8 %v1490
        %v1492 = vperm.slane %v1486, %v1491
        %v1494 = vunpack.c.l.s4 1983009808
        %v1495 = vunpack.c.0.s8 %v1494
        %v1496 = vperm.slane %v1488, %v1495
        %v1497 = vrot.slane %v1468, 4
        %v1498 = vsel %vm738, %v1497, %v1456
        %v1499 = vrot.slane %v1456, 4
        %v1500 = vsel %vm738, %v1468, %v1499
        %v1502 = vunpack.c.l.s4 1934713408
        %v1503 = vunpack.c.0.s8 %v1502
        %v1504 = vperm.slane %v1498, %v1503
        %v1506 = vunpack.c.l.s4 1934713408
        %v1507 = vunpack.c.0.s8 %v1506
        %v1508 = vperm.slane %v1500, %v1507
        %v1509 = vrot.slane %v1472, 4
        %v1510 = vsel %vm738, %v1509, %v1460
        %v1511 = vrot.slane %v1460, 4
        %v1512 = vsel %vm738, %v1472, %v1511
        %v1514 = vunpack.c.l.s4 1934713408
        %v1515 = vunpack.c.0.s8 %v1514
        %v1516 = vperm.slane %v1510, %v1515
        %v1518 = vunpack.c.l.s4 1934713408
        %v1519 = vunpack.c.0.s8 %v1518
        %v1520 = vperm.slane %v1512, %v1519
        %v1521 = vrot.slane %v1492, 4
        %v1522 = vsel %vm738, %v1521, %v1480
        %v1523 = vrot.slane %v1480, 4
        %v1524 = vsel %vm738, %v1492, %v1523
        %v1526 = vunpack.c.l.s4 1934713408
        %v1527 = vunpack.c.0.s8 %v1526
        %v1528 = vperm.slane %v1522, %v1527
        %v1530 = vunpack.c.l.s4 1934713408
        %v1531 = vunpack.c.0.s8 %v1530
        %v1532 = vperm.slane %v1524, %v1531
        %v1533 = vrot.slane %v1496, 4
        %v1534 = vsel %vm738, %v1533, %v1484
        %v1535 = vrot.slane %v1484, 4
        %v1536 = vsel %vm738, %v1496, %v1535
        %v1538 = vunpack.c.l.s4 1934713408
        %v1539 = vunpack.c.0.s8 %v1538
        %v1540 = vperm.slane %v1534, %v1539
        %v1542 = vunpack.c.l.s4 1934713408
        %v1543 = vunpack.c.0.s8 %v1542
        %v1544 = vperm.slane %v1536, %v1543
        %v1545 = vrot.slane %v1528, 4
        %v1546 = vsel %vm738, %v1545, %v1504
        %v1547 = vrot.slane %v1504, 4
        %v1548 = vsel %vm738, %v1528, %v1547
        %v1549 = vrot.slane %v1532, 4
        %v1550 = vsel %vm738, %v1549, %v1508
        %v1551 = vrot.slane %v1508, 4
        %v1552 = vsel %vm738, %v1532, %v1551
        %v1553 = vrot.slane %v1540, 4
        %v1554 = vsel %vm738, %v1553, %v1516
        %v1555 = vrot.slane %v1516, 4
        %v1556 = vsel %vm738, %v1540, %v1555
        %v1557 = vrot.slane %v1544, 4
        %v1558 = vsel %vm738, %v1557, %v1520
        %v1559 = vrot.slane %v1520, 4
        %v1560 = vsel %vm738, %v1544, %v1559
        %v1561 = vrot.slane %v1412, 4
        %v1562 = vsel %vm738, %v1561, %v1404
        %v1563 = vrot.slane %v1404, 4
        %v1564 = vsel %vm738, %v1412, %v1563
        %v1566 = vunpack.c.l.s4 1983009808
        %v1567 = vunpack.c.0.s8 %v1566
        %v1568 = vperm.slane %v1562, %v1567
        %v1570 = vunpack.c.l.s4 1983009808
        %v1571 = vunpack.c.0.s8 %v1570
        %v1572 = vperm.slane %v1564, %v1571
        %v1573 = vrot.slane %v1416, 4
        %v1574 = vsel %vm738, %v1573, %v1408
        %v1575 = vrot.slane %v1408, 4
        %v1576 = vsel %vm738, %v1416, %v1575
        %v1578 = vunpack.c.l.s4 1983009808
        %v1579 = vunpack.c.0.s8 %v1578
        %v1580 = vperm.slane %v1574, %v1579
        %v1582 = vunpack.c.l.s4 1983009808
        %v1583 = vunpack.c.0.s8 %v1582
        %v1584 = vperm.slane %v1576, %v1583
        %v1585 = vrot.slane %v1428, 4
        %v1586 = vsel %vm738, %v1585, %v1420
        %v1587 = vrot.slane %v1420, 4
        %v1588 = vsel %vm738, %v1428, %v1587
        %v1590 = vunpack.c.l.s4 1983009808
        %v1591 = vunpack.c.0.s8 %v1590
        %v1592 = vperm.slane %v1586, %v1591
        %v1594 = vunpack.c.l.s4 1983009808
        %v1595 = vunpack.c.0.s8 %v1594
        %v1596 = vperm.slane %v1588, %v1595
        %v1597 = vrot.slane %v1432, 4
        %v1598 = vsel %vm738, %v1597, %v1424
        %v1599 = vrot.slane %v1424, 4
        %v1600 = vsel %vm738, %v1432, %v1599
        %v1602 = vunpack.c.l.s4 1983009808
        %v1603 = vunpack.c.0.s8 %v1602
        %v1604 = vperm.slane %v1598, %v1603
        %v1606 = vunpack.c.l.s4 1983009808
        %v1607 = vunpack.c.0.s8 %v1606
        %v1608 = vperm.slane %v1600, %v1607
        %v1609 = vrot.slane %v1580, 4
        %v1610 = vsel %vm738, %v1609, %v1568
        %v1611 = vrot.slane %v1568, 4
        %v1612 = vsel %vm738, %v1580, %v1611
        %v1614 = vunpack.c.l.s4 1934713408
        %v1615 = vunpack.c.0.s8 %v1614
        %v1616 = vperm.slane %v1610, %v1615
        %v1618 = vunpack.c.l.s4 1934713408
        %v1619 = vunpack.c.0.s8 %v1618
        %v1620 = vperm.slane %v1612, %v1619
        %v1621 = vrot.slane %v1584, 4
        %v1622 = vsel %vm738, %v1621, %v1572
        %v1623 = vrot.slane %v1572, 4
        %v1624 = vsel %vm738, %v1584, %v1623
        %v1626 = vunpack.c.l.s4 1934713408
        %v1627 = vunpack.c.0.s8 %v1626
        %v1628 = vperm.slane %v1622, %v1627
        %v1630 = vunpack.c.l.s4 1934713408
        %v1631 = vunpack.c.0.s8 %v1630
        %v1632 = vperm.slane %v1624, %v1631
        %v1633 = vrot.slane %v1604, 4
        %v1634 = vsel %vm738, %v1633, %v1592
        %v1635 = vrot.slane %v1592, 4
        %v1636 = vsel %vm738, %v1604, %v1635
        %v1638 = vunpack.c.l.s4 1934713408
        %v1639 = vunpack.c.0.s8 %v1638
        %v1640 = vperm.slane %v1634, %v1639
        %v1642 = vunpack.c.l.s4 1934713408
        %v1643 = vunpack.c.0.s8 %v1642
        %v1644 = vperm.slane %v1636, %v1643
        %v1645 = vrot.slane %v1608, 4
        %v1646 = vsel %vm738, %v1645, %v1596
        %v1647 = vrot.slane %v1596, 4
        %v1648 = vsel %vm738, %v1608, %v1647
        %v1650 = vunpack.c.l.s4 1934713408
        %v1651 = vunpack.c.0.s8 %v1650
        %v1652 = vperm.slane %v1646, %v1651
        %v1654 = vunpack.c.l.s4 1934713408
        %v1655 = vunpack.c.0.s8 %v1654
        %v1656 = vperm.slane %v1648, %v1655
        %v1657 = vrot.slane %v1640, 4
        %v1658 = vsel %vm738, %v1657, %v1616
        %v1659 = vrot.slane %v1616, 4
        %v1660 = vsel %vm738, %v1640, %v1659
        %v1661 = vrot.slane %v1644, 4
        %v1662 = vsel %vm738, %v1661, %v1620
        %v1663 = vrot.slane %v1620, 4
        %v1664 = vsel %vm738, %v1644, %v1663
        %v1665 = vrot.slane %v1652, 4
        %v1666 = vsel %vm738, %v1665, %v1628
        %v1667 = vrot.slane %v1628, 4
        %v1668 = vsel %vm738, %v1652, %v1667
        %v1669 = vrot.slane %v1656, 4
        %v1670 = vsel %vm738, %v1669, %v1632
        %v1671 = vrot.slane %v1632, 4
        %v1672 = vsel %vm738, %v1656, %v1671
        %1674 = vrot.lane.b32.xlu0 %v1548, 16
        %v1675 = vpop.permute.xlu0 %1674
        %1678 = vrot.lane.b32.xlu0 %v1550, 32
        %v1679 = vpop.permute.xlu0 %1678
        %1682 = vrot.lane.b32.xlu0 %v1552, 48
        %v1683 = vpop.permute.xlu0 %1682
        %1686 = vrot.lane.b32.xlu0 %v1554, 64
        %v1687 = vpop.permute.xlu0 %1686
        %1690 = vrot.lane.b32.xlu0 %v1556, 80
        %v1691 = vpop.permute.xlu0 %1690
        %1694 = vrot.lane.b32.xlu0 %v1558, 96
        %v1695 = vpop.permute.xlu0 %1694
        %1698 = vrot.lane.b32.xlu0 %v1560, 112
        %v1699 = vpop.permute.xlu0 %1698
        %1702 = vrot.lane.b32.xlu0 %v1660, 16
        %v1703 = vpop.permute.xlu0 %1702
        %1706 = vrot.lane.b32.xlu0 %v1662, 32
        %v1707 = vpop.permute.xlu0 %1706
        %1710 = vrot.lane.b32.xlu0 %v1664, 48
        %v1711 = vpop.permute.xlu0 %1710
        %1714 = vrot.lane.b32.xlu0 %v1666, 64
        %v1715 = vpop.permute.xlu0 %1714
        %1718 = vrot.lane.b32.xlu0 %v1668, 80
        %v1719 = vpop.permute.xlu0 %1718
        %1722 = vrot.lane.b32.xlu0 %v1670, 96
        %v1723 = vpop.permute.xlu0 %1722
        %1726 = vrot.lane.b32.xlu0 %v1672, 112
        %v1727 = vpop.permute.xlu0 %1726
        %v1729 = vsel %vm1018, %v1546, %v1675
        %v1730 = vsel %vm1020, %v1729, %v1679
        %v1731 = vsel %vm1022, %v1730, %v1683
        %v1732 = vsel %vm1024, %v1731, %v1687
        %v1733 = vsel %vm1026, %v1732, %v1691
        %v1734 = vsel %vm1028, %v1733, %v1695
        %v1735 = vsel %vm1030, %v1734, %v1699
        %v1736 = vsel %vm1018, %v1658, %v1703
        %v1737 = vsel %vm1020, %v1736, %v1707
        %v1738 = vsel %vm1022, %v1737, %v1711
        %v1739 = vsel %vm1024, %v1738, %v1715
        %v1740 = vsel %vm1026, %v1739, %v1719
        %v1741 = vsel %vm1028, %v1740, %v1723
        %v1742 = vsel %vm1030, %v1741, %v1727
        %1743 = vst [vmem:[#allocation4 + $0x20] sm:$0xff] %v1735
        %1744 = vst [vmem:[#allocation4 + $0x28] sm:$0xff] %v1742
        %v1745 = vld [vmem:[%s4] sm:$0xf]
        %v1746 = vld [vmem:[#allocation4] sm:$0xff]
        %v1747 = vld [vmem:[#allocation4 + $0x8] sm:$0xff]
        %v1748 = vld [vmem:[#allocation4 + $0x10] sm:$0xff]
        %v1749 = vld [vmem:[#allocation4 + $0x18] sm:$0xff]
        %v1750 = vld [vmem:[#allocation4 + $0x20] sm:$0xff]
        %v1751 = vld [vmem:[#allocation4 + $0x28] sm:$0xff]
        %v1752 = vld [vmem:[#allocation2 + $0x1] sm:$0xff]
        %v1753 = vld [vmem:[#allocation2 + $0x9] sm:$0xff]
        %v1754 = vld [vmem:[#allocation2 + $0x19] sm:$0xff]
        %v1755 = vld [vmem:[#allocation2 + $0x21] sm:$0xff]
        %v1756 = vld [vmem:[#allocation2 + $0x31] sm:$0xff]
        %v1757 = vld [vmem:[#allocation2 + $0x39] sm:$0xff]
        %v1758 = vld [vmem:[#allocation2 + $0x49] sm:$0xff]
        %v1759 = vld [vmem:[#allocation2 + $0x51] sm:$0xff]
        %v1760 = vld [vmem:[#allocation2 + $0x61] sm:$0xff]
        %v1761 = vld [vmem:[#allocation2 + $0x69] sm:$0xff]
        %v1762 = vld [vmem:[#allocation2 + $0x79] sm:$0xff]
        %v1763 = vld [vmem:[#allocation2 + $0x81] sm:$0xff]
        %v1764 = vld [vmem:[#allocation2 + $0x91] sm:$0xff]
        %v1765 = vld [vmem:[#allocation2 + $0x99] sm:$0xff]
        %v1766 = vld [vmem:[#allocation2 + $0xa9] sm:$0xff]
        %v1767 = vld [vmem:[#allocation2 + $0xb1] sm:$0xff]
        %v1768 = vrot.slane %v1756, 4
        %v1769 = vsel %vm738, %v1768, %v1752
        %v1770 = vrot.slane %v1752, 4
        %v1771 = vsel %vm738, %v1756, %v1770
        %v1773 = vunpack.c.l.s4 1983009808
        %v1774 = vunpack.c.0.s8 %v1773
        %v1775 = vperm.slane %v1769, %v1774
        %v1777 = vunpack.c.l.s4 1983009808
        %v1778 = vunpack.c.0.s8 %v1777
        %v1779 = vperm.slane %v1771, %v1778
        %v1780 = vrot.slane %v1758, 4
        %v1781 = vsel %vm738, %v1780, %v1754
        %v1782 = vrot.slane %v1754, 4
        %v1783 = vsel %vm738, %v1758, %v1782
        %v1785 = vunpack.c.l.s4 1983009808
        %v1786 = vunpack.c.0.s8 %v1785
        %v1787 = vperm.slane %v1781, %v1786
        %v1789 = vunpack.c.l.s4 1983009808
        %v1790 = vunpack.c.0.s8 %v1789
        %v1791 = vperm.slane %v1783, %v1790
        %v1792 = vrot.slane %v1764, 4
        %v1793 = vsel %vm738, %v1792, %v1760
        %v1794 = vrot.slane %v1760, 4
        %v1795 = vsel %vm738, %v1764, %v1794
        %v1797 = vunpack.c.l.s4 1983009808
        %v1798 = vunpack.c.0.s8 %v1797
        %v1799 = vperm.slane %v1793, %v1798
        %v1801 = vunpack.c.l.s4 1983009808
        %v1802 = vunpack.c.0.s8 %v1801
        %v1803 = vperm.slane %v1795, %v1802
        %v1804 = vrot.slane %v1766, 4
        %v1805 = vsel %vm738, %v1804, %v1762
        %v1806 = vrot.slane %v1762, 4
        %v1807 = vsel %vm738, %v1766, %v1806
        %v1809 = vunpack.c.l.s4 1983009808
        %v1810 = vunpack.c.0.s8 %v1809
        %v1811 = vperm.slane %v1805, %v1810
        %v1813 = vunpack.c.l.s4 1983009808
        %v1814 = vunpack.c.0.s8 %v1813
        %v1815 = vperm.slane %v1807, %v1814
        %v1816 = vrot.slane %v1787, 4
        %v1817 = vsel %vm738, %v1816, %v1775
        %v1818 = vrot.slane %v1775, 4
        %v1819 = vsel %vm738, %v1787, %v1818
        %v1821 = vunpack.c.l.s4 1934713408
        %v1822 = vunpack.c.0.s8 %v1821
        %v1823 = vperm.slane %v1817, %v1822
        %v1825 = vunpack.c.l.s4 1934713408
        %v1826 = vunpack.c.0.s8 %v1825
        %v1827 = vperm.slane %v1819, %v1826
        %v1828 = vrot.slane %v1791, 4
        %v1829 = vsel %vm738, %v1828, %v1779
        %v1830 = vrot.slane %v1779, 4
        %v1831 = vsel %vm738, %v1791, %v1830
        %v1833 = vunpack.c.l.s4 1934713408
        %v1834 = vunpack.c.0.s8 %v1833
        %v1835 = vperm.slane %v1829, %v1834
        %v1837 = vunpack.c.l.s4 1934713408
        %v1838 = vunpack.c.0.s8 %v1837
        %v1839 = vperm.slane %v1831, %v1838
        %v1840 = vrot.slane %v1811, 4
        %v1841 = vsel %vm738, %v1840, %v1799
        %v1842 = vrot.slane %v1799, 4
        %v1843 = vsel %vm738, %v1811, %v1842
        %v1845 = vunpack.c.l.s4 1934713408
        %v1846 = vunpack.c.0.s8 %v1845
        %v1847 = vperm.slane %v1841, %v1846
        %v1849 = vunpack.c.l.s4 1934713408
        %v1850 = vunpack.c.0.s8 %v1849
        %v1851 = vperm.slane %v1843, %v1850
        %v1852 = vrot.slane %v1815, 4
        %v1853 = vsel %vm738, %v1852, %v1803
        %v1854 = vrot.slane %v1803, 4
        %v1855 = vsel %vm738, %v1815, %v1854
        %v1857 = vunpack.c.l.s4 1934713408
        %v1858 = vunpack.c.0.s8 %v1857
        %v1859 = vperm.slane %v1853, %v1858
        %v1861 = vunpack.c.l.s4 1934713408
        %v1862 = vunpack.c.0.s8 %v1861
        %v1863 = vperm.slane %v1855, %v1862
        %v1864 = vrot.slane %v1847, 4
        %v1865 = vsel %vm738, %v1864, %v1823
        %v1866 = vrot.slane %v1823, 4
        %v1867 = vsel %vm738, %v1847, %v1866
        %v1868 = vrot.slane %v1851, 4
        %v1869 = vsel %vm738, %v1868, %v1827
        %v1870 = vrot.slane %v1827, 4
        %v1871 = vsel %vm738, %v1851, %v1870
        %v1872 = vrot.slane %v1859, 4
        %v1873 = vsel %vm738, %v1872, %v1835
        %v1874 = vrot.slane %v1835, 4
        %v1875 = vsel %vm738, %v1859, %v1874
        %v1876 = vrot.slane %v1863, 4
        %v1877 = vsel %vm738, %v1876, %v1839
        %v1878 = vrot.slane %v1839, 4
        %v1879 = vsel %vm738, %v1863, %v1878
        %v1880 = vrot.slane %v1757, 4
        %v1881 = vsel %vm738, %v1880, %v1753
        %v1882 = vrot.slane %v1753, 4
        %v1883 = vsel %vm738, %v1757, %v1882
        %v1885 = vunpack.c.l.s4 1983009808
        %v1886 = vunpack.c.0.s8 %v1885
        %v1887 = vperm.slane %v1881, %v1886
        %v1889 = vunpack.c.l.s4 1983009808
        %v1890 = vunpack.c.0.s8 %v1889
        %v1891 = vperm.slane %v1883, %v1890
        %v1892 = vrot.slane %v1759, 4
        %v1893 = vsel %vm738, %v1892, %v1755
        %v1894 = vrot.slane %v1755, 4
        %v1895 = vsel %vm738, %v1759, %v1894
        %v1897 = vunpack.c.l.s4 1983009808
        %v1898 = vunpack.c.0.s8 %v1897
        %v1899 = vperm.slane %v1893, %v1898
        %v1901 = vunpack.c.l.s4 1983009808
        %v1902 = vunpack.c.0.s8 %v1901
        %v1903 = vperm.slane %v1895, %v1902
        %v1904 = vrot.slane %v1765, 4
        %v1905 = vsel %vm738, %v1904, %v1761
        %v1906 = vrot.slane %v1761, 4
        %v1907 = vsel %vm738, %v1765, %v1906
        %v1909 = vunpack.c.l.s4 1983009808
        %v1910 = vunpack.c.0.s8 %v1909
        %v1911 = vperm.slane %v1905, %v1910
        %v1913 = vunpack.c.l.s4 1983009808
        %v1914 = vunpack.c.0.s8 %v1913
        %v1915 = vperm.slane %v1907, %v1914
        %v1916 = vrot.slane %v1767, 4
        %v1917 = vsel %vm738, %v1916, %v1763
        %v1918 = vrot.slane %v1763, 4
        %v1919 = vsel %vm738, %v1767, %v1918
        %v1921 = vunpack.c.l.s4 1983009808
        %v1922 = vunpack.c.0.s8 %v1921
        %v1923 = vperm.slane %v1917, %v1922
        %v1925 = vunpack.c.l.s4 1983009808
        %v1926 = vunpack.c.0.s8 %v1925
        %v1927 = vperm.slane %v1919, %v1926
        %v1928 = vrot.slane %v1899, 4
        %v1929 = vsel %vm738, %v1928, %v1887
        %v1930 = vrot.slane %v1887, 4
        %v1931 = vsel %vm738, %v1899, %v1930
        %v1933 = vunpack.c.l.s4 1934713408
        %v1934 = vunpack.c.0.s8 %v1933
        %v1935 = vperm.slane %v1929, %v1934
        %v1937 = vunpack.c.l.s4 1934713408
        %v1938 = vunpack.c.0.s8 %v1937
        %v1939 = vperm.slane %v1931, %v1938
        %v1940 = vrot.slane %v1903, 4
        %v1941 = vsel %vm738, %v1940, %v1891
        %v1942 = vrot.slane %v1891, 4
        %v1943 = vsel %vm738, %v1903, %v1942
        %v1945 = vunpack.c.l.s4 1934713408
        %v1946 = vunpack.c.0.s8 %v1945
        %v1947 = vperm.slane %v1941, %v1946
        %v1949 = vunpack.c.l.s4 1934713408
        %v1950 = vunpack.c.0.s8 %v1949
        %v1951 = vperm.slane %v1943, %v1950
        %v1952 = vrot.slane %v1923, 4
        %v1953 = vsel %vm738, %v1952, %v1911
        %v1954 = vrot.slane %v1911, 4
        %v1955 = vsel %vm738, %v1923, %v1954
        %v1957 = vunpack.c.l.s4 1934713408
        %v1958 = vunpack.c.0.s8 %v1957
        %v1959 = vperm.slane %v1953, %v1958
        %v1961 = vunpack.c.l.s4 1934713408
        %v1962 = vunpack.c.0.s8 %v1961
        %v1963 = vperm.slane %v1955, %v1962
        %v1964 = vrot.slane %v1927, 4
        %v1965 = vsel %vm738, %v1964, %v1915
        %v1966 = vrot.slane %v1915, 4
        %v1967 = vsel %vm738, %v1927, %v1966
        %v1969 = vunpack.c.l.s4 1934713408
        %v1970 = vunpack.c.0.s8 %v1969
        %v1971 = vperm.slane %v1965, %v1970
        %v1973 = vunpack.c.l.s4 1934713408
        %v1974 = vunpack.c.0.s8 %v1973
        %v1975 = vperm.slane %v1967, %v1974
        %v1976 = vrot.slane %v1959, 4
        %v1977 = vsel %vm738, %v1976, %v1935
        %v1978 = vrot.slane %v1935, 4
        %v1979 = vsel %vm738, %v1959, %v1978
        %v1980 = vrot.slane %v1963, 4
        %v1981 = vsel %vm738, %v1980, %v1939
        %v1982 = vrot.slane %v1939, 4
        %v1983 = vsel %vm738, %v1963, %v1982
        %v1984 = vrot.slane %v1971, 4
        %v1985 = vsel %vm738, %v1984, %v1947
        %v1986 = vrot.slane %v1947, 4
        %v1987 = vsel %vm738, %v1971, %v1986
        %v1988 = vrot.slane %v1975, 4
        %v1989 = vsel %vm738, %v1988, %v1951
        %v1990 = vrot.slane %v1951, 4
        %v1991 = vsel %vm738, %v1975, %v1990
        %1993 = vrot.lane.b32.xlu0 %v1867, 16
        %v1994 = vpop.permute.xlu0 %1993
        %1997 = vrot.lane.b32.xlu0 %v1869, 32
        %v1998 = vpop.permute.xlu0 %1997
        %2001 = vrot.lane.b32.xlu0 %v1871, 48
        %v2002 = vpop.permute.xlu0 %2001
        %2005 = vrot.lane.b32.xlu0 %v1873, 64
        %v2006 = vpop.permute.xlu0 %2005
        %2009 = vrot.lane.b32.xlu0 %v1875, 80
        %v2010 = vpop.permute.xlu0 %2009
        %2013 = vrot.lane.b32.xlu0 %v1877, 96
        %v2014 = vpop.permute.xlu0 %2013
        %2017 = vrot.lane.b32.xlu0 %v1879, 112
        %v2018 = vpop.permute.xlu0 %2017
        %2021 = vrot.lane.b32.xlu0 %v1979, 16
        %v2022 = vpop.permute.xlu0 %2021
        %2025 = vrot.lane.b32.xlu0 %v1981, 32
        %v2026 = vpop.permute.xlu0 %2025
        %2029 = vrot.lane.b32.xlu0 %v1983, 48
        %v2030 = vpop.permute.xlu0 %2029
        %2033 = vrot.lane.b32.xlu0 %v1985, 64
        %v2034 = vpop.permute.xlu0 %2033
        %2037 = vrot.lane.b32.xlu0 %v1987, 80
        %v2038 = vpop.permute.xlu0 %2037
        %2041 = vrot.lane.b32.xlu0 %v1989, 96
        %v2042 = vpop.permute.xlu0 %2041
        %2045 = vrot.lane.b32.xlu0 %v1991, 112
        %v2046 = vpop.permute.xlu0 %2045
        %v2048 = vsel %vm1018, %v1865, %v1994
        %v2049 = vsel %vm1020, %v2048, %v1998
        %v2050 = vsel %vm1022, %v2049, %v2002
        %v2051 = vsel %vm1024, %v2050, %v2006
        %v2052 = vsel %vm1026, %v2051, %v2010
        %v2053 = vsel %vm1028, %v2052, %v2014
        %v2054 = vsel %vm1030, %v2053, %v2018
        %v2055 = vsel %vm1018, %v1977, %v2022
        %v2056 = vsel %vm1020, %v2055, %v2026
        %v2057 = vsel %vm1022, %v2056, %v2030
        %v2058 = vsel %vm1024, %v2057, %v2034
        %v2059 = vsel %vm1026, %v2058, %v2038
        %v2060 = vsel %vm1028, %v2059, %v2042
        %v2061 = vsel %vm1030, %v2060, %v2046
        %2062 = vst [vmem:[#allocation4] sm:$0xff] %v2054
        %2063 = vst [vmem:[#allocation4 + $0x8] sm:$0xff] %v2061
        %2080 = vrot.lane.b32.xlu0 %v1752, 127
        %v2081 = vpop.permute.xlu0 %2080
        %2082 = vrot.lane.b32.xlu0 %v1753, 127
        %v2083 = vpop.permute.xlu0 %2082
        %2084 = vrot.lane.b32.xlu0 %v1754, 127
        %v2085 = vpop.permute.xlu0 %2084
        %2086 = vrot.lane.b32.xlu0 %v1755, 127
        %v2087 = vpop.permute.xlu0 %2086
        %2088 = vrot.lane.b32.xlu0 %v1756, 127
        %v2089 = vpop.permute.xlu0 %2088
        %2090 = vrot.lane.b32.xlu0 %v1757, 127
        %v2091 = vpop.permute.xlu0 %2090
        %2092 = vrot.lane.b32.xlu0 %v1758, 127
        %v2093 = vpop.permute.xlu0 %2092
        %2094 = vrot.lane.b32.xlu0 %v1759, 127
        %v2095 = vpop.permute.xlu0 %2094
        %2096 = vrot.lane.b32.xlu0 %v1760, 127
        %v2097 = vpop.permute.xlu0 %2096
        %2098 = vrot.lane.b32.xlu0 %v1761, 127
        %v2099 = vpop.permute.xlu0 %2098
        %2100 = vrot.lane.b32.xlu0 %v1762, 127
        %v2101 = vpop.permute.xlu0 %2100
        %2102 = vrot.lane.b32.xlu0 %v1763, 127
        %v2103 = vpop.permute.xlu0 %2102
        %2104 = vrot.lane.b32.xlu0 %v1764, 127
        %v2105 = vpop.permute.xlu0 %2104
        %2106 = vrot.lane.b32.xlu0 %v1765, 127
        %v2107 = vpop.permute.xlu0 %2106
        %2108 = vrot.lane.b32.xlu0 %v1766, 127
        %v2109 = vpop.permute.xlu0 %2108
        %2110 = vrot.lane.b32.xlu0 %v1767, 127
        %v2111 = vpop.permute.xlu0 %2110
        %v2128 = vrot.slane %v2089, 4
        %v2129 = vsel %vm738, %v2128, %v2081
        %v2130 = vrot.slane %v2081, 4
        %v2131 = vsel %vm738, %v2089, %v2130
        %v2133 = vunpack.c.l.s4 1983009808
        %v2134 = vunpack.c.0.s8 %v2133
        %v2135 = vperm.slane %v2129, %v2134
        %v2137 = vunpack.c.l.s4 1983009808
        %v2138 = vunpack.c.0.s8 %v2137
        %v2139 = vperm.slane %v2131, %v2138
        %v2140 = vrot.slane %v2093, 4
        %v2141 = vsel %vm738, %v2140, %v2085
        %v2142 = vrot.slane %v2085, 4
        %v2143 = vsel %vm738, %v2093, %v2142
        %v2145 = vunpack.c.l.s4 1983009808
        %v2146 = vunpack.c.0.s8 %v2145
        %v2147 = vperm.slane %v2141, %v2146
        %v2149 = vunpack.c.l.s4 1983009808
        %v2150 = vunpack.c.0.s8 %v2149
        %v2151 = vperm.slane %v2143, %v2150
        %v2152 = vrot.slane %v2105, 4
        %v2153 = vsel %vm738, %v2152, %v2097
        %v2154 = vrot.slane %v2097, 4
        %v2155 = vsel %vm738, %v2105, %v2154
        %v2157 = vunpack.c.l.s4 1983009808
        %v2158 = vunpack.c.0.s8 %v2157
        %v2159 = vperm.slane %v2153, %v2158
        %v2161 = vunpack.c.l.s4 1983009808
        %v2162 = vunpack.c.0.s8 %v2161
        %v2163 = vperm.slane %v2155, %v2162
        %v2164 = vrot.slane %v2109, 4
        %v2165 = vsel %vm738, %v2164, %v2101
        %v2166 = vrot.slane %v2101, 4
        %v2167 = vsel %vm738, %v2109, %v2166
        %v2169 = vunpack.c.l.s4 1983009808
        %v2170 = vunpack.c.0.s8 %v2169
        %v2171 = vperm.slane %v2165, %v2170
        %v2173 = vunpack.c.l.s4 1983009808
        %v2174 = vunpack.c.0.s8 %v2173
        %v2175 = vperm.slane %v2167, %v2174
        %v2176 = vrot.slane %v2147, 4
        %v2177 = vsel %vm738, %v2176, %v2135
        %v2178 = vrot.slane %v2135, 4
        %v2179 = vsel %vm738, %v2147, %v2178
        %v2181 = vunpack.c.l.s4 1934713408
        %v2182 = vunpack.c.0.s8 %v2181
        %v2183 = vperm.slane %v2177, %v2182
        %v2185 = vunpack.c.l.s4 1934713408
        %v2186 = vunpack.c.0.s8 %v2185
        %v2187 = vperm.slane %v2179, %v2186
        %v2188 = vrot.slane %v2151, 4
        %v2189 = vsel %vm738, %v2188, %v2139
        %v2190 = vrot.slane %v2139, 4
        %v2191 = vsel %vm738, %v2151, %v2190
        %v2193 = vunpack.c.l.s4 1934713408
        %v2194 = vunpack.c.0.s8 %v2193
        %v2195 = vperm.slane %v2189, %v2194
        %v2197 = vunpack.c.l.s4 1934713408
        %v2198 = vunpack.c.0.s8 %v2197
        %v2199 = vperm.slane %v2191, %v2198
        %v2200 = vrot.slane %v2171, 4
        %v2201 = vsel %vm738, %v2200, %v2159
        %v2202 = vrot.slane %v2159, 4
        %v2203 = vsel %vm738, %v2171, %v2202
        %v2205 = vunpack.c.l.s4 1934713408
        %v2206 = vunpack.c.0.s8 %v2205
        %v2207 = vperm.slane %v2201, %v2206
        %v2209 = vunpack.c.l.s4 1934713408
        %v2210 = vunpack.c.0.s8 %v2209
        %v2211 = vperm.slane %v2203, %v2210
        %v2212 = vrot.slane %v2175, 4
        %v2213 = vsel %vm738, %v2212, %v2163
        %v2214 = vrot.slane %v2163, 4
        %v2215 = vsel %vm738, %v2175, %v2214
        %v2217 = vunpack.c.l.s4 1934713408
        %v2218 = vunpack.c.0.s8 %v2217
        %v2219 = vperm.slane %v2213, %v2218
        %v2221 = vunpack.c.l.s4 1934713408
        %v2222 = vunpack.c.0.s8 %v2221
        %v2223 = vperm.slane %v2215, %v2222
        %v2224 = vrot.slane %v2207, 4
        %v2225 = vsel %vm738, %v2224, %v2183
        %v2226 = vrot.slane %v2183, 4
        %v2227 = vsel %vm738, %v2207, %v2226
        %v2228 = vrot.slane %v2211, 4
        %v2229 = vsel %vm738, %v2228, %v2187
        %v2230 = vrot.slane %v2187, 4
        %v2231 = vsel %vm738, %v2211, %v2230
        %v2232 = vrot.slane %v2219, 4
        %v2233 = vsel %vm738, %v2232, %v2195
        %v2234 = vrot.slane %v2195, 4
        %v2235 = vsel %vm738, %v2219, %v2234
        %v2236 = vrot.slane %v2223, 4
        %v2237 = vsel %vm738, %v2236, %v2199
        %v2238 = vrot.slane %v2199, 4
        %v2239 = vsel %vm738, %v2223, %v2238
        %v2240 = vrot.slane %v2091, 4
        %v2241 = vsel %vm738, %v2240, %v2083
        %v2242 = vrot.slane %v2083, 4
        %v2243 = vsel %vm738, %v2091, %v2242
        %v2245 = vunpack.c.l.s4 1983009808
        %v2246 = vunpack.c.0.s8 %v2245
        %v2247 = vperm.slane %v2241, %v2246
        %v2249 = vunpack.c.l.s4 1983009808
        %v2250 = vunpack.c.0.s8 %v2249
        %v2251 = vperm.slane %v2243, %v2250
        %v2252 = vrot.slane %v2095, 4
        %v2253 = vsel %vm738, %v2252, %v2087
        %v2254 = vrot.slane %v2087, 4
        %v2255 = vsel %vm738, %v2095, %v2254
        %v2257 = vunpack.c.l.s4 1983009808
        %v2258 = vunpack.c.0.s8 %v2257
        %v2259 = vperm.slane %v2253, %v2258
        %v2261 = vunpack.c.l.s4 1983009808
        %v2262 = vunpack.c.0.s8 %v2261
        %v2263 = vperm.slane %v2255, %v2262
        %v2264 = vrot.slane %v2107, 4
        %v2265 = vsel %vm738, %v2264, %v2099
        %v2266 = vrot.slane %v2099, 4
        %v2267 = vsel %vm738, %v2107, %v2266
        %v2269 = vunpack.c.l.s4 1983009808
        %v2270 = vunpack.c.0.s8 %v2269
        %v2271 = vperm.slane %v2265, %v2270
        %v2273 = vunpack.c.l.s4 1983009808
        %v2274 = vunpack.c.0.s8 %v2273
        %v2275 = vperm.slane %v2267, %v2274
        %v2276 = vrot.slane %v2111, 4
        %v2277 = vsel %vm738, %v2276, %v2103
        %v2278 = vrot.slane %v2103, 4
        %v2279 = vsel %vm738, %v2111, %v2278
        %v2281 = vunpack.c.l.s4 1983009808
        %v2282 = vunpack.c.0.s8 %v2281
        %v2283 = vperm.slane %v2277, %v2282
        %v2285 = vunpack.c.l.s4 1983009808
        %v2286 = vunpack.c.0.s8 %v2285
        %v2287 = vperm.slane %v2279, %v2286
        %v2288 = vrot.slane %v2259, 4
        %v2289 = vsel %vm738, %v2288, %v2247
        %v2290 = vrot.slane %v2247, 4
        %v2291 = vsel %vm738, %v2259, %v2290
        %v2293 = vunpack.c.l.s4 1934713408
        %v2294 = vunpack.c.0.s8 %v2293
        %v2295 = vperm.slane %v2289, %v2294
        %v2297 = vunpack.c.l.s4 1934713408
        %v2298 = vunpack.c.0.s8 %v2297
        %v2299 = vperm.slane %v2291, %v2298
        %v2300 = vrot.slane %v2263, 4
        %v2301 = vsel %vm738, %v2300, %v2251
        %v2302 = vrot.slane %v2251, 4
        %v2303 = vsel %vm738, %v2263, %v2302
        %v2305 = vunpack.c.l.s4 1934713408
        %v2306 = vunpack.c.0.s8 %v2305
        %v2307 = vperm.slane %v2301, %v2306
        %v2309 = vunpack.c.l.s4 1934713408
        %v2310 = vunpack.c.0.s8 %v2309
        %v2311 = vperm.slane %v2303, %v2310
        %v2312 = vrot.slane %v2283, 4
        %v2313 = vsel %vm738, %v2312, %v2271
        %v2314 = vrot.slane %v2271, 4
        %v2315 = vsel %vm738, %v2283, %v2314
        %v2317 = vunpack.c.l.s4 1934713408
        %v2318 = vunpack.c.0.s8 %v2317
        %v2319 = vperm.slane %v2313, %v2318
        %v2321 = vunpack.c.l.s4 1934713408
        %v2322 = vunpack.c.0.s8 %v2321
        %v2323 = vperm.slane %v2315, %v2322
        %v2324 = vrot.slane %v2287, 4
        %v2325 = vsel %vm738, %v2324, %v2275
        %v2326 = vrot.slane %v2275, 4
        %v2327 = vsel %vm738, %v2287, %v2326
        %v2329 = vunpack.c.l.s4 1934713408
        %v2330 = vunpack.c.0.s8 %v2329
        %v2331 = vperm.slane %v2325, %v2330
        %v2333 = vunpack.c.l.s4 1934713408
        %v2334 = vunpack.c.0.s8 %v2333
        %v2335 = vperm.slane %v2327, %v2334
        %v2336 = vrot.slane %v2319, 4
        %v2337 = vsel %vm738, %v2336, %v2295
        %v2338 = vrot.slane %v2295, 4
        %v2339 = vsel %vm738, %v2319, %v2338
        %v2340 = vrot.slane %v2323, 4
        %v2341 = vsel %vm738, %v2340, %v2299
        %v2342 = vrot.slane %v2299, 4
        %v2343 = vsel %vm738, %v2323, %v2342
        %v2344 = vrot.slane %v2331, 4
        %v2345 = vsel %vm738, %v2344, %v2307
        %v2346 = vrot.slane %v2307, 4
        %v2347 = vsel %vm738, %v2331, %v2346
        %v2348 = vrot.slane %v2335, 4
        %v2349 = vsel %vm738, %v2348, %v2311
        %v2350 = vrot.slane %v2311, 4
        %v2351 = vsel %vm738, %v2335, %v2350
        %2353 = vrot.lane.b32.xlu0 %v2227, 16
        %v2354 = vpop.permute.xlu0 %2353
        %2357 = vrot.lane.b32.xlu0 %v2229, 32
        %v2358 = vpop.permute.xlu0 %2357
        %2361 = vrot.lane.b32.xlu0 %v2231, 48
        %v2362 = vpop.permute.xlu0 %2361
        %2365 = vrot.lane.b32.xlu0 %v2233, 64
        %v2366 = vpop.permute.xlu0 %2365
        %2369 = vrot.lane.b32.xlu0 %v2235, 80
        %v2370 = vpop.permute.xlu0 %2369
        %2373 = vrot.lane.b32.xlu0 %v2237, 96
        %v2374 = vpop.permute.xlu0 %2373
        %2377 = vrot.lane.b32.xlu0 %v2239, 112
        %v2378 = vpop.permute.xlu0 %2377
        %2381 = vrot.lane.b32.xlu0 %v2339, 16
        %v2382 = vpop.permute.xlu0 %2381
        %2385 = vrot.lane.b32.xlu0 %v2341, 32
        %v2386 = vpop.permute.xlu0 %2385
        %2389 = vrot.lane.b32.xlu0 %v2343, 48
        %v2390 = vpop.permute.xlu0 %2389
        %2393 = vrot.lane.b32.xlu0 %v2345, 64
        %v2394 = vpop.permute.xlu0 %2393
        %2397 = vrot.lane.b32.xlu0 %v2347, 80
        %v2398 = vpop.permute.xlu0 %2397
        %2401 = vrot.lane.b32.xlu0 %v2349, 96
        %v2402 = vpop.permute.xlu0 %2401
        %2405 = vrot.lane.b32.xlu0 %v2351, 112
        %v2406 = vpop.permute.xlu0 %2405
        %v2408 = vsel %vm1018, %v2225, %v2354
        %v2409 = vsel %vm1020, %v2408, %v2358
        %v2410 = vsel %vm1022, %v2409, %v2362
        %v2411 = vsel %vm1024, %v2410, %v2366
        %v2412 = vsel %vm1026, %v2411, %v2370
        %v2413 = vsel %vm1028, %v2412, %v2374
        %v2414 = vsel %vm1030, %v2413, %v2378
        %v2415 = vsel %vm1018, %v2337, %v2382
        %v2416 = vsel %vm1020, %v2415, %v2386
        %v2417 = vsel %vm1022, %v2416, %v2390
        %v2418 = vsel %vm1024, %v2417, %v2394
        %v2419 = vsel %vm1026, %v2418, %v2398
        %v2420 = vsel %vm1028, %v2419, %v2402
        %v2421 = vsel %vm1030, %v2420, %v2406
        %2422 = vst [vmem:[#allocation4 + $0x10] sm:$0xff] %v2414
        %2423 = vst [vmem:[#allocation4 + $0x18] sm:$0xff] %v2421
        %2424 = vrot.lane.b32.xlu0 %v1752, 126
        %v2425 = vpop.permute.xlu0 %2424
        %2426 = vrot.lane.b32.xlu0 %v1753, 126
        %v2427 = vpop.permute.xlu0 %2426
        %2428 = vrot.lane.b32.xlu0 %v1754, 126
        %v2429 = vpop.permute.xlu0 %2428
        %2430 = vrot.lane.b32.xlu0 %v1755, 126
        %v2431 = vpop.permute.xlu0 %2430
        %2432 = vrot.lane.b32.xlu0 %v1756, 126
        %v2433 = vpop.permute.xlu0 %2432
        %2434 = vrot.lane.b32.xlu0 %v1757, 126
        %v2435 = vpop.permute.xlu0 %2434
        %2436 = vrot.lane.b32.xlu0 %v1758, 126
        %v2437 = vpop.permute.xlu0 %2436
        %2438 = vrot.lane.b32.xlu0 %v1759, 126
        %v2439 = vpop.permute.xlu0 %2438
        %2440 = vrot.lane.b32.xlu0 %v1760, 126
        %v2441 = vpop.permute.xlu0 %2440
        %2442 = vrot.lane.b32.xlu0 %v1761, 126
        %v2443 = vpop.permute.xlu0 %2442
        %2444 = vrot.lane.b32.xlu0 %v1762, 126
        %v2445 = vpop.permute.xlu0 %2444
        %2446 = vrot.lane.b32.xlu0 %v1763, 126
        %v2447 = vpop.permute.xlu0 %2446
        %2448 = vrot.lane.b32.xlu0 %v1764, 126
        %v2449 = vpop.permute.xlu0 %2448
        %2450 = vrot.lane.b32.xlu0 %v1765, 126
        %v2451 = vpop.permute.xlu0 %2450
        %2452 = vrot.lane.b32.xlu0 %v1766, 126
        %v2453 = vpop.permute.xlu0 %2452
        %2454 = vrot.lane.b32.xlu0 %v1767, 126
        %v2455 = vpop.permute.xlu0 %2454
        %v2472 = vrot.slane %v2433, 4
        %v2473 = vsel %vm738, %v2472, %v2425
        %v2474 = vrot.slane %v2425, 4
        %v2475 = vsel %vm738, %v2433, %v2474
        %v2477 = vunpack.c.l.s4 1983009808
        %v2478 = vunpack.c.0.s8 %v2477
        %v2479 = vperm.slane %v2473, %v2478
        %v2481 = vunpack.c.l.s4 1983009808
        %v2482 = vunpack.c.0.s8 %v2481
        %v2483 = vperm.slane %v2475, %v2482
        %v2484 = vrot.slane %v2437, 4
        %v2485 = vsel %vm738, %v2484, %v2429
        %v2486 = vrot.slane %v2429, 4
        %v2487 = vsel %vm738, %v2437, %v2486
        %v2489 = vunpack.c.l.s4 1983009808
        %v2490 = vunpack.c.0.s8 %v2489
        %v2491 = vperm.slane %v2485, %v2490
        %v2493 = vunpack.c.l.s4 1983009808
        %v2494 = vunpack.c.0.s8 %v2493
        %v2495 = vperm.slane %v2487, %v2494
        %v2496 = vrot.slane %v2449, 4
        %v2497 = vsel %vm738, %v2496, %v2441
        %v2498 = vrot.slane %v2441, 4
        %v2499 = vsel %vm738, %v2449, %v2498
        %v2501 = vunpack.c.l.s4 1983009808
        %v2502 = vunpack.c.0.s8 %v2501
        %v2503 = vperm.slane %v2497, %v2502
        %v2505 = vunpack.c.l.s4 1983009808
        %v2506 = vunpack.c.0.s8 %v2505
        %v2507 = vperm.slane %v2499, %v2506
        %v2508 = vrot.slane %v2453, 4
        %v2509 = vsel %vm738, %v2508, %v2445
        %v2510 = vrot.slane %v2445, 4
        %v2511 = vsel %vm738, %v2453, %v2510
        %v2513 = vunpack.c.l.s4 1983009808
        %v2514 = vunpack.c.0.s8 %v2513
        %v2515 = vperm.slane %v2509, %v2514
        %v2517 = vunpack.c.l.s4 1983009808
        %v2518 = vunpack.c.0.s8 %v2517
        %v2519 = vperm.slane %v2511, %v2518
        %v2520 = vrot.slane %v2491, 4
        %v2521 = vsel %vm738, %v2520, %v2479
        %v2522 = vrot.slane %v2479, 4
        %v2523 = vsel %vm738, %v2491, %v2522
        %v2525 = vunpack.c.l.s4 1934713408
        %v2526 = vunpack.c.0.s8 %v2525
        %v2527 = vperm.slane %v2521, %v2526
        %v2529 = vunpack.c.l.s4 1934713408
        %v2530 = vunpack.c.0.s8 %v2529
        %v2531 = vperm.slane %v2523, %v2530
        %v2532 = vrot.slane %v2495, 4
        %v2533 = vsel %vm738, %v2532, %v2483
        %v2534 = vrot.slane %v2483, 4
        %v2535 = vsel %vm738, %v2495, %v2534
        %v2537 = vunpack.c.l.s4 1934713408
        %v2538 = vunpack.c.0.s8 %v2537
        %v2539 = vperm.slane %v2533, %v2538
        %v2541 = vunpack.c.l.s4 1934713408
        %v2542 = vunpack.c.0.s8 %v2541
        %v2543 = vperm.slane %v2535, %v2542
        %v2544 = vrot.slane %v2515, 4
        %v2545 = vsel %vm738, %v2544, %v2503
        %v2546 = vrot.slane %v2503, 4
        %v2547 = vsel %vm738, %v2515, %v2546
        %v2549 = vunpack.c.l.s4 1934713408
        %v2550 = vunpack.c.0.s8 %v2549
        %v2551 = vperm.slane %v2545, %v2550
        %v2553 = vunpack.c.l.s4 1934713408
        %v2554 = vunpack.c.0.s8 %v2553
        %v2555 = vperm.slane %v2547, %v2554
        %v2556 = vrot.slane %v2519, 4
        %v2557 = vsel %vm738, %v2556, %v2507
        %v2558 = vrot.slane %v2507, 4
        %v2559 = vsel %vm738, %v2519, %v2558
        %v2561 = vunpack.c.l.s4 1934713408
        %v2562 = vunpack.c.0.s8 %v2561
        %v2563 = vperm.slane %v2557, %v2562
        %v2565 = vunpack.c.l.s4 1934713408
        %v2566 = vunpack.c.0.s8 %v2565
        %v2567 = vperm.slane %v2559, %v2566
        %v2568 = vrot.slane %v2551, 4
        %v2569 = vsel %vm738, %v2568, %v2527
        %v2570 = vrot.slane %v2527, 4
        %v2571 = vsel %vm738, %v2551, %v2570
        %v2572 = vrot.slane %v2555, 4
        %v2573 = vsel %vm738, %v2572, %v2531
        %v2574 = vrot.slane %v2531, 4
        %v2575 = vsel %vm738, %v2555, %v2574
        %v2576 = vrot.slane %v2563, 4
        %v2577 = vsel %vm738, %v2576, %v2539
        %v2578 = vrot.slane %v2539, 4
        %v2579 = vsel %vm738, %v2563, %v2578
        %v2580 = vrot.slane %v2567, 4
        %v2581 = vsel %vm738, %v2580, %v2543
        %v2582 = vrot.slane %v2543, 4
        %v2583 = vsel %vm738, %v2567, %v2582
        %v2584 = vrot.slane %v2435, 4
        %v2585 = vsel %vm738, %v2584, %v2427
        %v2586 = vrot.slane %v2427, 4
        %v2587 = vsel %vm738, %v2435, %v2586
        %v2589 = vunpack.c.l.s4 1983009808
        %v2590 = vunpack.c.0.s8 %v2589
        %v2591 = vperm.slane %v2585, %v2590
        %v2593 = vunpack.c.l.s4 1983009808
        %v2594 = vunpack.c.0.s8 %v2593
        %v2595 = vperm.slane %v2587, %v2594
        %v2596 = vrot.slane %v2439, 4
        %v2597 = vsel %vm738, %v2596, %v2431
        %v2598 = vrot.slane %v2431, 4
        %v2599 = vsel %vm738, %v2439, %v2598
        %v2601 = vunpack.c.l.s4 1983009808
        %v2602 = vunpack.c.0.s8 %v2601
        %v2603 = vperm.slane %v2597, %v2602
        %v2605 = vunpack.c.l.s4 1983009808
        %v2606 = vunpack.c.0.s8 %v2605
        %v2607 = vperm.slane %v2599, %v2606
        %v2608 = vrot.slane %v2451, 4
        %v2609 = vsel %vm738, %v2608, %v2443
        %v2610 = vrot.slane %v2443, 4
        %v2611 = vsel %vm738, %v2451, %v2610
        %v2613 = vunpack.c.l.s4 1983009808
        %v2614 = vunpack.c.0.s8 %v2613
        %v2615 = vperm.slane %v2609, %v2614
        %v2617 = vunpack.c.l.s4 1983009808
        %v2618 = vunpack.c.0.s8 %v2617
        %v2619 = vperm.slane %v2611, %v2618
        %v2620 = vrot.slane %v2455, 4
        %v2621 = vsel %vm738, %v2620, %v2447
        %v2622 = vrot.slane %v2447, 4
        %v2623 = vsel %vm738, %v2455, %v2622
        %v2625 = vunpack.c.l.s4 1983009808
        %v2626 = vunpack.c.0.s8 %v2625
        %v2627 = vperm.slane %v2621, %v2626
        %v2629 = vunpack.c.l.s4 1983009808
        %v2630 = vunpack.c.0.s8 %v2629
        %v2631 = vperm.slane %v2623, %v2630
        %v2632 = vrot.slane %v2603, 4
        %v2633 = vsel %vm738, %v2632, %v2591
        %v2634 = vrot.slane %v2591, 4
        %v2635 = vsel %vm738, %v2603, %v2634
        %v2637 = vunpack.c.l.s4 1934713408
        %v2638 = vunpack.c.0.s8 %v2637
        %v2639 = vperm.slane %v2633, %v2638
        %v2641 = vunpack.c.l.s4 1934713408
        %v2642 = vunpack.c.0.s8 %v2641
        %v2643 = vperm.slane %v2635, %v2642
        %v2644 = vrot.slane %v2607, 4
        %v2645 = vsel %vm738, %v2644, %v2595
        %v2646 = vrot.slane %v2595, 4
        %v2647 = vsel %vm738, %v2607, %v2646
        %v2649 = vunpack.c.l.s4 1934713408
        %v2650 = vunpack.c.0.s8 %v2649
        %v2651 = vperm.slane %v2645, %v2650
        %v2653 = vunpack.c.l.s4 1934713408
        %v2654 = vunpack.c.0.s8 %v2653
        %v2655 = vperm.slane %v2647, %v2654
        %v2656 = vrot.slane %v2627, 4
        %v2657 = vsel %vm738, %v2656, %v2615
        %v2658 = vrot.slane %v2615, 4
        %v2659 = vsel %vm738, %v2627, %v2658
        %v2661 = vunpack.c.l.s4 1934713408
        %v2662 = vunpack.c.0.s8 %v2661
        %v2663 = vperm.slane %v2657, %v2662
        %v2665 = vunpack.c.l.s4 1934713408
        %v2666 = vunpack.c.0.s8 %v2665
        %v2667 = vperm.slane %v2659, %v2666
        %v2668 = vrot.slane %v2631, 4
        %v2669 = vsel %vm738, %v2668, %v2619
        %v2670 = vrot.slane %v2619, 4
        %v2671 = vsel %vm738, %v2631, %v2670
        %v2673 = vunpack.c.l.s4 1934713408
        %v2674 = vunpack.c.0.s8 %v2673
        %v2675 = vperm.slane %v2669, %v2674
        %v2677 = vunpack.c.l.s4 1934713408
        %v2678 = vunpack.c.0.s8 %v2677
        %v2679 = vperm.slane %v2671, %v2678
        %v2680 = vrot.slane %v2663, 4
        %v2681 = vsel %vm738, %v2680, %v2639
        %v2682 = vrot.slane %v2639, 4
        %v2683 = vsel %vm738, %v2663, %v2682
        %v2684 = vrot.slane %v2667, 4
        %v2685 = vsel %vm738, %v2684, %v2643
        %v2686 = vrot.slane %v2643, 4
        %v2687 = vsel %vm738, %v2667, %v2686
        %v2688 = vrot.slane %v2675, 4
        %v2689 = vsel %vm738, %v2688, %v2651
        %v2690 = vrot.slane %v2651, 4
        %v2691 = vsel %vm738, %v2675, %v2690
        %v2692 = vrot.slane %v2679, 4
        %v2693 = vsel %vm738, %v2692, %v2655
        %v2694 = vrot.slane %v2655, 4
        %v2695 = vsel %vm738, %v2679, %v2694
        %2697 = vrot.lane.b32.xlu0 %v2571, 16
        %v2698 = vpop.permute.xlu0 %2697
        %2701 = vrot.lane.b32.xlu0 %v2573, 32
        %v2702 = vpop.permute.xlu0 %2701
        %2705 = vrot.lane.b32.xlu0 %v2575, 48
        %v2706 = vpop.permute.xlu0 %2705
        %2709 = vrot.lane.b32.xlu0 %v2577, 64
        %v2710 = vpop.permute.xlu0 %2709
        %2713 = vrot.lane.b32.xlu0 %v2579, 80
        %v2714 = vpop.permute.xlu0 %2713
        %2717 = vrot.lane.b32.xlu0 %v2581, 96
        %v2718 = vpop.permute.xlu0 %2717
        %2721 = vrot.lane.b32.xlu0 %v2583, 112
        %v2722 = vpop.permute.xlu0 %2721
        %2725 = vrot.lane.b32.xlu0 %v2683, 16
        %v2726 = vpop.permute.xlu0 %2725
        %2729 = vrot.lane.b32.xlu0 %v2685, 32
        %v2730 = vpop.permute.xlu0 %2729
        %2733 = vrot.lane.b32.xlu0 %v2687, 48
        %v2734 = vpop.permute.xlu0 %2733
        %2737 = vrot.lane.b32.xlu0 %v2689, 64
        %v2738 = vpop.permute.xlu0 %2737
        %2741 = vrot.lane.b32.xlu0 %v2691, 80
        %v2742 = vpop.permute.xlu0 %2741
        %2745 = vrot.lane.b32.xlu0 %v2693, 96
        %v2746 = vpop.permute.xlu0 %2745
        %2749 = vrot.lane.b32.xlu0 %v2695, 112
        %v2750 = vpop.permute.xlu0 %2749
        %v2752 = vsel %vm1018, %v2569, %v2698
        %v2753 = vsel %vm1020, %v2752, %v2702
        %v2754 = vsel %vm1022, %v2753, %v2706
        %v2755 = vsel %vm1024, %v2754, %v2710
        %v2756 = vsel %vm1026, %v2755, %v2714
        %v2757 = vsel %vm1028, %v2756, %v2718
        %v2758 = vsel %vm1030, %v2757, %v2722
        %v2759 = vsel %vm1018, %v2681, %v2726
        %v2760 = vsel %vm1020, %v2759, %v2730
        %v2761 = vsel %vm1022, %v2760, %v2734
        %v2762 = vsel %vm1024, %v2761, %v2738
        %v2763 = vsel %vm1026, %v2762, %v2742
        %v2764 = vsel %vm1028, %v2763, %v2746
        %v2765 = vsel %vm1030, %v2764, %v2750
        %2766 = vst [vmem:[#allocation4 + $0x20] sm:$0xff] %v2758
        %2767 = vst [vmem:[#allocation4 + $0x28] sm:$0xff] %v2765
        %s2768 = scalar_lea.vmem %s4, 4
        %v2769 = vld [vmem:[%s2768] sm:$0xf]
        %v2770 = vld [vmem:[#allocation4] sm:$0xff]
        %v2771 = vld [vmem:[#allocation4 + $0x8] sm:$0xff]
        %v2772 = vld [vmem:[#allocation4 + $0x10] sm:$0xff]
        %v2773 = vld [vmem:[#allocation4 + $0x18] sm:$0xff]
        %v2774 = vld [vmem:[#allocation4 + $0x20] sm:$0xff]
        %v2775 = vld [vmem:[#allocation4 + $0x28] sm:$0xff]
        %vm2776 = vcmask 195584
        %v2778 = vsel %vm2776, %v2769, 0
        %2780 = vmatpush.msra.mxu0 0.0
        %2781 = vmatpush.msra.mxu0 0.0
        %2782 = vmatpush.msra.mxu0 0.0
        %2783 = vmatpush.msra.mxu0 0.0
        %2784 = vmatpush.msra.mxu0 0.0
        %2785 = vmatpush.msra.mxu0 0.0
        %2786 = vmatpush.msra.mxu0 0.0
        %2787 = vmatpush.msra.mxu0 0.0
        %2788 = vmatpush.msra.mxu0 0.0
        %2789 = vmatpush.msra.mxu0 0.0
        %2790 = vmatpush.msra.mxu0 0.0
        %2791 = vmatpush.msra.mxu0 0.0
        %2792 = vmatpush.msra.mxu0 0.0
        %2793 = vmatpush.msra.mxu0 %v2774
        %2794 = vmatpush.msra.mxu0 %v2772
        %2795 = vmatpush.msra.mxu0 %v2770
        %2796 = vmatmul.f32.gmra.mxu0 %v2778
        %v2797 = vpop.f32.mrf.mxu0
        %v2798 = vadd.f32 0.0, %v2797
        %2799 = vdwg.mxu0
        %2800 = vmatpush.msra.mxu0 0.0
        %2801 = vmatpush.msra.mxu0 0.0
        %2802 = vmatpush.msra.mxu0 0.0
        %2803 = vmatpush.msra.mxu0 0.0
        %2804 = vmatpush.msra.mxu0 0.0
        %2805 = vmatpush.msra.mxu0 0.0
        %2806 = vmatpush.msra.mxu0 0.0
        %2807 = vmatpush.msra.mxu0 0.0
        %2808 = vmatpush.msra.mxu0 0.0
        %2809 = vmatpush.msra.mxu0 0.0
        %2810 = vmatpush.msra.mxu0 0.0
        %2811 = vmatpush.msra.mxu0 0.0
        %2812 = vmatpush.msra.mxu0 0.0
        %2813 = vmatpush.msra.mxu0 %v2775
        %2814 = vmatpush.msra.mxu0 %v2773
        %2815 = vmatpush.msra.mxu0 %v2771
        %2816 = vmatmul.f32.gmra.mxu0 %v2778
        %v2817 = vpop.f32.mrf.mxu0
        %v2818 = vadd.f32 0.0, %v2817
        %2819 = vdwg.mxu0
        %v2821 = vsel %vm2776, %v1745, 0
        %2823 = vmatpush.msra.mxu0 0.0
        %2824 = vmatpush.msra.mxu0 0.0
        %2825 = vmatpush.msra.mxu0 0.0
        %2826 = vmatpush.msra.mxu0 0.0
        %2827 = vmatpush.msra.mxu0 0.0
        %2828 = vmatpush.msra.mxu0 0.0
        %2829 = vmatpush.msra.mxu0 0.0
        %2830 = vmatpush.msra.mxu0 0.0
        %2831 = vmatpush.msra.mxu0 0.0
        %2832 = vmatpush.msra.mxu0 0.0
        %2833 = vmatpush.msra.mxu0 0.0
        %2834 = vmatpush.msra.mxu0 0.0
        %2835 = vmatpush.msra.mxu0 0.0
        %2836 = vmatpush.msra.mxu0 %v1750
        %2837 = vmatpush.msra.mxu0 %v1748
        %2838 = vmatpush.msra.mxu0 %v1746
        %2839 = vmatmul.f32.gmra.mxu0 %v2821
        %v2840 = vpop.f32.mrf.mxu0
        %v2841 = vadd.f32 %v2798, %v2840
        %2842 = vdwg.mxu0
        %2843 = vmatpush.msra.mxu0 0.0
        %2844 = vmatpush.msra.mxu0 0.0
        %2845 = vmatpush.msra.mxu0 0.0
        %2846 = vmatpush.msra.mxu0 0.0
        %2847 = vmatpush.msra.mxu0 0.0
        %2848 = vmatpush.msra.mxu0 0.0
        %2849 = vmatpush.msra.mxu0 0.0
        %2850 = vmatpush.msra.mxu0 0.0
        %2851 = vmatpush.msra.mxu0 0.0
        %2852 = vmatpush.msra.mxu0 0.0
        %2853 = vmatpush.msra.mxu0 0.0
        %2854 = vmatpush.msra.mxu0 0.0
        %2855 = vmatpush.msra.mxu0 0.0
        %2856 = vmatpush.msra.mxu0 %v1751
        %2857 = vmatpush.msra.mxu0 %v1749
        %2858 = vmatpush.msra.mxu0 %v1747
        %2859 = vmatmul.f32.gmra.mxu0 %v2821
        %v2860 = vpop.f32.mrf.mxu0
        %v2861 = vadd.f32 %v2818, %v2860
        %2862 = vdwg.mxu0
        %v2863 = vld [vmem:[#allocation2 + $0x2] sm:$0xff]
        %v2864 = vld [vmem:[#allocation2 + $0xa] sm:$0xff]
        %v2865 = vld [vmem:[#allocation2 + $0x1a] sm:$0xff]
        %v2866 = vld [vmem:[#allocation2 + $0x22] sm:$0xff]
        %v2867 = vld [vmem:[#allocation2 + $0x32] sm:$0xff]
        %v2868 = vld [vmem:[#allocation2 + $0x3a] sm:$0xff]
        %v2869 = vld [vmem:[#allocation2 + $0x4a] sm:$0xff]
        %v2870 = vld [vmem:[#allocation2 + $0x52] sm:$0xff]
        %v2871 = vld [vmem:[#allocation2 + $0x62] sm:$0xff]
        %v2872 = vld [vmem:[#allocation2 + $0x6a] sm:$0xff]
        %v2873 = vld [vmem:[#allocation2 + $0x7a] sm:$0xff]
        %v2874 = vld [vmem:[#allocation2 + $0x82] sm:$0xff]
        %v2875 = vld [vmem:[#allocation2 + $0x92] sm:$0xff]
        %v2876 = vld [vmem:[#allocation2 + $0x9a] sm:$0xff]
        %v2877 = vld [vmem:[#allocation2 + $0xaa] sm:$0xff]
        %v2878 = vld [vmem:[#allocation2 + $0xb2] sm:$0xff]
        %v2879 = vrot.slane %v2867, 4
        %v2880 = vsel %vm738, %v2879, %v2863
        %v2881 = vrot.slane %v2863, 4
        %v2882 = vsel %vm738, %v2867, %v2881
        %v2884 = vunpack.c.l.s4 1983009808
        %v2885 = vunpack.c.0.s8 %v2884
        %v2886 = vperm.slane %v2880, %v2885
        %v2888 = vunpack.c.l.s4 1983009808
        %v2889 = vunpack.c.0.s8 %v2888
        %v2890 = vperm.slane %v2882, %v2889
        %v2891 = vrot.slane %v2869, 4
        %v2892 = vsel %vm738, %v2891, %v2865
        %v2893 = vrot.slane %v2865, 4
        %v2894 = vsel %vm738, %v2869, %v2893
        %v2896 = vunpack.c.l.s4 1983009808
        %v2897 = vunpack.c.0.s8 %v2896
        %v2898 = vperm.slane %v2892, %v2897
        %v2900 = vunpack.c.l.s4 1983009808
        %v2901 = vunpack.c.0.s8 %v2900
        %v2902 = vperm.slane %v2894, %v2901
        %v2903 = vrot.slane %v2875, 4
        %v2904 = vsel %vm738, %v2903, %v2871
        %v2905 = vrot.slane %v2871, 4
        %v2906 = vsel %vm738, %v2875, %v2905
        %v2908 = vunpack.c.l.s4 1983009808
        %v2909 = vunpack.c.0.s8 %v2908
        %v2910 = vperm.slane %v2904, %v2909
        %v2912 = vunpack.c.l.s4 1983009808
        %v2913 = vunpack.c.0.s8 %v2912
        %v2914 = vperm.slane %v2906, %v2913
        %v2915 = vrot.slane %v2877, 4
        %v2916 = vsel %vm738, %v2915, %v2873
        %v2917 = vrot.slane %v2873, 4
        %v2918 = vsel %vm738, %v2877, %v2917
        %v2920 = vunpack.c.l.s4 1983009808
        %v2921 = vunpack.c.0.s8 %v2920
        %v2922 = vperm.slane %v2916, %v2921
        %v2924 = vunpack.c.l.s4 1983009808
        %v2925 = vunpack.c.0.s8 %v2924
        %v2926 = vperm.slane %v2918, %v2925
        %v2927 = vrot.slane %v2898, 4
        %v2928 = vsel %vm738, %v2927, %v2886
        %v2929 = vrot.slane %v2886, 4
        %v2930 = vsel %vm738, %v2898, %v2929
        %v2932 = vunpack.c.l.s4 1934713408
        %v2933 = vunpack.c.0.s8 %v2932
        %v2934 = vperm.slane %v2928, %v2933
        %v2936 = vunpack.c.l.s4 1934713408
        %v2937 = vunpack.c.0.s8 %v2936
        %v2938 = vperm.slane %v2930, %v2937
        %v2939 = vrot.slane %v2902, 4
        %v2940 = vsel %vm738, %v2939, %v2890
        %v2941 = vrot.slane %v2890, 4
        %v2942 = vsel %vm738, %v2902, %v2941
        %v2944 = vunpack.c.l.s4 1934713408
        %v2945 = vunpack.c.0.s8 %v2944
        %v2946 = vperm.slane %v2940, %v2945
        %v2948 = vunpack.c.l.s4 1934713408
        %v2949 = vunpack.c.0.s8 %v2948
        %v2950 = vperm.slane %v2942, %v2949
        %v2951 = vrot.slane %v2922, 4
        %v2952 = vsel %vm738, %v2951, %v2910
        %v2953 = vrot.slane %v2910, 4
        %v2954 = vsel %vm738, %v2922, %v2953
        %v2956 = vunpack.c.l.s4 1934713408
        %v2957 = vunpack.c.0.s8 %v2956
        %v2958 = vperm.slane %v2952, %v2957
        %v2960 = vunpack.c.l.s4 1934713408
        %v2961 = vunpack.c.0.s8 %v2960
        %v2962 = vperm.slane %v2954, %v2961
        %v2963 = vrot.slane %v2926, 4
        %v2964 = vsel %vm738, %v2963, %v2914
        %v2965 = vrot.slane %v2914, 4
        %v2966 = vsel %vm738, %v2926, %v2965
        %v2968 = vunpack.c.l.s4 1934713408
        %v2969 = vunpack.c.0.s8 %v2968
        %v2970 = vperm.slane %v2964, %v2969
        %v2972 = vunpack.c.l.s4 1934713408
        %v2973 = vunpack.c.0.s8 %v2972
        %v2974 = vperm.slane %v2966, %v2973
        %v2975 = vrot.slane %v2958, 4
        %v2976 = vsel %vm738, %v2975, %v2934
        %v2977 = vrot.slane %v2934, 4
        %v2978 = vsel %vm738, %v2958, %v2977
        %v2979 = vrot.slane %v2962, 4
        %v2980 = vsel %vm738, %v2979, %v2938
        %v2981 = vrot.slane %v2938, 4
        %v2982 = vsel %vm738, %v2962, %v2981
        %v2983 = vrot.slane %v2970, 4
        %v2984 = vsel %vm738, %v2983, %v2946
        %v2985 = vrot.slane %v2946, 4
        %v2986 = vsel %vm738, %v2970, %v2985
        %v2987 = vrot.slane %v2974, 4
        %v2988 = vsel %vm738, %v2987, %v2950
        %v2989 = vrot.slane %v2950, 4
        %v2990 = vsel %vm738, %v2974, %v2989
        %v2991 = vrot.slane %v2868, 4
        %v2992 = vsel %vm738, %v2991, %v2864
        %v2993 = vrot.slane %v2864, 4
        %v2994 = vsel %vm738, %v2868, %v2993
        %v2996 = vunpack.c.l.s4 1983009808
        %v2997 = vunpack.c.0.s8 %v2996
        %v2998 = vperm.slane %v2992, %v2997
        %v3000 = vunpack.c.l.s4 1983009808
        %v3001 = vunpack.c.0.s8 %v3000
        %v3002 = vperm.slane %v2994, %v3001
        %v3003 = vrot.slane %v2870, 4
        %v3004 = vsel %vm738, %v3003, %v2866
        %v3005 = vrot.slane %v2866, 4
        %v3006 = vsel %vm738, %v2870, %v3005
        %v3008 = vunpack.c.l.s4 1983009808
        %v3009 = vunpack.c.0.s8 %v3008
        %v3010 = vperm.slane %v3004, %v3009
        %v3012 = vunpack.c.l.s4 1983009808
        %v3013 = vunpack.c.0.s8 %v3012
        %v3014 = vperm.slane %v3006, %v3013
        %v3015 = vrot.slane %v2876, 4
        %v3016 = vsel %vm738, %v3015, %v2872
        %v3017 = vrot.slane %v2872, 4
        %v3018 = vsel %vm738, %v2876, %v3017
        %v3020 = vunpack.c.l.s4 1983009808
        %v3021 = vunpack.c.0.s8 %v3020
        %v3022 = vperm.slane %v3016, %v3021
        %v3024 = vunpack.c.l.s4 1983009808
        %v3025 = vunpack.c.0.s8 %v3024
        %v3026 = vperm.slane %v3018, %v3025
        %v3027 = vrot.slane %v2878, 4
        %v3028 = vsel %vm738, %v3027, %v2874
        %v3029 = vrot.slane %v2874, 4
        %v3030 = vsel %vm738, %v2878, %v3029
        %v3032 = vunpack.c.l.s4 1983009808
        %v3033 = vunpack.c.0.s8 %v3032
        %v3034 = vperm.slane %v3028, %v3033
        %v3036 = vunpack.c.l.s4 1983009808
        %v3037 = vunpack.c.0.s8 %v3036
        %v3038 = vperm.slane %v3030, %v3037
        %v3039 = vrot.slane %v3010, 4
        %v3040 = vsel %vm738, %v3039, %v2998
        %v3041 = vrot.slane %v2998, 4
        %v3042 = vsel %vm738, %v3010, %v3041
        %v3044 = vunpack.c.l.s4 1934713408
        %v3045 = vunpack.c.0.s8 %v3044
        %v3046 = vperm.slane %v3040, %v3045
        %v3048 = vunpack.c.l.s4 1934713408
        %v3049 = vunpack.c.0.s8 %v3048
        %v3050 = vperm.slane %v3042, %v3049
        %v3051 = vrot.slane %v3014, 4
        %v3052 = vsel %vm738, %v3051, %v3002
        %v3053 = vrot.slane %v3002, 4
        %v3054 = vsel %vm738, %v3014, %v3053
        %v3056 = vunpack.c.l.s4 1934713408
        %v3057 = vunpack.c.0.s8 %v3056
        %v3058 = vperm.slane %v3052, %v3057
        %v3060 = vunpack.c.l.s4 1934713408
        %v3061 = vunpack.c.0.s8 %v3060
        %v3062 = vperm.slane %v3054, %v3061
        %v3063 = vrot.slane %v3034, 4
        %v3064 = vsel %vm738, %v3063, %v3022
        %v3065 = vrot.slane %v3022, 4
        %v3066 = vsel %vm738, %v3034, %v3065
        %v3068 = vunpack.c.l.s4 1934713408
        %v3069 = vunpack.c.0.s8 %v3068
        %v3070 = vperm.slane %v3064, %v3069
        %v3072 = vunpack.c.l.s4 1934713408
        %v3073 = vunpack.c.0.s8 %v3072
        %v3074 = vperm.slane %v3066, %v3073
        %v3075 = vrot.slane %v3038, 4
        %v3076 = vsel %vm738, %v3075, %v3026
        %v3077 = vrot.slane %v3026, 4
        %v3078 = vsel %vm738, %v3038, %v3077
        %v3080 = vunpack.c.l.s4 1934713408
        %v3081 = vunpack.c.0.s8 %v3080
        %v3082 = vperm.slane %v3076, %v3081
        %v3084 = vunpack.c.l.s4 1934713408
        %v3085 = vunpack.c.0.s8 %v3084
        %v3086 = vperm.slane %v3078, %v3085
        %v3087 = vrot.slane %v3070, 4
        %v3088 = vsel %vm738, %v3087, %v3046
        %v3089 = vrot.slane %v3046, 4
        %v3090 = vsel %vm738, %v3070, %v3089
        %v3091 = vrot.slane %v3074, 4
        %v3092 = vsel %vm738, %v3091, %v3050
        %v3093 = vrot.slane %v3050, 4
        %v3094 = vsel %vm738, %v3074, %v3093
        %v3095 = vrot.slane %v3082, 4
        %v3096 = vsel %vm738, %v3095, %v3058
        %v3097 = vrot.slane %v3058, 4
        %v3098 = vsel %vm738, %v3082, %v3097
        %v3099 = vrot.slane %v3086, 4
        %v3100 = vsel %vm738, %v3099, %v3062
        %v3101 = vrot.slane %v3062, 4
        %v3102 = vsel %vm738, %v3086, %v3101
        %3104 = vrot.lane.b32.xlu0 %v2978, 16
        %v3105 = vpop.permute.xlu0 %3104
        %3108 = vrot.lane.b32.xlu0 %v2980, 32
        %v3109 = vpop.permute.xlu0 %3108
        %3112 = vrot.lane.b32.xlu0 %v2982, 48
        %v3113 = vpop.permute.xlu0 %3112
        %3116 = vrot.lane.b32.xlu0 %v2984, 64
        %v3117 = vpop.permute.xlu0 %3116
        %3120 = vrot.lane.b32.xlu0 %v2986, 80
        %v3121 = vpop.permute.xlu0 %3120
        %3124 = vrot.lane.b32.xlu0 %v2988, 96
        %v3125 = vpop.permute.xlu0 %3124
        %3128 = vrot.lane.b32.xlu0 %v2990, 112
        %v3129 = vpop.permute.xlu0 %3128
        %3132 = vrot.lane.b32.xlu0 %v3090, 16
        %v3133 = vpop.permute.xlu0 %3132
        %3136 = vrot.lane.b32.xlu0 %v3092, 32
        %v3137 = vpop.permute.xlu0 %3136
        %3140 = vrot.lane.b32.xlu0 %v3094, 48
        %v3141 = vpop.permute.xlu0 %3140
        %3144 = vrot.lane.b32.xlu0 %v3096, 64
        %v3145 = vpop.permute.xlu0 %3144
        %3148 = vrot.lane.b32.xlu0 %v3098, 80
        %v3149 = vpop.permute.xlu0 %3148
        %3152 = vrot.lane.b32.xlu0 %v3100, 96
        %v3153 = vpop.permute.xlu0 %3152
        %3156 = vrot.lane.b32.xlu0 %v3102, 112
        %v3157 = vpop.permute.xlu0 %3156
        %v3159 = vsel %vm1018, %v2976, %v3105
        %v3160 = vsel %vm1020, %v3159, %v3109
        %v3161 = vsel %vm1022, %v3160, %v3113
        %v3162 = vsel %vm1024, %v3161, %v3117
        %v3163 = vsel %vm1026, %v3162, %v3121
        %v3164 = vsel %vm1028, %v3163, %v3125
        %v3165 = vsel %vm1030, %v3164, %v3129
        %v3166 = vsel %vm1018, %v3088, %v3133
        %v3167 = vsel %vm1020, %v3166, %v3137
        %v3168 = vsel %vm1022, %v3167, %v3141
        %v3169 = vsel %vm1024, %v3168, %v3145
        %v3170 = vsel %vm1026, %v3169, %v3149
        %v3171 = vsel %vm1028, %v3170, %v3153
        %v3172 = vsel %vm1030, %v3171, %v3157
        %3173 = vst [vmem:[#allocation4] sm:$0xff] %v3165
        %3174 = vst [vmem:[#allocation4 + $0x8] sm:$0xff] %v3172
        %3191 = vrot.lane.b32.xlu0 %v2863, 127
        %v3192 = vpop.permute.xlu0 %3191
        %3193 = vrot.lane.b32.xlu0 %v2864, 127
        %v3194 = vpop.permute.xlu0 %3193
        %3195 = vrot.lane.b32.xlu0 %v2865, 127
        %v3196 = vpop.permute.xlu0 %3195
        %3197 = vrot.lane.b32.xlu0 %v2866, 127
        %v3198 = vpop.permute.xlu0 %3197
        %3199 = vrot.lane.b32.xlu0 %v2867, 127
        %v3200 = vpop.permute.xlu0 %3199
        %3201 = vrot.lane.b32.xlu0 %v2868, 127
        %v3202 = vpop.permute.xlu0 %3201
        %3203 = vrot.lane.b32.xlu0 %v2869, 127
        %v3204 = vpop.permute.xlu0 %3203
        %3205 = vrot.lane.b32.xlu0 %v2870, 127
        %v3206 = vpop.permute.xlu0 %3205
        %3207 = vrot.lane.b32.xlu0 %v2871, 127
        %v3208 = vpop.permute.xlu0 %3207
        %3209 = vrot.lane.b32.xlu0 %v2872, 127
        %v3210 = vpop.permute.xlu0 %3209
        %3211 = vrot.lane.b32.xlu0 %v2873, 127
        %v3212 = vpop.permute.xlu0 %3211
        %3213 = vrot.lane.b32.xlu0 %v2874, 127
        %v3214 = vpop.permute.xlu0 %3213
        %3215 = vrot.lane.b32.xlu0 %v2875, 127
        %v3216 = vpop.permute.xlu0 %3215
        %3217 = vrot.lane.b32.xlu0 %v2876, 127
        %v3218 = vpop.permute.xlu0 %3217
        %3219 = vrot.lane.b32.xlu0 %v2877, 127
        %v3220 = vpop.permute.xlu0 %3219
        %3221 = vrot.lane.b32.xlu0 %v2878, 127
        %v3222 = vpop.permute.xlu0 %3221
        %v3239 = vrot.slane %v3200, 4
        %v3240 = vsel %vm738, %v3239, %v3192
        %v3241 = vrot.slane %v3192, 4
        %v3242 = vsel %vm738, %v3200, %v3241
        %v3244 = vunpack.c.l.s4 1983009808
        %v3245 = vunpack.c.0.s8 %v3244
        %v3246 = vperm.slane %v3240, %v3245
        %v3248 = vunpack.c.l.s4 1983009808
        %v3249 = vunpack.c.0.s8 %v3248
        %v3250 = vperm.slane %v3242, %v3249
        %v3251 = vrot.slane %v3204, 4
        %v3252 = vsel %vm738, %v3251, %v3196
        %v3253 = vrot.slane %v3196, 4
        %v3254 = vsel %vm738, %v3204, %v3253
        %v3256 = vunpack.c.l.s4 1983009808
        %v3257 = vunpack.c.0.s8 %v3256
        %v3258 = vperm.slane %v3252, %v3257
        %v3260 = vunpack.c.l.s4 1983009808
        %v3261 = vunpack.c.0.s8 %v3260
        %v3262 = vperm.slane %v3254, %v3261
        %v3263 = vrot.slane %v3216, 4
        %v3264 = vsel %vm738, %v3263, %v3208
        %v3265 = vrot.slane %v3208, 4
        %v3266 = vsel %vm738, %v3216, %v3265
        %v3268 = vunpack.c.l.s4 1983009808
        %v3269 = vunpack.c.0.s8 %v3268
        %v3270 = vperm.slane %v3264, %v3269
        %v3272 = vunpack.c.l.s4 1983009808
        %v3273 = vunpack.c.0.s8 %v3272
        %v3274 = vperm.slane %v3266, %v3273
        %v3275 = vrot.slane %v3220, 4
        %v3276 = vsel %vm738, %v3275, %v3212
        %v3277 = vrot.slane %v3212, 4
        %v3278 = vsel %vm738, %v3220, %v3277
        %v3280 = vunpack.c.l.s4 1983009808
        %v3281 = vunpack.c.0.s8 %v3280
        %v3282 = vperm.slane %v3276, %v3281
        %v3284 = vunpack.c.l.s4 1983009808
        %v3285 = vunpack.c.0.s8 %v3284
        %v3286 = vperm.slane %v3278, %v3285
        %v3287 = vrot.slane %v3258, 4
        %v3288 = vsel %vm738, %v3287, %v3246
        %v3289 = vrot.slane %v3246, 4
        %v3290 = vsel %vm738, %v3258, %v3289
        %v3292 = vunpack.c.l.s4 1934713408
        %v3293 = vunpack.c.0.s8 %v3292
        %v3294 = vperm.slane %v3288, %v3293
        %v3296 = vunpack.c.l.s4 1934713408
        %v3297 = vunpack.c.0.s8 %v3296
        %v3298 = vperm.slane %v3290, %v3297
        %v3299 = vrot.slane %v3262, 4
        %v3300 = vsel %vm738, %v3299, %v3250
        %v3301 = vrot.slane %v3250, 4
        %v3302 = vsel %vm738, %v3262, %v3301
        %v3304 = vunpack.c.l.s4 1934713408
        %v3305 = vunpack.c.0.s8 %v3304
        %v3306 = vperm.slane %v3300, %v3305
        %v3308 = vunpack.c.l.s4 1934713408
        %v3309 = vunpack.c.0.s8 %v3308
        %v3310 = vperm.slane %v3302, %v3309
        %v3311 = vrot.slane %v3282, 4
        %v3312 = vsel %vm738, %v3311, %v3270
        %v3313 = vrot.slane %v3270, 4
        %v3314 = vsel %vm738, %v3282, %v3313
        %v3316 = vunpack.c.l.s4 1934713408
        %v3317 = vunpack.c.0.s8 %v3316
        %v3318 = vperm.slane %v3312, %v3317
        %v3320 = vunpack.c.l.s4 1934713408
        %v3321 = vunpack.c.0.s8 %v3320
        %v3322 = vperm.slane %v3314, %v3321
        %v3323 = vrot.slane %v3286, 4
        %v3324 = vsel %vm738, %v3323, %v3274
        %v3325 = vrot.slane %v3274, 4
        %v3326 = vsel %vm738, %v3286, %v3325
        %v3328 = vunpack.c.l.s4 1934713408
        %v3329 = vunpack.c.0.s8 %v3328
        %v3330 = vperm.slane %v3324, %v3329
        %v3332 = vunpack.c.l.s4 1934713408
        %v3333 = vunpack.c.0.s8 %v3332
        %v3334 = vperm.slane %v3326, %v3333
        %v3335 = vrot.slane %v3318, 4
        %v3336 = vsel %vm738, %v3335, %v3294
        %v3337 = vrot.slane %v3294, 4
        %v3338 = vsel %vm738, %v3318, %v3337
        %v3339 = vrot.slane %v3322, 4
        %v3340 = vsel %vm738, %v3339, %v3298
        %v3341 = vrot.slane %v3298, 4
        %v3342 = vsel %vm738, %v3322, %v3341
        %v3343 = vrot.slane %v3330, 4
        %v3344 = vsel %vm738, %v3343, %v3306
        %v3345 = vrot.slane %v3306, 4
        %v3346 = vsel %vm738, %v3330, %v3345
        %v3347 = vrot.slane %v3334, 4
        %v3348 = vsel %vm738, %v3347, %v3310
        %v3349 = vrot.slane %v3310, 4
        %v3350 = vsel %vm738, %v3334, %v3349
        %v3351 = vrot.slane %v3202, 4
        %v3352 = vsel %vm738, %v3351, %v3194
        %v3353 = vrot.slane %v3194, 4
        %v3354 = vsel %vm738, %v3202, %v3353
        %v3356 = vunpack.c.l.s4 1983009808
        %v3357 = vunpack.c.0.s8 %v3356
        %v3358 = vperm.slane %v3352, %v3357
        %v3360 = vunpack.c.l.s4 1983009808
        %v3361 = vunpack.c.0.s8 %v3360
        %v3362 = vperm.slane %v3354, %v3361
        %v3363 = vrot.slane %v3206, 4
        %v3364 = vsel %vm738, %v3363, %v3198
        %v3365 = vrot.slane %v3198, 4
        %v3366 = vsel %vm738, %v3206, %v3365
        %v3368 = vunpack.c.l.s4 1983009808
        %v3369 = vunpack.c.0.s8 %v3368
        %v3370 = vperm.slane %v3364, %v3369
        %v3372 = vunpack.c.l.s4 1983009808
        %v3373 = vunpack.c.0.s8 %v3372
        %v3374 = vperm.slane %v3366, %v3373
        %v3375 = vrot.slane %v3218, 4
        %v3376 = vsel %vm738, %v3375, %v3210
        %v3377 = vrot.slane %v3210, 4
        %v3378 = vsel %vm738, %v3218, %v3377
        %v3380 = vunpack.c.l.s4 1983009808
        %v3381 = vunpack.c.0.s8 %v3380
        %v3382 = vperm.slane %v3376, %v3381
        %v3384 = vunpack.c.l.s4 1983009808
        %v3385 = vunpack.c.0.s8 %v3384
        %v3386 = vperm.slane %v3378, %v3385
        %v3387 = vrot.slane %v3222, 4
        %v3388 = vsel %vm738, %v3387, %v3214
        %v3389 = vrot.slane %v3214, 4
        %v3390 = vsel %vm738, %v3222, %v3389
        %v3392 = vunpack.c.l.s4 1983009808
        %v3393 = vunpack.c.0.s8 %v3392
        %v3394 = vperm.slane %v3388, %v3393
        %v3396 = vunpack.c.l.s4 1983009808
        %v3397 = vunpack.c.0.s8 %v3396
        %v3398 = vperm.slane %v3390, %v3397
        %v3399 = vrot.slane %v3370, 4
        %v3400 = vsel %vm738, %v3399, %v3358
        %v3401 = vrot.slane %v3358, 4
        %v3402 = vsel %vm738, %v3370, %v3401
        %v3404 = vunpack.c.l.s4 1934713408
        %v3405 = vunpack.c.0.s8 %v3404
        %v3406 = vperm.slane %v3400, %v3405
        %v3408 = vunpack.c.l.s4 1934713408
        %v3409 = vunpack.c.0.s8 %v3408
        %v3410 = vperm.slane %v3402, %v3409
        %v3411 = vrot.slane %v3374, 4
        %v3412 = vsel %vm738, %v3411, %v3362
        %v3413 = vrot.slane %v3362, 4
        %v3414 = vsel %vm738, %v3374, %v3413
        %v3416 = vunpack.c.l.s4 1934713408
        %v3417 = vunpack.c.0.s8 %v3416
        %v3418 = vperm.slane %v3412, %v3417
        %v3420 = vunpack.c.l.s4 1934713408
        %v3421 = vunpack.c.0.s8 %v3420
        %v3422 = vperm.slane %v3414, %v3421
        %v3423 = vrot.slane %v3394, 4
        %v3424 = vsel %vm738, %v3423, %v3382
        %v3425 = vrot.slane %v3382, 4
        %v3426 = vsel %vm738, %v3394, %v3425
        %v3428 = vunpack.c.l.s4 1934713408
        %v3429 = vunpack.c.0.s8 %v3428
        %v3430 = vperm.slane %v3424, %v3429
        %v3432 = vunpack.c.l.s4 1934713408
        %v3433 = vunpack.c.0.s8 %v3432
        %v3434 = vperm.slane %v3426, %v3433
        %v3435 = vrot.slane %v3398, 4
        %v3436 = vsel %vm738, %v3435, %v3386
        %v3437 = vrot.slane %v3386, 4
        %v3438 = vsel %vm738, %v3398, %v3437
        %v3440 = vunpack.c.l.s4 1934713408
        %v3441 = vunpack.c.0.s8 %v3440
        %v3442 = vperm.slane %v3436, %v3441
        %v3444 = vunpack.c.l.s4 1934713408
        %v3445 = vunpack.c.0.s8 %v3444
        %v3446 = vperm.slane %v3438, %v3445
        %v3447 = vrot.slane %v3430, 4
        %v3448 = vsel %vm738, %v3447, %v3406
        %v3449 = vrot.slane %v3406, 4
        %v3450 = vsel %vm738, %v3430, %v3449
        %v3451 = vrot.slane %v3434, 4
        %v3452 = vsel %vm738, %v3451, %v3410
        %v3453 = vrot.slane %v3410, 4
        %v3454 = vsel %vm738, %v3434, %v3453
        %v3455 = vrot.slane %v3442, 4
        %v3456 = vsel %vm738, %v3455, %v3418
        %v3457 = vrot.slane %v3418, 4
        %v3458 = vsel %vm738, %v3442, %v3457
        %v3459 = vrot.slane %v3446, 4
        %v3460 = vsel %vm738, %v3459, %v3422
        %v3461 = vrot.slane %v3422, 4
        %v3462 = vsel %vm738, %v3446, %v3461
        %3464 = vrot.lane.b32.xlu0 %v3338, 16
        %v3465 = vpop.permute.xlu0 %3464
        %3468 = vrot.lane.b32.xlu0 %v3340, 32
        %v3469 = vpop.permute.xlu0 %3468
        %3472 = vrot.lane.b32.xlu0 %v3342, 48
        %v3473 = vpop.permute.xlu0 %3472
        %3476 = vrot.lane.b32.xlu0 %v3344, 64
        %v3477 = vpop.permute.xlu0 %3476
        %3480 = vrot.lane.b32.xlu0 %v3346, 80
        %v3481 = vpop.permute.xlu0 %3480
        %3484 = vrot.lane.b32.xlu0 %v3348, 96
        %v3485 = vpop.permute.xlu0 %3484
        %3488 = vrot.lane.b32.xlu0 %v3350, 112
        %v3489 = vpop.permute.xlu0 %3488
        %3492 = vrot.lane.b32.xlu0 %v3450, 16
        %v3493 = vpop.permute.xlu0 %3492
        %3496 = vrot.lane.b32.xlu0 %v3452, 32
        %v3497 = vpop.permute.xlu0 %3496
        %3500 = vrot.lane.b32.xlu0 %v3454, 48
        %v3501 = vpop.permute.xlu0 %3500
        %3504 = vrot.lane.b32.xlu0 %v3456, 64
        %v3505 = vpop.permute.xlu0 %3504
        %3508 = vrot.lane.b32.xlu0 %v3458, 80
        %v3509 = vpop.permute.xlu0 %3508
        %3512 = vrot.lane.b32.xlu0 %v3460, 96
        %v3513 = vpop.permute.xlu0 %3512
        %3516 = vrot.lane.b32.xlu0 %v3462, 112
        %v3517 = vpop.permute.xlu0 %3516
        %v3519 = vsel %vm1018, %v3336, %v3465
        %v3520 = vsel %vm1020, %v3519, %v3469
        %v3521 = vsel %vm1022, %v3520, %v3473
        %v3522 = vsel %vm1024, %v3521, %v3477
        %v3523 = vsel %vm1026, %v3522, %v3481
        %v3524 = vsel %vm1028, %v3523, %v3485
        %v3525 = vsel %vm1030, %v3524, %v3489
        %v3526 = vsel %vm1018, %v3448, %v3493
        %v3527 = vsel %vm1020, %v3526, %v3497
        %v3528 = vsel %vm1022, %v3527, %v3501
        %v3529 = vsel %vm1024, %v3528, %v3505
        %v3530 = vsel %vm1026, %v3529, %v3509
        %v3531 = vsel %vm1028, %v3530, %v3513
        %v3532 = vsel %vm1030, %v3531, %v3517
        %3533 = vst [vmem:[#allocation4 + $0x10] sm:$0xff] %v3525
        %3534 = vst [vmem:[#allocation4 + $0x18] sm:$0xff] %v3532
        %3535 = vrot.lane.b32.xlu0 %v2863, 126
        %v3536 = vpop.permute.xlu0 %3535
        %3537 = vrot.lane.b32.xlu0 %v2864, 126
        %v3538 = vpop.permute.xlu0 %3537
        %3539 = vrot.lane.b32.xlu0 %v2865, 126
        %v3540 = vpop.permute.xlu0 %3539
        %3541 = vrot.lane.b32.xlu0 %v2866, 126
        %v3542 = vpop.permute.xlu0 %3541
        %3543 = vrot.lane.b32.xlu0 %v2867, 126
        %v3544 = vpop.permute.xlu0 %3543
        %3545 = vrot.lane.b32.xlu0 %v2868, 126
        %v3546 = vpop.permute.xlu0 %3545
        %3547 = vrot.lane.b32.xlu0 %v2869, 126
        %v3548 = vpop.permute.xlu0 %3547
        %3549 = vrot.lane.b32.xlu0 %v2870, 126
        %v3550 = vpop.permute.xlu0 %3549
        %3551 = vrot.lane.b32.xlu0 %v2871, 126
        %v3552 = vpop.permute.xlu0 %3551
        %3553 = vrot.lane.b32.xlu0 %v2872, 126
        %v3554 = vpop.permute.xlu0 %3553
        %3555 = vrot.lane.b32.xlu0 %v2873, 126
        %v3556 = vpop.permute.xlu0 %3555
        %3557 = vrot.lane.b32.xlu0 %v2874, 126
        %v3558 = vpop.permute.xlu0 %3557
        %3559 = vrot.lane.b32.xlu0 %v2875, 126
        %v3560 = vpop.permute.xlu0 %3559
        %3561 = vrot.lane.b32.xlu0 %v2876, 126
        %v3562 = vpop.permute.xlu0 %3561
        %3563 = vrot.lane.b32.xlu0 %v2877, 126
        %v3564 = vpop.permute.xlu0 %3563
        %3565 = vrot.lane.b32.xlu0 %v2878, 126
        %v3566 = vpop.permute.xlu0 %3565
        %v3583 = vrot.slane %v3544, 4
        %v3584 = vsel %vm738, %v3583, %v3536
        %v3585 = vrot.slane %v3536, 4
        %v3586 = vsel %vm738, %v3544, %v3585
        %v3588 = vunpack.c.l.s4 1983009808
        %v3589 = vunpack.c.0.s8 %v3588
        %v3590 = vperm.slane %v3584, %v3589
        %v3592 = vunpack.c.l.s4 1983009808
        %v3593 = vunpack.c.0.s8 %v3592
        %v3594 = vperm.slane %v3586, %v3593
        %v3595 = vrot.slane %v3548, 4
        %v3596 = vsel %vm738, %v3595, %v3540
        %v3597 = vrot.slane %v3540, 4
        %v3598 = vsel %vm738, %v3548, %v3597
        %v3600 = vunpack.c.l.s4 1983009808
        %v3601 = vunpack.c.0.s8 %v3600
        %v3602 = vperm.slane %v3596, %v3601
        %v3604 = vunpack.c.l.s4 1983009808
        %v3605 = vunpack.c.0.s8 %v3604
        %v3606 = vperm.slane %v3598, %v3605
        %v3607 = vrot.slane %v3560, 4
        %v3608 = vsel %vm738, %v3607, %v3552
        %v3609 = vrot.slane %v3552, 4
        %v3610 = vsel %vm738, %v3560, %v3609
        %v3612 = vunpack.c.l.s4 1983009808
        %v3613 = vunpack.c.0.s8 %v3612
        %v3614 = vperm.slane %v3608, %v3613
        %v3616 = vunpack.c.l.s4 1983009808
        %v3617 = vunpack.c.0.s8 %v3616
        %v3618 = vperm.slane %v3610, %v3617
        %v3619 = vrot.slane %v3564, 4
        %v3620 = vsel %vm738, %v3619, %v3556
        %v3621 = vrot.slane %v3556, 4
        %v3622 = vsel %vm738, %v3564, %v3621
        %v3624 = vunpack.c.l.s4 1983009808
        %v3625 = vunpack.c.0.s8 %v3624
        %v3626 = vperm.slane %v3620, %v3625
        %v3628 = vunpack.c.l.s4 1983009808
        %v3629 = vunpack.c.0.s8 %v3628
        %v3630 = vperm.slane %v3622, %v3629
        %v3631 = vrot.slane %v3602, 4
        %v3632 = vsel %vm738, %v3631, %v3590
        %v3633 = vrot.slane %v3590, 4
        %v3634 = vsel %vm738, %v3602, %v3633
        %v3636 = vunpack.c.l.s4 1934713408
        %v3637 = vunpack.c.0.s8 %v3636
        %v3638 = vperm.slane %v3632, %v3637
        %v3640 = vunpack.c.l.s4 1934713408
        %v3641 = vunpack.c.0.s8 %v3640
        %v3642 = vperm.slane %v3634, %v3641
        %v3643 = vrot.slane %v3606, 4
        %v3644 = vsel %vm738, %v3643, %v3594
        %v3645 = vrot.slane %v3594, 4
        %v3646 = vsel %vm738, %v3606, %v3645
        %v3648 = vunpack.c.l.s4 1934713408
        %v3649 = vunpack.c.0.s8 %v3648
        %v3650 = vperm.slane %v3644, %v3649
        %v3652 = vunpack.c.l.s4 1934713408
        %v3653 = vunpack.c.0.s8 %v3652
        %v3654 = vperm.slane %v3646, %v3653
        %v3655 = vrot.slane %v3626, 4
        %v3656 = vsel %vm738, %v3655, %v3614
        %v3657 = vrot.slane %v3614, 4
        %v3658 = vsel %vm738, %v3626, %v3657
        %v3660 = vunpack.c.l.s4 1934713408
        %v3661 = vunpack.c.0.s8 %v3660
        %v3662 = vperm.slane %v3656, %v3661
        %v3664 = vunpack.c.l.s4 1934713408
        %v3665 = vunpack.c.0.s8 %v3664
        %v3666 = vperm.slane %v3658, %v3665
        %v3667 = vrot.slane %v3630, 4
        %v3668 = vsel %vm738, %v3667, %v3618
        %v3669 = vrot.slane %v3618, 4
        %v3670 = vsel %vm738, %v3630, %v3669
        %v3672 = vunpack.c.l.s4 1934713408
        %v3673 = vunpack.c.0.s8 %v3672
        %v3674 = vperm.slane %v3668, %v3673
        %v3676 = vunpack.c.l.s4 1934713408
        %v3677 = vunpack.c.0.s8 %v3676
        %v3678 = vperm.slane %v3670, %v3677
        %v3679 = vrot.slane %v3662, 4
        %v3680 = vsel %vm738, %v3679, %v3638
        %v3681 = vrot.slane %v3638, 4
        %v3682 = vsel %vm738, %v3662, %v3681
        %v3683 = vrot.slane %v3666, 4
        %v3684 = vsel %vm738, %v3683, %v3642
        %v3685 = vrot.slane %v3642, 4
        %v3686 = vsel %vm738, %v3666, %v3685
        %v3687 = vrot.slane %v3674, 4
        %v3688 = vsel %vm738, %v3687, %v3650
        %v3689 = vrot.slane %v3650, 4
        %v3690 = vsel %vm738, %v3674, %v3689
        %v3691 = vrot.slane %v3678, 4
        %v3692 = vsel %vm738, %v3691, %v3654
        %v3693 = vrot.slane %v3654, 4
        %v3694 = vsel %vm738, %v3678, %v3693
        %v3695 = vrot.slane %v3546, 4
        %v3696 = vsel %vm738, %v3695, %v3538
        %v3697 = vrot.slane %v3538, 4
        %v3698 = vsel %vm738, %v3546, %v3697
        %v3700 = vunpack.c.l.s4 1983009808
        %v3701 = vunpack.c.0.s8 %v3700
        %v3702 = vperm.slane %v3696, %v3701
        %v3704 = vunpack.c.l.s4 1983009808
        %v3705 = vunpack.c.0.s8 %v3704
        %v3706 = vperm.slane %v3698, %v3705
        %v3707 = vrot.slane %v3550, 4
        %v3708 = vsel %vm738, %v3707, %v3542
        %v3709 = vrot.slane %v3542, 4
        %v3710 = vsel %vm738, %v3550, %v3709
        %v3712 = vunpack.c.l.s4 1983009808
        %v3713 = vunpack.c.0.s8 %v3712
        %v3714 = vperm.slane %v3708, %v3713
        %v3716 = vunpack.c.l.s4 1983009808
        %v3717 = vunpack.c.0.s8 %v3716
        %v3718 = vperm.slane %v3710, %v3717
        %v3719 = vrot.slane %v3562, 4
        %v3720 = vsel %vm738, %v3719, %v3554
        %v3721 = vrot.slane %v3554, 4
        %v3722 = vsel %vm738, %v3562, %v3721
        %v3724 = vunpack.c.l.s4 1983009808
        %v3725 = vunpack.c.0.s8 %v3724
        %v3726 = vperm.slane %v3720, %v3725
        %v3728 = vunpack.c.l.s4 1983009808
        %v3729 = vunpack.c.0.s8 %v3728
        %v3730 = vperm.slane %v3722, %v3729
        %v3731 = vrot.slane %v3566, 4
        %v3732 = vsel %vm738, %v3731, %v3558
        %v3733 = vrot.slane %v3558, 4
        %v3734 = vsel %vm738, %v3566, %v3733
        %v3736 = vunpack.c.l.s4 1983009808
        %v3737 = vunpack.c.0.s8 %v3736
        %v3738 = vperm.slane %v3732, %v3737
        %v3740 = vunpack.c.l.s4 1983009808
        %v3741 = vunpack.c.0.s8 %v3740
        %v3742 = vperm.slane %v3734, %v3741
        %v3743 = vrot.slane %v3714, 4
        %v3744 = vsel %vm738, %v3743, %v3702
        %v3745 = vrot.slane %v3702, 4
        %v3746 = vsel %vm738, %v3714, %v3745
        %v3748 = vunpack.c.l.s4 1934713408
        %v3749 = vunpack.c.0.s8 %v3748
        %v3750 = vperm.slane %v3744, %v3749
        %v3752 = vunpack.c.l.s4 1934713408
        %v3753 = vunpack.c.0.s8 %v3752
        %v3754 = vperm.slane %v3746, %v3753
        %v3755 = vrot.slane %v3718, 4
        %v3756 = vsel %vm738, %v3755, %v3706
        %v3757 = vrot.slane %v3706, 4
        %v3758 = vsel %vm738, %v3718, %v3757
        %v3760 = vunpack.c.l.s4 1934713408
        %v3761 = vunpack.c.0.s8 %v3760
        %v3762 = vperm.slane %v3756, %v3761
        %v3764 = vunpack.c.l.s4 1934713408
        %v3765 = vunpack.c.0.s8 %v3764
        %v3766 = vperm.slane %v3758, %v3765
        %v3767 = vrot.slane %v3738, 4
        %v3768 = vsel %vm738, %v3767, %v3726
        %v3769 = vrot.slane %v3726, 4
        %v3770 = vsel %vm738, %v3738, %v3769
        %v3772 = vunpack.c.l.s4 1934713408
        %v3773 = vunpack.c.0.s8 %v3772
        %v3774 = vperm.slane %v3768, %v3773
        %v3776 = vunpack.c.l.s4 1934713408
        %v3777 = vunpack.c.0.s8 %v3776
        %v3778 = vperm.slane %v3770, %v3777
        %v3779 = vrot.slane %v3742, 4
        %v3780 = vsel %vm738, %v3779, %v3730
        %v3781 = vrot.slane %v3730, 4
        %v3782 = vsel %vm738, %v3742, %v3781
        %v3784 = vunpack.c.l.s4 1934713408
        %v3785 = vunpack.c.0.s8 %v3784
        %v3786 = vperm.slane %v3780, %v3785
        %v3788 = vunpack.c.l.s4 1934713408
        %v3789 = vunpack.c.0.s8 %v3788
        %v3790 = vperm.slane %v3782, %v3789
        %v3791 = vrot.slane %v3774, 4
        %v3792 = vsel %vm738, %v3791, %v3750
        %v3793 = vrot.slane %v3750, 4
        %v3794 = vsel %vm738, %v3774, %v3793
        %v3795 = vrot.slane %v3778, 4
        %v3796 = vsel %vm738, %v3795, %v3754
        %v3797 = vrot.slane %v3754, 4
        %v3798 = vsel %vm738, %v3778, %v3797
        %v3799 = vrot.slane %v3786, 4
        %v3800 = vsel %vm738, %v3799, %v3762
        %v3801 = vrot.slane %v3762, 4
        %v3802 = vsel %vm738, %v3786, %v3801
        %v3803 = vrot.slane %v3790, 4
        %v3804 = vsel %vm738, %v3803, %v3766
        %v3805 = vrot.slane %v3766, 4
        %v3806 = vsel %vm738, %v3790, %v3805
        %3808 = vrot.lane.b32.xlu0 %v3682, 16
        %v3809 = vpop.permute.xlu0 %3808
        %3812 = vrot.lane.b32.xlu0 %v3684, 32
        %v3813 = vpop.permute.xlu0 %3812
        %3816 = vrot.lane.b32.xlu0 %v3686, 48
        %v3817 = vpop.permute.xlu0 %3816
        %3820 = vrot.lane.b32.xlu0 %v3688, 64
        %v3821 = vpop.permute.xlu0 %3820
        %3824 = vrot.lane.b32.xlu0 %v3690, 80
        %v3825 = vpop.permute.xlu0 %3824
        %3828 = vrot.lane.b32.xlu0 %v3692, 96
        %v3829 = vpop.permute.xlu0 %3828
        %3832 = vrot.lane.b32.xlu0 %v3694, 112
        %v3833 = vpop.permute.xlu0 %3832
        %3836 = vrot.lane.b32.xlu0 %v3794, 16
        %v3837 = vpop.permute.xlu0 %3836
        %3840 = vrot.lane.b32.xlu0 %v3796, 32
        %v3841 = vpop.permute.xlu0 %3840
        %3844 = vrot.lane.b32.xlu0 %v3798, 48
        %v3845 = vpop.permute.xlu0 %3844
        %3848 = vrot.lane.b32.xlu0 %v3800, 64
        %v3849 = vpop.permute.xlu0 %3848
        %3852 = vrot.lane.b32.xlu0 %v3802, 80
        %v3853 = vpop.permute.xlu0 %3852
        %3856 = vrot.lane.b32.xlu0 %v3804, 96
        %v3857 = vpop.permute.xlu0 %3856
        %3860 = vrot.lane.b32.xlu0 %v3806, 112
        %v3861 = vpop.permute.xlu0 %3860
        %v3863 = vsel %vm1018, %v3680, %v3809
        %v3864 = vsel %vm1020, %v3863, %v3813
        %v3865 = vsel %vm1022, %v3864, %v3817
        %v3866 = vsel %vm1024, %v3865, %v3821
        %v3867 = vsel %vm1026, %v3866, %v3825
        %v3868 = vsel %vm1028, %v3867, %v3829
        %v3869 = vsel %vm1030, %v3868, %v3833
        %v3870 = vsel %vm1018, %v3792, %v3837
        %v3871 = vsel %vm1020, %v3870, %v3841
        %v3872 = vsel %vm1022, %v3871, %v3845
        %v3873 = vsel %vm1024, %v3872, %v3849
        %v3874 = vsel %vm1026, %v3873, %v3853
        %v3875 = vsel %vm1028, %v3874, %v3857
        %v3876 = vsel %vm1030, %v3875, %v3861
        %3877 = vst [vmem:[#allocation4 + $0x20] sm:$0xff] %v3869
        %3878 = vst [vmem:[#allocation4 + $0x28] sm:$0xff] %v3876
        %s3879 = scalar_lea.vmem %s4, 8
        %v3880 = vld [vmem:[%s3879] sm:$0xf]
        %v3881 = vld [vmem:[#allocation4] sm:$0xff]
        %v3882 = vld [vmem:[#allocation4 + $0x8] sm:$0xff]
        %v3883 = vld [vmem:[#allocation4 + $0x10] sm:$0xff]
        %v3884 = vld [vmem:[#allocation4 + $0x18] sm:$0xff]
        %v3885 = vld [vmem:[#allocation4 + $0x20] sm:$0xff]
        %v3886 = vld [vmem:[#allocation4 + $0x28] sm:$0xff]
        %v3888 = vsel %vm2776, %v3880, 0
        %3890 = vmatpush.msra.mxu0 0.0
        %3891 = vmatpush.msra.mxu0 0.0
        %3892 = vmatpush.msra.mxu0 0.0
        %3893 = vmatpush.msra.mxu0 0.0
        %3894 = vmatpush.msra.mxu0 0.0
        %3895 = vmatpush.msra.mxu0 0.0
        %3896 = vmatpush.msra.mxu0 0.0
        %3897 = vmatpush.msra.mxu0 0.0
        %3898 = vmatpush.msra.mxu0 0.0
        %3899 = vmatpush.msra.mxu0 0.0
        %3900 = vmatpush.msra.mxu0 0.0
        %3901 = vmatpush.msra.mxu0 0.0
        %3902 = vmatpush.msra.mxu0 0.0
        %3903 = vmatpush.msra.mxu0 %v3885
        %3904 = vmatpush.msra.mxu0 %v3883
        %3905 = vmatpush.msra.mxu0 %v3881
        %3906 = vmatmul.f32.gmra.mxu0 %v3888
        %v3907 = vpop.f32.mrf.mxu0
        %v3908 = vadd.f32 0.0, %v3907
        %3909 = vdwg.mxu0
        %3910 = vmatpush.msra.mxu0 0.0
        %3911 = vmatpush.msra.mxu0 0.0
        %3912 = vmatpush.msra.mxu0 0.0
        %3913 = vmatpush.msra.mxu0 0.0
        %3914 = vmatpush.msra.mxu0 0.0
        %3915 = vmatpush.msra.mxu0 0.0
        %3916 = vmatpush.msra.mxu0 0.0
        %3917 = vmatpush.msra.mxu0 0.0
        %3918 = vmatpush.msra.mxu0 0.0
        %3919 = vmatpush.msra.mxu0 0.0
        %3920 = vmatpush.msra.mxu0 0.0
        %3921 = vmatpush.msra.mxu0 0.0
        %3922 = vmatpush.msra.mxu0 0.0
        %3923 = vmatpush.msra.mxu0 %v3886
        %3924 = vmatpush.msra.mxu0 %v3884
        %3925 = vmatpush.msra.mxu0 %v3882
        %3926 = vmatmul.f32.gmra.mxu0 %v3888
        %v3927 = vpop.f32.mrf.mxu0
        %v3928 = vadd.f32 0.0, %v3927
        %3929 = vdwg.mxu0
        %v3930 = vadd.f32 %v2841, %v3908
        %v3931 = vadd.f32 %v2861, %v3928
        %v3932 = vld [vmem:[%s5] sm:$0xf]
        %3934 = vset.pattern.permute.xlu0 0
        %3935 = vperm.xlu0 %3934, %v3932
        %v3936 = vpop.permute.xlu0 %3935
        %v3938 = vmul.f32 %v3930, %v3936
        %v3939 = vmul.f32 %v3931, %v3936
        %v3940 = vld [vmem:[%s6] sm:$0xf]
        %3942 = vset.pattern.permute.xlu0 0
        %3943 = vperm.xlu0 %3942, %v3940
        %v3944 = vpop.permute.xlu0 %3943
        %v3946 = vadd.f32 %v3938, %v3944
        %v3947 = vadd.f32 %v3939, %v3944
        %v3948 = vmax.f32 %v3946, 0.0
        %v3949 = vmax.f32 %v3947, 0.0
        %3950 = vst.msk [vmem:[#allocation3] sm:$0x1] %vm457, 0.0
        %3951 = vst.msk [vmem:[#allocation3 + $0x18] sm:$0x1] %vm457, 0.0
        %3952 = vst.msk [vmem:[#allocation3 + $0x30] sm:$0x1] %vm457, 0.0
        %3953 = vst.msk [vmem:[#allocation3 + $0x48] sm:$0x1] %vm457, 0.0
        %3954 = vst.msk [vmem:[#allocation3 + $0x11] sm:$0x1] %vm457, 0.0
        %3955 = vst.msk [vmem:[#allocation3 + $0x29] sm:$0x1] %vm457, 0.0
        %3956 = vst.msk [vmem:[#allocation3 + $0x41] sm:$0x1] %vm457, 0.0
        %3957 = vst.msk [vmem:[#allocation3 + $0x59] sm:$0x1] %vm457, 0.0
        %3958 = vst.msk [vmem:[#allocation3] sm:$0xff] %vm466, 0.0
        %3959 = vst.msk [vmem:[#allocation3 + $0x8] sm:$0xff] %vm466, 0.0
        %3960 = vst.msk [vmem:[#allocation3 + $0x10] sm:$0x3] %vm469, 0.0
        %3961 = vst.msk [vmem:[#allocation3 + $0x18] sm:$0xff] %vm466, 0.0
        %3962 = vst.msk [vmem:[#allocation3 + $0x20] sm:$0xff] %vm466, 0.0
        %3963 = vst.msk [vmem:[#allocation3 + $0x28] sm:$0x3] %vm469, 0.0
        %3964 = vst.msk [vmem:[#allocation3 + $0x30] sm:$0xff] %vm466, 0.0
        %3965 = vst.msk [vmem:[#allocation3 + $0x38] sm:$0xff] %vm466, 0.0
        %3966 = vst.msk [vmem:[#allocation3 + $0x40] sm:$0x3] %vm469, 0.0
        %3967 = vst.msk [vmem:[#allocation3 + $0x48] sm:$0xff] %vm466, 0.0
        %3968 = vst.msk [vmem:[#allocation3 + $0x50] sm:$0xff] %vm466, 0.0
        %3969 = vst.msk [vmem:[#allocation3 + $0x58] sm:$0x3] %vm469, 0.0
        %3970 = vst.msk [vmem:[#allocation3] sm:$0xff] %vm480, 0.0
        %3971 = vst.msk [vmem:[#allocation3 + $0x8] sm:$0xff] %vm480, 0.0
        %3972 = vst.msk [vmem:[#allocation3 + $0x10] sm:$0x3] %vm483, 0.0
        %3973 = vst.msk [vmem:[#allocation3 + $0x18] sm:$0xff] %vm480, 0.0
        %3974 = vst.msk [vmem:[#allocation3 + $0x20] sm:$0xff] %vm480, 0.0
        %3975 = vst.msk [vmem:[#allocation3 + $0x28] sm:$0x3] %vm483, 0.0
        %3976 = vst.msk [vmem:[#allocation3 + $0x30] sm:$0xff] %vm480, 0.0
        %3977 = vst.msk [vmem:[#allocation3 + $0x38] sm:$0xff] %vm480, 0.0
        %3978 = vst.msk [vmem:[#allocation3 + $0x40] sm:$0x3] %vm483, 0.0
        %3979 = vst.msk [vmem:[#allocation3 + $0x48] sm:$0xff] %vm480, 0.0
        %3980 = vst.msk [vmem:[#allocation3 + $0x50] sm:$0xff] %vm480, 0.0
        %3981 = vst.msk [vmem:[#allocation3 + $0x58] sm:$0x3] %vm483, 0.0
        %3983 = vrot.lane.b32.xlu0 %v3948, 112
        %v3984 = vpop.permute.xlu0 %3983
        %3986 = vrot.lane.b32.xlu0 %v3948, 96
        %v3987 = vpop.permute.xlu0 %3986
        %3989 = vrot.lane.b32.xlu0 %v3948, 80
        %v3990 = vpop.permute.xlu0 %3989
        %3992 = vrot.lane.b32.xlu0 %v3948, 64
        %v3993 = vpop.permute.xlu0 %3992
        %3995 = vrot.lane.b32.xlu0 %v3948, 48
        %v3996 = vpop.permute.xlu0 %3995
        %3998 = vrot.lane.b32.xlu0 %v3948, 32
        %v3999 = vpop.permute.xlu0 %3998
        %4001 = vrot.lane.b32.xlu0 %v3948, 16
        %v4002 = vpop.permute.xlu0 %4001
        %4005 = vrot.lane.b32.xlu0 %v3949, 112
        %v4006 = vpop.permute.xlu0 %4005
        %4008 = vrot.lane.b32.xlu0 %v3949, 96
        %v4009 = vpop.permute.xlu0 %4008
        %4011 = vrot.lane.b32.xlu0 %v3949, 80
        %v4012 = vpop.permute.xlu0 %4011
        %4014 = vrot.lane.b32.xlu0 %v3949, 64
        %v4015 = vpop.permute.xlu0 %4014
        %4017 = vrot.lane.b32.xlu0 %v3949, 48
        %v4018 = vpop.permute.xlu0 %4017
        %4020 = vrot.lane.b32.xlu0 %v3949, 32
        %v4021 = vpop.permute.xlu0 %4020
        %4023 = vrot.lane.b32.xlu0 %v3949, 16
        %v4024 = vpop.permute.xlu0 %4023
        %v4026 = vrot.slane %v3987, 4
        %v4027 = vsel %vm738, %v4026, %v3948
        %v4029 = vunpack.c.l.s4 1983009808
        %v4030 = vunpack.c.0.s8 %v4029
        %v4031 = vperm.slane %v4027, %v4030
        %v4032 = vrot.slane %v3990, 4
        %v4033 = vsel %vm738, %v4032, %v3984
        %v4035 = vunpack.c.l.s4 1983009808
        %v4036 = vunpack.c.0.s8 %v4035
        %v4037 = vperm.slane %v4033, %v4036
        %v4038 = vrot.slane %v3999, 4
        %v4039 = vsel %vm738, %v4038, %v3993
        %v4041 = vunpack.c.l.s4 1983009808
        %v4042 = vunpack.c.0.s8 %v4041
        %v4043 = vperm.slane %v4039, %v4042
        %v4044 = vrot.slane %v4002, 4
        %v4045 = vsel %vm738, %v4044, %v3996
        %v4047 = vunpack.c.l.s4 1983009808
        %v4048 = vunpack.c.0.s8 %v4047
        %v4049 = vperm.slane %v4045, %v4048
        %v4050 = vrot.slane %v4037, 4
        %v4051 = vsel %vm738, %v4050, %v4031
        %v4052 = vrot.slane %v4031, 4
        %v4053 = vsel %vm738, %v4037, %v4052
        %v4055 = vunpack.c.l.s4 1934713408
        %v4056 = vunpack.c.0.s8 %v4055
        %v4057 = vperm.slane %v4051, %v4056
        %v4059 = vunpack.c.l.s4 1934713408
        %v4060 = vunpack.c.0.s8 %v4059
        %v4061 = vperm.slane %v4053, %v4060
        %v4062 = vrot.slane %v4049, 4
        %v4063 = vsel %vm738, %v4062, %v4043
        %v4064 = vrot.slane %v4043, 4
        %v4065 = vsel %vm738, %v4049, %v4064
        %v4067 = vunpack.c.l.s4 1934713408
        %v4068 = vunpack.c.0.s8 %v4067
        %v4069 = vperm.slane %v4063, %v4068
        %v4071 = vunpack.c.l.s4 1934713408
        %v4072 = vunpack.c.0.s8 %v4071
        %v4073 = vperm.slane %v4065, %v4072
        %v4074 = vrot.slane %v4069, 4
        %v4075 = vsel %vm738, %v4074, %v4057
        %v4076 = vrot.slane %v4057, 4
        %v4077 = vsel %vm738, %v4069, %v4076
        %v4078 = vrot.slane %v4073, 4
        %v4079 = vsel %vm738, %v4078, %v4061
        %v4080 = vrot.slane %v4061, 4
        %v4081 = vsel %vm738, %v4073, %v4080
        %v4082 = vrot.slane %v4009, 4
        %v4083 = vsel %vm738, %v4082, %v3949
        %v4085 = vunpack.c.l.s4 1983009808
        %v4086 = vunpack.c.0.s8 %v4085
        %v4087 = vperm.slane %v4083, %v4086
        %v4088 = vrot.slane %v4012, 4
        %v4089 = vsel %vm738, %v4088, %v4006
        %v4091 = vunpack.c.l.s4 1983009808
        %v4092 = vunpack.c.0.s8 %v4091
        %v4093 = vperm.slane %v4089, %v4092
        %v4094 = vrot.slane %v4021, 4
        %v4095 = vsel %vm738, %v4094, %v4015
        %v4097 = vunpack.c.l.s4 1983009808
        %v4098 = vunpack.c.0.s8 %v4097
        %v4099 = vperm.slane %v4095, %v4098
        %v4100 = vrot.slane %v4024, 4
        %v4101 = vsel %vm738, %v4100, %v4018
        %v4103 = vunpack.c.l.s4 1983009808
        %v4104 = vunpack.c.0.s8 %v4103
        %v4105 = vperm.slane %v4101, %v4104
        %v4106 = vrot.slane %v4093, 4
        %v4107 = vsel %vm738, %v4106, %v4087
        %v4108 = vrot.slane %v4087, 4
        %v4109 = vsel %vm738, %v4093, %v4108
        %v4111 = vunpack.c.l.s4 1934713408
        %v4112 = vunpack.c.0.s8 %v4111
        %v4113 = vperm.slane %v4107, %v4112
        %v4115 = vunpack.c.l.s4 1934713408
        %v4116 = vunpack.c.0.s8 %v4115
        %v4117 = vperm.slane %v4109, %v4116
        %v4118 = vrot.slane %v4105, 4
        %v4119 = vsel %vm738, %v4118, %v4099
        %v4120 = vrot.slane %v4099, 4
        %v4121 = vsel %vm738, %v4105, %v4120
        %v4123 = vunpack.c.l.s4 1934713408
        %v4124 = vunpack.c.0.s8 %v4123
        %v4125 = vperm.slane %v4119, %v4124
        %v4127 = vunpack.c.l.s4 1934713408
        %v4128 = vunpack.c.0.s8 %v4127
        %v4129 = vperm.slane %v4121, %v4128
        %v4130 = vrot.slane %v4125, 4
        %v4131 = vsel %vm738, %v4130, %v4113
        %v4132 = vrot.slane %v4113, 4
        %v4133 = vsel %vm738, %v4125, %v4132
        %v4134 = vrot.slane %v4129, 4
        %v4135 = vsel %vm738, %v4134, %v4117
        %v4136 = vrot.slane %v4117, 4
        %v4137 = vsel %vm738, %v4129, %v4136
        %4146 = vrot.lane.b32.xlu0 %v4075, 1
        %v4147 = vpop.permute.xlu0 %4146
        %4148 = vrot.lane.b32.xlu0 %v4131, 1
        %v4149 = vpop.permute.xlu0 %4148
        %4150 = vrot.lane.b32.xlu0 %v4077, 1
        %v4151 = vpop.permute.xlu0 %4150
        %4152 = vrot.lane.b32.xlu0 %v4133, 1
        %v4153 = vpop.permute.xlu0 %4152
        %4154 = vrot.lane.b32.xlu0 %v4079, 1
        %v4155 = vpop.permute.xlu0 %4154
        %4156 = vrot.lane.b32.xlu0 %v4135, 1
        %v4157 = vpop.permute.xlu0 %4156
        %4158 = vrot.lane.b32.xlu0 %v4081, 1
        %v4159 = vpop.permute.xlu0 %4158
        %4160 = vrot.lane.b32.xlu0 %v4137, 1
        %v4161 = vpop.permute.xlu0 %4160
        %4170 = vst.msk [vmem:[#allocation3 + $0x1] sm:$0xff] %vm534, %v4147
        %4171 = vst.msk [vmem:[#allocation3 + $0x9] sm:$0xff] %vm534, %v4149
        %4172 = vst.msk [vmem:[#allocation3 + $0x19] sm:$0xff] %vm534, %v4151
        %4173 = vst.msk [vmem:[#allocation3 + $0x21] sm:$0xff] %vm534, %v4153
        %4174 = vst.msk [vmem:[#allocation3 + $0x31] sm:$0xff] %vm534, %v4155
        %4175 = vst.msk [vmem:[#allocation3 + $0x39] sm:$0xff] %vm534, %v4157
        %4176 = vst.msk [vmem:[#allocation3 + $0x49] sm:$0xff] %vm534, %v4159
        %4177 = vst.msk [vmem:[#allocation3 + $0x51] sm:$0xff] %vm534, %v4161
        %v4178 = vld [vmem:[#allocation3] sm:$0xff]
        %v4179 = vld [vmem:[#allocation3 + $0x8] sm:$0xff]
        %v4180 = vld [vmem:[#allocation3 + $0x18] sm:$0xff]
        %v4181 = vld [vmem:[#allocation3 + $0x20] sm:$0xff]
        %v4182 = vld [vmem:[#allocation3 + $0x30] sm:$0xff]
        %v4183 = vld [vmem:[#allocation3 + $0x38] sm:$0xff]
        %v4184 = vld [vmem:[#allocation3 + $0x48] sm:$0xff]
        %v4185 = vld [vmem:[#allocation3 + $0x50] sm:$0xff]
        %v4186 = vrot.slane %v4182, 4
        %v4187 = vsel %vm738, %v4186, %v4178
        %v4188 = vrot.slane %v4178, 4
        %v4189 = vsel %vm738, %v4182, %v4188
        %v4191 = vunpack.c.l.s4 1983009808
        %v4192 = vunpack.c.0.s8 %v4191
        %v4193 = vperm.slane %v4187, %v4192
        %v4195 = vunpack.c.l.s4 1983009808
        %v4196 = vunpack.c.0.s8 %v4195
        %v4197 = vperm.slane %v4189, %v4196
        %v4198 = vrot.slane %v4184, 4
        %v4199 = vsel %vm738, %v4198, %v4180
        %v4200 = vrot.slane %v4180, 4
        %v4201 = vsel %vm738, %v4184, %v4200
        %v4203 = vunpack.c.l.s4 1983009808
        %v4204 = vunpack.c.0.s8 %v4203
        %v4205 = vperm.slane %v4199, %v4204
        %v4207 = vunpack.c.l.s4 1983009808
        %v4208 = vunpack.c.0.s8 %v4207
        %v4209 = vperm.slane %v4201, %v4208
        %v4210 = vrot.slane %v4205, 4
        %v4211 = vsel %vm738, %v4210, %v4193
        %v4212 = vrot.slane %v4193, 4
        %v4213 = vsel %vm738, %v4205, %v4212
        %v4215 = vunpack.c.l.s4 1934713408
        %v4216 = vunpack.c.0.s8 %v4215
        %v4217 = vperm.slane %v4211, %v4216
        %v4219 = vunpack.c.l.s4 1934713408
        %v4220 = vunpack.c.0.s8 %v4219
        %v4221 = vperm.slane %v4213, %v4220
        %v4222 = vrot.slane %v4209, 4
        %v4223 = vsel %vm738, %v4222, %v4197
        %v4224 = vrot.slane %v4197, 4
        %v4225 = vsel %vm738, %v4209, %v4224
        %v4227 = vunpack.c.l.s4 1934713408
        %v4228 = vunpack.c.0.s8 %v4227
        %v4229 = vperm.slane %v4223, %v4228
        %v4231 = vunpack.c.l.s4 1934713408
        %v4232 = vunpack.c.0.s8 %v4231
        %v4233 = vperm.slane %v4225, %v4232
        %v4234 = vrot.slane %v4217, 4
        %v4235 = vsel %vm738, 0.0, %v4234
        %v4236 = vrot.slane %v4221, 4
        %v4237 = vsel %vm738, 0.0, %v4236
        %v4238 = vrot.slane %v4229, 4
        %v4239 = vsel %vm738, 0.0, %v4238
        %v4240 = vrot.slane %v4233, 4
        %v4241 = vsel %vm738, 0.0, %v4240
        %v4242 = vrot.slane %v4183, 4
        %v4243 = vsel %vm738, %v4242, %v4179
        %v4244 = vrot.slane %v4179, 4
        %v4245 = vsel %vm738, %v4183, %v4244
        %v4247 = vunpack.c.l.s4 1983009808
        %v4248 = vunpack.c.0.s8 %v4247
        %v4249 = vperm.slane %v4243, %v4248
        %v4251 = vunpack.c.l.s4 1983009808
        %v4252 = vunpack.c.0.s8 %v4251
        %v4253 = vperm.slane %v4245, %v4252
        %v4254 = vrot.slane %v4185, 4
        %v4255 = vsel %vm738, %v4254, %v4181
        %v4256 = vrot.slane %v4181, 4
        %v4257 = vsel %vm738, %v4185, %v4256
        %v4259 = vunpack.c.l.s4 1983009808
        %v4260 = vunpack.c.0.s8 %v4259
        %v4261 = vperm.slane %v4255, %v4260
        %v4263 = vunpack.c.l.s4 1983009808
        %v4264 = vunpack.c.0.s8 %v4263
        %v4265 = vperm.slane %v4257, %v4264
        %v4266 = vrot.slane %v4261, 4
        %v4267 = vsel %vm738, %v4266, %v4249
        %v4268 = vrot.slane %v4249, 4
        %v4269 = vsel %vm738, %v4261, %v4268
        %v4271 = vunpack.c.l.s4 1934713408
        %v4272 = vunpack.c.0.s8 %v4271
        %v4273 = vperm.slane %v4267, %v4272
        %v4275 = vunpack.c.l.s4 1934713408
        %v4276 = vunpack.c.0.s8 %v4275
        %v4277 = vperm.slane %v4269, %v4276
        %v4278 = vrot.slane %v4265, 4
        %v4279 = vsel %vm738, %v4278, %v4253
        %v4280 = vrot.slane %v4253, 4
        %v4281 = vsel %vm738, %v4265, %v4280
        %v4283 = vunpack.c.l.s4 1934713408
        %v4284 = vunpack.c.0.s8 %v4283
        %v4285 = vperm.slane %v4279, %v4284
        %v4287 = vunpack.c.l.s4 1934713408
        %v4288 = vunpack.c.0.s8 %v4287
        %v4289 = vperm.slane %v4281, %v4288
        %v4290 = vrot.slane %v4273, 4
        %v4291 = vsel %vm738, 0.0, %v4290
        %v4292 = vrot.slane %v4277, 4
        %v4293 = vsel %vm738, 0.0, %v4292
        %v4294 = vrot.slane %v4285, 4
        %v4295 = vsel %vm738, 0.0, %v4294
        %v4296 = vrot.slane %v4289, 4
        %v4297 = vsel %vm738, 0.0, %v4296
        %4299 = vrot.lane.b32.xlu0 %v4235, 16
        %v4300 = vpop.permute.xlu0 %4299
        %4303 = vrot.lane.b32.xlu0 %v4221, 32
        %v4304 = vpop.permute.xlu0 %4303
        %4307 = vrot.lane.b32.xlu0 %v4237, 48
        %v4308 = vpop.permute.xlu0 %4307
        %4311 = vrot.lane.b32.xlu0 %v4229, 64
        %v4312 = vpop.permute.xlu0 %4311
        %4315 = vrot.lane.b32.xlu0 %v4239, 80
        %v4316 = vpop.permute.xlu0 %4315
        %4319 = vrot.lane.b32.xlu0 %v4233, 96
        %v4320 = vpop.permute.xlu0 %4319
        %4323 = vrot.lane.b32.xlu0 %v4241, 112
        %v4324 = vpop.permute.xlu0 %4323
        %4327 = vrot.lane.b32.xlu0 %v4291, 16
        %v4328 = vpop.permute.xlu0 %4327
        %4331 = vrot.lane.b32.xlu0 %v4277, 32
        %v4332 = vpop.permute.xlu0 %4331
        %4335 = vrot.lane.b32.xlu0 %v4293, 48
        %v4336 = vpop.permute.xlu0 %4335
        %4339 = vrot.lane.b32.xlu0 %v4285, 64
        %v4340 = vpop.permute.xlu0 %4339
        %4343 = vrot.lane.b32.xlu0 %v4295, 80
        %v4344 = vpop.permute.xlu0 %4343
        %4347 = vrot.lane.b32.xlu0 %v4289, 96
        %v4348 = vpop.permute.xlu0 %4347
        %4351 = vrot.lane.b32.xlu0 %v4297, 112
        %v4352 = vpop.permute.xlu0 %4351
        %v4354 = vsel %vm1018, %v4217, %v4300
        %v4355 = vsel %vm1020, %v4354, %v4304
        %v4356 = vsel %vm1022, %v4355, %v4308
        %v4357 = vsel %vm1024, %v4356, %v4312
        %v4358 = vsel %vm1026, %v4357, %v4316
        %v4359 = vsel %vm1028, %v4358, %v4320
        %v4360 = vsel %vm1030, %v4359, %v4324
        %v4361 = vsel %vm1018, %v4273, %v4328
        %v4362 = vsel %vm1020, %v4361, %v4332
        %v4363 = vsel %vm1022, %v4362, %v4336
        %v4364 = vsel %vm1024, %v4363, %v4340
        %v4365 = vsel %vm1026, %v4364, %v4344
        %v4366 = vsel %vm1028, %v4365, %v4348
        %v4367 = vsel %vm1030, %v4366, %v4352
        %4368 = vst [vmem:[#allocation4] sm:$0xf] %v4360
        %4369 = vst [vmem:[#allocation4 + $0x8] sm:$0xf] %v4367
        %4378 = vrot.lane.b32.xlu0 %v4178, 127
        %v4379 = vpop.permute.xlu0 %4378
        %4380 = vrot.lane.b32.xlu0 %v4179, 127
        %v4381 = vpop.permute.xlu0 %4380
        %4382 = vrot.lane.b32.xlu0 %v4180, 127
        %v4383 = vpop.permute.xlu0 %4382
        %4384 = vrot.lane.b32.xlu0 %v4181, 127
        %v4385 = vpop.permute.xlu0 %4384
        %4386 = vrot.lane.b32.xlu0 %v4182, 127
        %v4387 = vpop.permute.xlu0 %4386
        %4388 = vrot.lane.b32.xlu0 %v4183, 127
        %v4389 = vpop.permute.xlu0 %4388
        %4390 = vrot.lane.b32.xlu0 %v4184, 127
        %v4391 = vpop.permute.xlu0 %4390
        %4392 = vrot.lane.b32.xlu0 %v4185, 127
        %v4393 = vpop.permute.xlu0 %4392
        %v4402 = vrot.slane %v4387, 4
        %v4403 = vsel %vm738, %v4402, %v4379
        %v4404 = vrot.slane %v4379, 4
        %v4405 = vsel %vm738, %v4387, %v4404
        %v4407 = vunpack.c.l.s4 1983009808
        %v4408 = vunpack.c.0.s8 %v4407
        %v4409 = vperm.slane %v4403, %v4408
        %v4411 = vunpack.c.l.s4 1983009808
        %v4412 = vunpack.c.0.s8 %v4411
        %v4413 = vperm.slane %v4405, %v4412
        %v4414 = vrot.slane %v4391, 4
        %v4415 = vsel %vm738, %v4414, %v4383
        %v4416 = vrot.slane %v4383, 4
        %v4417 = vsel %vm738, %v4391, %v4416
        %v4419 = vunpack.c.l.s4 1983009808
        %v4420 = vunpack.c.0.s8 %v4419
        %v4421 = vperm.slane %v4415, %v4420
        %v4423 = vunpack.c.l.s4 1983009808
        %v4424 = vunpack.c.0.s8 %v4423
        %v4425 = vperm.slane %v4417, %v4424
        %v4426 = vrot.slane %v4421, 4
        %v4427 = vsel %vm738, %v4426, %v4409
        %v4428 = vrot.slane %v4409, 4
        %v4429 = vsel %vm738, %v4421, %v4428
        %v4431 = vunpack.c.l.s4 1934713408
        %v4432 = vunpack.c.0.s8 %v4431
        %v4433 = vperm.slane %v4427, %v4432
        %v4435 = vunpack.c.l.s4 1934713408
        %v4436 = vunpack.c.0.s8 %v4435
        %v4437 = vperm.slane %v4429, %v4436
        %v4438 = vrot.slane %v4425, 4
        %v4439 = vsel %vm738, %v4438, %v4413
        %v4440 = vrot.slane %v4413, 4
        %v4441 = vsel %vm738, %v4425, %v4440
        %v4443 = vunpack.c.l.s4 1934713408
        %v4444 = vunpack.c.0.s8 %v4443
        %v4445 = vperm.slane %v4439, %v4444
        %v4447 = vunpack.c.l.s4 1934713408
        %v4448 = vunpack.c.0.s8 %v4447
        %v4449 = vperm.slane %v4441, %v4448
        %v4450 = vrot.slane %v4433, 4
        %v4451 = vsel %vm738, 0.0, %v4450
        %v4452 = vrot.slane %v4437, 4
        %v4453 = vsel %vm738, 0.0, %v4452
        %v4454 = vrot.slane %v4445, 4
        %v4455 = vsel %vm738, 0.0, %v4454
        %v4456 = vrot.slane %v4449, 4
        %v4457 = vsel %vm738, 0.0, %v4456
        %v4458 = vrot.slane %v4389, 4
        %v4459 = vsel %vm738, %v4458, %v4381
        %v4460 = vrot.slane %v4381, 4
        %v4461 = vsel %vm738, %v4389, %v4460
        %v4463 = vunpack.c.l.s4 1983009808
        %v4464 = vunpack.c.0.s8 %v4463
        %v4465 = vperm.slane %v4459, %v4464
        %v4467 = vunpack.c.l.s4 1983009808
        %v4468 = vunpack.c.0.s8 %v4467
        %v4469 = vperm.slane %v4461, %v4468
        %v4470 = vrot.slane %v4393, 4
        %v4471 = vsel %vm738, %v4470, %v4385
        %v4472 = vrot.slane %v4385, 4
        %v4473 = vsel %vm738, %v4393, %v4472
        %v4475 = vunpack.c.l.s4 1983009808
        %v4476 = vunpack.c.0.s8 %v4475
        %v4477 = vperm.slane %v4471, %v4476
        %v4479 = vunpack.c.l.s4 1983009808
        %v4480 = vunpack.c.0.s8 %v4479
        %v4481 = vperm.slane %v4473, %v4480
        %v4482 = vrot.slane %v4477, 4
        %v4483 = vsel %vm738, %v4482, %v4465
        %v4484 = vrot.slane %v4465, 4
        %v4485 = vsel %vm738, %v4477, %v4484
        %v4487 = vunpack.c.l.s4 1934713408
        %v4488 = vunpack.c.0.s8 %v4487
        %v4489 = vperm.slane %v4483, %v4488
        %v4491 = vunpack.c.l.s4 1934713408
        %v4492 = vunpack.c.0.s8 %v4491
        %v4493 = vperm.slane %v4485, %v4492
        %v4494 = vrot.slane %v4481, 4
        %v4495 = vsel %vm738, %v4494, %v4469
        %v4496 = vrot.slane %v4469, 4
        %v4497 = vsel %vm738, %v4481, %v4496
        %v4499 = vunpack.c.l.s4 1934713408
        %v4500 = vunpack.c.0.s8 %v4499
        %v4501 = vperm.slane %v4495, %v4500
        %v4503 = vunpack.c.l.s4 1934713408
        %v4504 = vunpack.c.0.s8 %v4503
        %v4505 = vperm.slane %v4497, %v4504
        %v4506 = vrot.slane %v4489, 4
        %v4507 = vsel %vm738, 0.0, %v4506
        %v4508 = vrot.slane %v4493, 4
        %v4509 = vsel %vm738, 0.0, %v4508
        %v4510 = vrot.slane %v4501, 4
        %v4511 = vsel %vm738, 0.0, %v4510
        %v4512 = vrot.slane %v4505, 4
        %v4513 = vsel %vm738, 0.0, %v4512
        %4515 = vrot.lane.b32.xlu0 %v4451, 16
        %v4516 = vpop.permute.xlu0 %4515
        %4519 = vrot.lane.b32.xlu0 %v4437, 32
        %v4520 = vpop.permute.xlu0 %4519
        %4523 = vrot.lane.b32.xlu0 %v4453, 48
        %v4524 = vpop.permute.xlu0 %4523
        %4527 = vrot.lane.b32.xlu0 %v4445, 64
        %v4528 = vpop.permute.xlu0 %4527
        %4531 = vrot.lane.b32.xlu0 %v4455, 80
        %v4532 = vpop.permute.xlu0 %4531
        %4535 = vrot.lane.b32.xlu0 %v4449, 96
        %v4536 = vpop.permute.xlu0 %4535
        %4539 = vrot.lane.b32.xlu0 %v4457, 112
        %v4540 = vpop.permute.xlu0 %4539
        %4543 = vrot.lane.b32.xlu0 %v4507, 16
        %v4544 = vpop.permute.xlu0 %4543
        %4547 = vrot.lane.b32.xlu0 %v4493, 32
        %v4548 = vpop.permute.xlu0 %4547
        %4551 = vrot.lane.b32.xlu0 %v4509, 48
        %v4552 = vpop.permute.xlu0 %4551
        %4555 = vrot.lane.b32.xlu0 %v4501, 64
        %v4556 = vpop.permute.xlu0 %4555
        %4559 = vrot.lane.b32.xlu0 %v4511, 80
        %v4560 = vpop.permute.xlu0 %4559
        %4563 = vrot.lane.b32.xlu0 %v4505, 96
        %v4564 = vpop.permute.xlu0 %4563
        %4567 = vrot.lane.b32.xlu0 %v4513, 112
        %v4568 = vpop.permute.xlu0 %4567
        %v4570 = vsel %vm1018, %v4433, %v4516
        %v4571 = vsel %vm1020, %v4570, %v4520
        %v4572 = vsel %vm1022, %v4571, %v4524
        %v4573 = vsel %vm1024, %v4572, %v4528
        %v4574 = vsel %vm1026, %v4573, %v4532
        %v4575 = vsel %vm1028, %v4574, %v4536
        %v4576 = vsel %vm1030, %v4575, %v4540
        %v4577 = vsel %vm1018, %v4489, %v4544
        %v4578 = vsel %vm1020, %v4577, %v4548
        %v4579 = vsel %vm1022, %v4578, %v4552
        %v4580 = vsel %vm1024, %v4579, %v4556
        %v4581 = vsel %vm1026, %v4580, %v4560
        %v4582 = vsel %vm1028, %v4581, %v4564
        %v4583 = vsel %vm1030, %v4582, %v4568
        %v4586 = vrot.slane %v4576, 4
        %v4587 = vrot.slane %v4583, 4
        %4590 = vst [vmem:[#allocation4] sm:$0xf0] %v4586
        %4591 = vst [vmem:[#allocation4 + $0x8] sm:$0xf0] %v4587
        %4592 = vrot.lane.b32.xlu0 %v4178, 126
        %v4593 = vpop.permute.xlu0 %4592
        %4594 = vrot.lane.b32.xlu0 %v4179, 126
        %v4595 = vpop.permute.xlu0 %4594
        %4596 = vrot.lane.b32.xlu0 %v4180, 126
        %v4597 = vpop.permute.xlu0 %4596
        %4598 = vrot.lane.b32.xlu0 %v4181, 126
        %v4599 = vpop.permute.xlu0 %4598
        %4600 = vrot.lane.b32.xlu0 %v4182, 126
        %v4601 = vpop.permute.xlu0 %4600
        %4602 = vrot.lane.b32.xlu0 %v4183, 126
        %v4603 = vpop.permute.xlu0 %4602
        %4604 = vrot.lane.b32.xlu0 %v4184, 126
        %v4605 = vpop.permute.xlu0 %4604
        %4606 = vrot.lane.b32.xlu0 %v4185, 126
        %v4607 = vpop.permute.xlu0 %4606
        %v4616 = vrot.slane %v4601, 4
        %v4617 = vsel %vm738, %v4616, %v4593
        %v4618 = vrot.slane %v4593, 4
        %v4619 = vsel %vm738, %v4601, %v4618
        %v4621 = vunpack.c.l.s4 1983009808
        %v4622 = vunpack.c.0.s8 %v4621
        %v4623 = vperm.slane %v4617, %v4622
        %v4625 = vunpack.c.l.s4 1983009808
        %v4626 = vunpack.c.0.s8 %v4625
        %v4627 = vperm.slane %v4619, %v4626
        %v4628 = vrot.slane %v4605, 4
        %v4629 = vsel %vm738, %v4628, %v4597
        %v4630 = vrot.slane %v4597, 4
        %v4631 = vsel %vm738, %v4605, %v4630
        %v4633 = vunpack.c.l.s4 1983009808
        %v4634 = vunpack.c.0.s8 %v4633
        %v4635 = vperm.slane %v4629, %v4634
        %v4637 = vunpack.c.l.s4 1983009808
        %v4638 = vunpack.c.0.s8 %v4637
        %v4639 = vperm.slane %v4631, %v4638
        %v4640 = vrot.slane %v4635, 4
        %v4641 = vsel %vm738, %v4640, %v4623
        %v4642 = vrot.slane %v4623, 4
        %v4643 = vsel %vm738, %v4635, %v4642
        %v4645 = vunpack.c.l.s4 1934713408
        %v4646 = vunpack.c.0.s8 %v4645
        %v4647 = vperm.slane %v4641, %v4646
        %v4649 = vunpack.c.l.s4 1934713408
        %v4650 = vunpack.c.0.s8 %v4649
        %v4651 = vperm.slane %v4643, %v4650
        %v4652 = vrot.slane %v4639, 4
        %v4653 = vsel %vm738, %v4652, %v4627
        %v4654 = vrot.slane %v4627, 4
        %v4655 = vsel %vm738, %v4639, %v4654
        %v4657 = vunpack.c.l.s4 1934713408
        %v4658 = vunpack.c.0.s8 %v4657
        %v4659 = vperm.slane %v4653, %v4658
        %v4661 = vunpack.c.l.s4 1934713408
        %v4662 = vunpack.c.0.s8 %v4661
        %v4663 = vperm.slane %v4655, %v4662
        %v4664 = vrot.slane %v4647, 4
        %v4665 = vsel %vm738, 0.0, %v4664
        %v4666 = vrot.slane %v4651, 4
        %v4667 = vsel %vm738, 0.0, %v4666
        %v4668 = vrot.slane %v4659, 4
        %v4669 = vsel %vm738, 0.0, %v4668
        %v4670 = vrot.slane %v4663, 4
        %v4671 = vsel %vm738, 0.0, %v4670
        %v4672 = vrot.slane %v4603, 4
        %v4673 = vsel %vm738, %v4672, %v4595
        %v4674 = vrot.slane %v4595, 4
        %v4675 = vsel %vm738, %v4603, %v4674
        %v4677 = vunpack.c.l.s4 1983009808
        %v4678 = vunpack.c.0.s8 %v4677
        %v4679 = vperm.slane %v4673, %v4678
        %v4681 = vunpack.c.l.s4 1983009808
        %v4682 = vunpack.c.0.s8 %v4681
        %v4683 = vperm.slane %v4675, %v4682
        %v4684 = vrot.slane %v4607, 4
        %v4685 = vsel %vm738, %v4684, %v4599
        %v4686 = vrot.slane %v4599, 4
        %v4687 = vsel %vm738, %v4607, %v4686
        %v4689 = vunpack.c.l.s4 1983009808
        %v4690 = vunpack.c.0.s8 %v4689
        %v4691 = vperm.slane %v4685, %v4690
        %v4693 = vunpack.c.l.s4 1983009808
        %v4694 = vunpack.c.0.s8 %v4693
        %v4695 = vperm.slane %v4687, %v4694
        %v4696 = vrot.slane %v4691, 4
        %v4697 = vsel %vm738, %v4696, %v4679
        %v4698 = vrot.slane %v4679, 4
        %v4699 = vsel %vm738, %v4691, %v4698
        %v4701 = vunpack.c.l.s4 1934713408
        %v4702 = vunpack.c.0.s8 %v4701
        %v4703 = vperm.slane %v4697, %v4702
        %v4705 = vunpack.c.l.s4 1934713408
        %v4706 = vunpack.c.0.s8 %v4705
        %v4707 = vperm.slane %v4699, %v4706
        %v4708 = vrot.slane %v4695, 4
        %v4709 = vsel %vm738, %v4708, %v4683
        %v4710 = vrot.slane %v4683, 4
        %v4711 = vsel %vm738, %v4695, %v4710
        %v4713 = vunpack.c.l.s4 1934713408
        %v4714 = vunpack.c.0.s8 %v4713
        %v4715 = vperm.slane %v4709, %v4714
        %v4717 = vunpack.c.l.s4 1934713408
        %v4718 = vunpack.c.0.s8 %v4717
        %v4719 = vperm.slane %v4711, %v4718
        %v4720 = vrot.slane %v4703, 4
        %v4721 = vsel %vm738, 0.0, %v4720
        %v4722 = vrot.slane %v4707, 4
        %v4723 = vsel %vm738, 0.0, %v4722
        %v4724 = vrot.slane %v4715, 4
        %v4725 = vsel %vm738, 0.0, %v4724
        %v4726 = vrot.slane %v4719, 4
        %v4727 = vsel %vm738, 0.0, %v4726
        %4729 = vrot.lane.b32.xlu0 %v4665, 16
        %v4730 = vpop.permute.xlu0 %4729
        %4733 = vrot.lane.b32.xlu0 %v4651, 32
        %v4734 = vpop.permute.xlu0 %4733
        %4737 = vrot.lane.b32.xlu0 %v4667, 48
        %v4738 = vpop.permute.xlu0 %4737
        %4741 = vrot.lane.b32.xlu0 %v4659, 64
        %v4742 = vpop.permute.xlu0 %4741
        %4745 = vrot.lane.b32.xlu0 %v4669, 80
        %v4746 = vpop.permute.xlu0 %4745
        %4749 = vrot.lane.b32.xlu0 %v4663, 96
        %v4750 = vpop.permute.xlu0 %4749
        %4753 = vrot.lane.b32.xlu0 %v4671, 112
        %v4754 = vpop.permute.xlu0 %4753
        %4757 = vrot.lane.b32.xlu0 %v4721, 16
        %v4758 = vpop.permute.xlu0 %4757
        %4761 = vrot.lane.b32.xlu0 %v4707, 32
        %v4762 = vpop.permute.xlu0 %4761
        %4765 = vrot.lane.b32.xlu0 %v4723, 48
        %v4766 = vpop.permute.xlu0 %4765
        %4769 = vrot.lane.b32.xlu0 %v4715, 64
        %v4770 = vpop.permute.xlu0 %4769
        %4773 = vrot.lane.b32.xlu0 %v4725, 80
        %v4774 = vpop.permute.xlu0 %4773
        %4777 = vrot.lane.b32.xlu0 %v4719, 96
        %v4778 = vpop.permute.xlu0 %4777
        %4781 = vrot.lane.b32.xlu0 %v4727, 112
        %v4782 = vpop.permute.xlu0 %4781
        %v4784 = vsel %vm1018, %v4647, %v4730
        %v4785 = vsel %vm1020, %v4784, %v4734
        %v4786 = vsel %vm1022, %v4785, %v4738
        %v4787 = vsel %vm1024, %v4786, %v4742
        %v4788 = vsel %vm1026, %v4787, %v4746
        %v4789 = vsel %vm1028, %v4788, %v4750
        %v4790 = vsel %vm1030, %v4789, %v4754
        %v4791 = vsel %vm1018, %v4703, %v4758
        %v4792 = vsel %vm1020, %v4791, %v4762
        %v4793 = vsel %vm1022, %v4792, %v4766
        %v4794 = vsel %vm1024, %v4793, %v4770
        %v4795 = vsel %vm1026, %v4794, %v4774
        %v4796 = vsel %vm1028, %v4795, %v4778
        %v4797 = vsel %vm1030, %v4796, %v4782
        %4798 = vst [vmem:[#allocation4 + $0x10] sm:$0xf] %v4790
        %4799 = vst [vmem:[#allocation4 + $0x18] sm:$0xf] %v4797
        %v4800 = vld [vmem:[#allocation10] sm:$0xff]
        %v4801 = vld [vmem:[#allocation4] sm:$0xff]
        %v4802 = vld [vmem:[#allocation4 + $0x8] sm:$0xff]
        %v4803 = vld [vmem:[#allocation4 + $0x10] sm:$0xf]
        %v4804 = vld [vmem:[#allocation4 + $0x18] sm:$0xf]
        %v4805 = vld [vmem:[#allocation3 + $0x1] sm:$0xff]
        %v4806 = vld [vmem:[#allocation3 + $0x9] sm:$0xff]
        %v4807 = vld [vmem:[#allocation3 + $0x19] sm:$0xff]
        %v4808 = vld [vmem:[#allocation3 + $0x21] sm:$0xff]
        %v4809 = vld [vmem:[#allocation3 + $0x31] sm:$0xff]
        %v4810 = vld [vmem:[#allocation3 + $0x39] sm:$0xff]
        %v4811 = vld [vmem:[#allocation3 + $0x49] sm:$0xff]
        %v4812 = vld [vmem:[#allocation3 + $0x51] sm:$0xff]
        %v4813 = vrot.slane %v4809, 4
        %v4814 = vsel %vm738, %v4813, %v4805
        %v4815 = vrot.slane %v4805, 4
        %v4816 = vsel %vm738, %v4809, %v4815
        %v4818 = vunpack.c.l.s4 1983009808
        %v4819 = vunpack.c.0.s8 %v4818
        %v4820 = vperm.slane %v4814, %v4819
        %v4822 = vunpack.c.l.s4 1983009808
        %v4823 = vunpack.c.0.s8 %v4822
        %v4824 = vperm.slane %v4816, %v4823
        %v4825 = vrot.slane %v4811, 4
        %v4826 = vsel %vm738, %v4825, %v4807
        %v4827 = vrot.slane %v4807, 4
        %v4828 = vsel %vm738, %v4811, %v4827
        %v4830 = vunpack.c.l.s4 1983009808
        %v4831 = vunpack.c.0.s8 %v4830
        %v4832 = vperm.slane %v4826, %v4831
        %v4834 = vunpack.c.l.s4 1983009808
        %v4835 = vunpack.c.0.s8 %v4834
        %v4836 = vperm.slane %v4828, %v4835
        %v4837 = vrot.slane %v4832, 4
        %v4838 = vsel %vm738, %v4837, %v4820
        %v4839 = vrot.slane %v4820, 4
        %v4840 = vsel %vm738, %v4832, %v4839
        %v4842 = vunpack.c.l.s4 1934713408
        %v4843 = vunpack.c.0.s8 %v4842
        %v4844 = vperm.slane %v4838, %v4843
        %v4846 = vunpack.c.l.s4 1934713408
        %v4847 = vunpack.c.0.s8 %v4846
        %v4848 = vperm.slane %v4840, %v4847
        %v4849 = vrot.slane %v4836, 4
        %v4850 = vsel %vm738, %v4849, %v4824
        %v4851 = vrot.slane %v4824, 4
        %v4852 = vsel %vm738, %v4836, %v4851
        %v4854 = vunpack.c.l.s4 1934713408
        %v4855 = vunpack.c.0.s8 %v4854
        %v4856 = vperm.slane %v4850, %v4855
        %v4858 = vunpack.c.l.s4 1934713408
        %v4859 = vunpack.c.0.s8 %v4858
        %v4860 = vperm.slane %v4852, %v4859
        %v4861 = vrot.slane %v4844, 4
        %v4862 = vsel %vm738, 0.0, %v4861
        %v4863 = vrot.slane %v4848, 4
        %v4864 = vsel %vm738, 0.0, %v4863
        %v4865 = vrot.slane %v4856, 4
        %v4866 = vsel %vm738, 0.0, %v4865
        %v4867 = vrot.slane %v4860, 4
        %v4868 = vsel %vm738, 0.0, %v4867
        %v4869 = vrot.slane %v4810, 4
        %v4870 = vsel %vm738, %v4869, %v4806
        %v4871 = vrot.slane %v4806, 4
        %v4872 = vsel %vm738, %v4810, %v4871
        %v4874 = vunpack.c.l.s4 1983009808
        %v4875 = vunpack.c.0.s8 %v4874
        %v4876 = vperm.slane %v4870, %v4875
        %v4878 = vunpack.c.l.s4 1983009808
        %v4879 = vunpack.c.0.s8 %v4878
        %v4880 = vperm.slane %v4872, %v4879
        %v4881 = vrot.slane %v4812, 4
        %v4882 = vsel %vm738, %v4881, %v4808
        %v4883 = vrot.slane %v4808, 4
        %v4884 = vsel %vm738, %v4812, %v4883
        %v4886 = vunpack.c.l.s4 1983009808
        %v4887 = vunpack.c.0.s8 %v4886
        %v4888 = vperm.slane %v4882, %v4887
        %v4890 = vunpack.c.l.s4 1983009808
        %v4891 = vunpack.c.0.s8 %v4890
        %v4892 = vperm.slane %v4884, %v4891
        %v4893 = vrot.slane %v4888, 4
        %v4894 = vsel %vm738, %v4893, %v4876
        %v4895 = vrot.slane %v4876, 4
        %v4896 = vsel %vm738, %v4888, %v4895
        %v4898 = vunpack.c.l.s4 1934713408
        %v4899 = vunpack.c.0.s8 %v4898
        %v4900 = vperm.slane %v4894, %v4899
        %v4902 = vunpack.c.l.s4 1934713408
        %v4903 = vunpack.c.0.s8 %v4902
        %v4904 = vperm.slane %v4896, %v4903
        %v4905 = vrot.slane %v4892, 4
        %v4906 = vsel %vm738, %v4905, %v4880
        %v4907 = vrot.slane %v4880, 4
        %v4908 = vsel %vm738, %v4892, %v4907
        %v4910 = vunpack.c.l.s4 1934713408
        %v4911 = vunpack.c.0.s8 %v4910
        %v4912 = vperm.slane %v4906, %v4911
        %v4914 = vunpack.c.l.s4 1934713408
        %v4915 = vunpack.c.0.s8 %v4914
        %v4916 = vperm.slane %v4908, %v4915
        %v4917 = vrot.slane %v4900, 4
        %v4918 = vsel %vm738, 0.0, %v4917
        %v4919 = vrot.slane %v4904, 4
        %v4920 = vsel %vm738, 0.0, %v4919
        %v4921 = vrot.slane %v4912, 4
        %v4922 = vsel %vm738, 0.0, %v4921
        %v4923 = vrot.slane %v4916, 4
        %v4924 = vsel %vm738, 0.0, %v4923
        %4926 = vrot.lane.b32.xlu0 %v4862, 16
        %v4927 = vpop.permute.xlu0 %4926
        %4930 = vrot.lane.b32.xlu0 %v4848, 32
        %v4931 = vpop.permute.xlu0 %4930
        %4934 = vrot.lane.b32.xlu0 %v4864, 48
        %v4935 = vpop.permute.xlu0 %4934
        %4938 = vrot.lane.b32.xlu0 %v4856, 64
        %v4939 = vpop.permute.xlu0 %4938
        %4942 = vrot.lane.b32.xlu0 %v4866, 80
        %v4943 = vpop.permute.xlu0 %4942
        %4946 = vrot.lane.b32.xlu0 %v4860, 96
        %v4947 = vpop.permute.xlu0 %4946
        %4950 = vrot.lane.b32.xlu0 %v4868, 112
        %v4951 = vpop.permute.xlu0 %4950
        %4954 = vrot.lane.b32.xlu0 %v4918, 16
        %v4955 = vpop.permute.xlu0 %4954
        %4958 = vrot.lane.b32.xlu0 %v4904, 32
        %v4959 = vpop.permute.xlu0 %4958
        %4962 = vrot.lane.b32.xlu0 %v4920, 48
        %v4963 = vpop.permute.xlu0 %4962
        %4966 = vrot.lane.b32.xlu0 %v4912, 64
        %v4967 = vpop.permute.xlu0 %4966
        %4970 = vrot.lane.b32.xlu0 %v4922, 80
        %v4971 = vpop.permute.xlu0 %4970
        %4974 = vrot.lane.b32.xlu0 %v4916, 96
        %v4975 = vpop.permute.xlu0 %4974
        %4978 = vrot.lane.b32.xlu0 %v4924, 112
        %v4979 = vpop.permute.xlu0 %4978
        %v4981 = vsel %vm1018, %v4844, %v4927
        %v4982 = vsel %vm1020, %v4981, %v4931
        %v4983 = vsel %vm1022, %v4982, %v4935
        %v4984 = vsel %vm1024, %v4983, %v4939
        %v4985 = vsel %vm1026, %v4984, %v4943
        %v4986 = vsel %vm1028, %v4985, %v4947
        %v4987 = vsel %vm1030, %v4986, %v4951
        %v4988 = vsel %vm1018, %v4900, %v4955
        %v4989 = vsel %vm1020, %v4988, %v4959
        %v4990 = vsel %vm1022, %v4989, %v4963
        %v4991 = vsel %vm1024, %v4990, %v4967
        %v4992 = vsel %vm1026, %v4991, %v4971
        %v4993 = vsel %vm1028, %v4992, %v4975
        %v4994 = vsel %vm1030, %v4993, %v4979
        %4995 = vst [vmem:[#allocation4] sm:$0xf] %v4987
        %4996 = vst [vmem:[#allocation4 + $0x8] sm:$0xf] %v4994
        %5005 = vrot.lane.b32.xlu0 %v4805, 127
        %v5006 = vpop.permute.xlu0 %5005
        %5007 = vrot.lane.b32.xlu0 %v4806, 127
        %v5008 = vpop.permute.xlu0 %5007
        %5009 = vrot.lane.b32.xlu0 %v4807, 127
        %v5010 = vpop.permute.xlu0 %5009
        %5011 = vrot.lane.b32.xlu0 %v4808, 127
        %v5012 = vpop.permute.xlu0 %5011
        %5013 = vrot.lane.b32.xlu0 %v4809, 127
        %v5014 = vpop.permute.xlu0 %5013
        %5015 = vrot.lane.b32.xlu0 %v4810, 127
        %v5016 = vpop.permute.xlu0 %5015
        %5017 = vrot.lane.b32.xlu0 %v4811, 127
        %v5018 = vpop.permute.xlu0 %5017
        %5019 = vrot.lane.b32.xlu0 %v4812, 127
        %v5020 = vpop.permute.xlu0 %5019
        %v5029 = vrot.slane %v5014, 4
        %v5030 = vsel %vm738, %v5029, %v5006
        %v5031 = vrot.slane %v5006, 4
        %v5032 = vsel %vm738, %v5014, %v5031
        %v5034 = vunpack.c.l.s4 1983009808
        %v5035 = vunpack.c.0.s8 %v5034
        %v5036 = vperm.slane %v5030, %v5035
        %v5038 = vunpack.c.l.s4 1983009808
        %v5039 = vunpack.c.0.s8 %v5038
        %v5040 = vperm.slane %v5032, %v5039
        %v5041 = vrot.slane %v5018, 4
        %v5042 = vsel %vm738, %v5041, %v5010
        %v5043 = vrot.slane %v5010, 4
        %v5044 = vsel %vm738, %v5018, %v5043
        %v5046 = vunpack.c.l.s4 1983009808
        %v5047 = vunpack.c.0.s8 %v5046
        %v5048 = vperm.slane %v5042, %v5047
        %v5050 = vunpack.c.l.s4 1983009808
        %v5051 = vunpack.c.0.s8 %v5050
        %v5052 = vperm.slane %v5044, %v5051
        %v5053 = vrot.slane %v5048, 4
        %v5054 = vsel %vm738, %v5053, %v5036
        %v5055 = vrot.slane %v5036, 4
        %v5056 = vsel %vm738, %v5048, %v5055
        %v5058 = vunpack.c.l.s4 1934713408
        %v5059 = vunpack.c.0.s8 %v5058
        %v5060 = vperm.slane %v5054, %v5059
        %v5062 = vunpack.c.l.s4 1934713408
        %v5063 = vunpack.c.0.s8 %v5062
        %v5064 = vperm.slane %v5056, %v5063
        %v5065 = vrot.slane %v5052, 4
        %v5066 = vsel %vm738, %v5065, %v5040
        %v5067 = vrot.slane %v5040, 4
        %v5068 = vsel %vm738, %v5052, %v5067
        %v5070 = vunpack.c.l.s4 1934713408
        %v5071 = vunpack.c.0.s8 %v5070
        %v5072 = vperm.slane %v5066, %v5071
        %v5074 = vunpack.c.l.s4 1934713408
        %v5075 = vunpack.c.0.s8 %v5074
        %v5076 = vperm.slane %v5068, %v5075
        %v5077 = vrot.slane %v5060, 4
        %v5078 = vsel %vm738, 0.0, %v5077
        %v5079 = vrot.slane %v5064, 4
        %v5080 = vsel %vm738, 0.0, %v5079
        %v5081 = vrot.slane %v5072, 4
        %v5082 = vsel %vm738, 0.0, %v5081
        %v5083 = vrot.slane %v5076, 4
        %v5084 = vsel %vm738, 0.0, %v5083
        %v5085 = vrot.slane %v5016, 4
        %v5086 = vsel %vm738, %v5085, %v5008
        %v5087 = vrot.slane %v5008, 4
        %v5088 = vsel %vm738, %v5016, %v5087
        %v5090 = vunpack.c.l.s4 1983009808
        %v5091 = vunpack.c.0.s8 %v5090
        %v5092 = vperm.slane %v5086, %v5091
        %v5094 = vunpack.c.l.s4 1983009808
        %v5095 = vunpack.c.0.s8 %v5094
        %v5096 = vperm.slane %v5088, %v5095
        %v5097 = vrot.slane %v5020, 4
        %v5098 = vsel %vm738, %v5097, %v5012
        %v5099 = vrot.slane %v5012, 4
        %v5100 = vsel %vm738, %v5020, %v5099
        %v5102 = vunpack.c.l.s4 1983009808
        %v5103 = vunpack.c.0.s8 %v5102
        %v5104 = vperm.slane %v5098, %v5103
        %v5106 = vunpack.c.l.s4 1983009808
        %v5107 = vunpack.c.0.s8 %v5106
        %v5108 = vperm.slane %v5100, %v5107
        %v5109 = vrot.slane %v5104, 4
        %v5110 = vsel %vm738, %v5109, %v5092
        %v5111 = vrot.slane %v5092, 4
        %v5112 = vsel %vm738, %v5104, %v5111
        %v5114 = vunpack.c.l.s4 1934713408
        %v5115 = vunpack.c.0.s8 %v5114
        %v5116 = vperm.slane %v5110, %v5115
        %v5118 = vunpack.c.l.s4 1934713408
        %v5119 = vunpack.c.0.s8 %v5118
        %v5120 = vperm.slane %v5112, %v5119
        %v5121 = vrot.slane %v5108, 4
        %v5122 = vsel %vm738, %v5121, %v5096
        %v5123 = vrot.slane %v5096, 4
        %v5124 = vsel %vm738, %v5108, %v5123
        %v5126 = vunpack.c.l.s4 1934713408
        %v5127 = vunpack.c.0.s8 %v5126
        %v5128 = vperm.slane %v5122, %v5127
        %v5130 = vunpack.c.l.s4 1934713408
        %v5131 = vunpack.c.0.s8 %v5130
        %v5132 = vperm.slane %v5124, %v5131
        %v5133 = vrot.slane %v5116, 4
        %v5134 = vsel %vm738, 0.0, %v5133
        %v5135 = vrot.slane %v5120, 4
        %v5136 = vsel %vm738, 0.0, %v5135
        %v5137 = vrot.slane %v5128, 4
        %v5138 = vsel %vm738, 0.0, %v5137
        %v5139 = vrot.slane %v5132, 4
        %v5140 = vsel %vm738, 0.0, %v5139
        %5142 = vrot.lane.b32.xlu0 %v5078, 16
        %v5143 = vpop.permute.xlu0 %5142
        %5146 = vrot.lane.b32.xlu0 %v5064, 32
        %v5147 = vpop.permute.xlu0 %5146
        %5150 = vrot.lane.b32.xlu0 %v5080, 48
        %v5151 = vpop.permute.xlu0 %5150
        %5154 = vrot.lane.b32.xlu0 %v5072, 64
        %v5155 = vpop.permute.xlu0 %5154
        %5158 = vrot.lane.b32.xlu0 %v5082, 80
        %v5159 = vpop.permute.xlu0 %5158
        %5162 = vrot.lane.b32.xlu0 %v5076, 96
        %v5163 = vpop.permute.xlu0 %5162
        %5166 = vrot.lane.b32.xlu0 %v5084, 112
        %v5167 = vpop.permute.xlu0 %5166
        %5170 = vrot.lane.b32.xlu0 %v5134, 16
        %v5171 = vpop.permute.xlu0 %5170
        %5174 = vrot.lane.b32.xlu0 %v5120, 32
        %v5175 = vpop.permute.xlu0 %5174
        %5178 = vrot.lane.b32.xlu0 %v5136, 48
        %v5179 = vpop.permute.xlu0 %5178
        %5182 = vrot.lane.b32.xlu0 %v5128, 64
        %v5183 = vpop.permute.xlu0 %5182
        %5186 = vrot.lane.b32.xlu0 %v5138, 80
        %v5187 = vpop.permute.xlu0 %5186
        %5190 = vrot.lane.b32.xlu0 %v5132, 96
        %v5191 = vpop.permute.xlu0 %5190
        %5194 = vrot.lane.b32.xlu0 %v5140, 112
        %v5195 = vpop.permute.xlu0 %5194
        %v5197 = vsel %vm1018, %v5060, %v5143
        %v5198 = vsel %vm1020, %v5197, %v5147
        %v5199 = vsel %vm1022, %v5198, %v5151
        %v5200 = vsel %vm1024, %v5199, %v5155
        %v5201 = vsel %vm1026, %v5200, %v5159
        %v5202 = vsel %vm1028, %v5201, %v5163
        %v5203 = vsel %vm1030, %v5202, %v5167
        %v5204 = vsel %vm1018, %v5116, %v5171
        %v5205 = vsel %vm1020, %v5204, %v5175
        %v5206 = vsel %vm1022, %v5205, %v5179
        %v5207 = vsel %vm1024, %v5206, %v5183
        %v5208 = vsel %vm1026, %v5207, %v5187
        %v5209 = vsel %vm1028, %v5208, %v5191
        %v5210 = vsel %vm1030, %v5209, %v5195
        %v5213 = vrot.slane %v5203, 4
        %v5214 = vrot.slane %v5210, 4
        %5217 = vst [vmem:[#allocation4] sm:$0xf0] %v5213
        %5218 = vst [vmem:[#allocation4 + $0x8] sm:$0xf0] %v5214
        %5219 = vrot.lane.b32.xlu0 %v4805, 126
        %v5220 = vpop.permute.xlu0 %5219
        %5221 = vrot.lane.b32.xlu0 %v4806, 126
        %v5222 = vpop.permute.xlu0 %5221
        %5223 = vrot.lane.b32.xlu0 %v4807, 126
        %v5224 = vpop.permute.xlu0 %5223
        %5225 = vrot.lane.b32.xlu0 %v4808, 126
        %v5226 = vpop.permute.xlu0 %5225
        %5227 = vrot.lane.b32.xlu0 %v4809, 126
        %v5228 = vpop.permute.xlu0 %5227
        %5229 = vrot.lane.b32.xlu0 %v4810, 126
        %v5230 = vpop.permute.xlu0 %5229
        %5231 = vrot.lane.b32.xlu0 %v4811, 126
        %v5232 = vpop.permute.xlu0 %5231
        %5233 = vrot.lane.b32.xlu0 %v4812, 126
        %v5234 = vpop.permute.xlu0 %5233
        %v5243 = vrot.slane %v5228, 4
        %v5244 = vsel %vm738, %v5243, %v5220
        %v5245 = vrot.slane %v5220, 4
        %v5246 = vsel %vm738, %v5228, %v5245
        %v5248 = vunpack.c.l.s4 1983009808
        %v5249 = vunpack.c.0.s8 %v5248
        %v5250 = vperm.slane %v5244, %v5249
        %v5252 = vunpack.c.l.s4 1983009808
        %v5253 = vunpack.c.0.s8 %v5252
        %v5254 = vperm.slane %v5246, %v5253
        %v5255 = vrot.slane %v5232, 4
        %v5256 = vsel %vm738, %v5255, %v5224
        %v5257 = vrot.slane %v5224, 4
        %v5258 = vsel %vm738, %v5232, %v5257
        %v5260 = vunpack.c.l.s4 1983009808
        %v5261 = vunpack.c.0.s8 %v5260
        %v5262 = vperm.slane %v5256, %v5261
        %v5264 = vunpack.c.l.s4 1983009808
        %v5265 = vunpack.c.0.s8 %v5264
        %v5266 = vperm.slane %v5258, %v5265
        %v5267 = vrot.slane %v5262, 4
        %v5268 = vsel %vm738, %v5267, %v5250
        %v5269 = vrot.slane %v5250, 4
        %v5270 = vsel %vm738, %v5262, %v5269
        %v5272 = vunpack.c.l.s4 1934713408
        %v5273 = vunpack.c.0.s8 %v5272
        %v5274 = vperm.slane %v5268, %v5273
        %v5276 = vunpack.c.l.s4 1934713408
        %v5277 = vunpack.c.0.s8 %v5276
        %v5278 = vperm.slane %v5270, %v5277
        %v5279 = vrot.slane %v5266, 4
        %v5280 = vsel %vm738, %v5279, %v5254
        %v5281 = vrot.slane %v5254, 4
        %v5282 = vsel %vm738, %v5266, %v5281
        %v5284 = vunpack.c.l.s4 1934713408
        %v5285 = vunpack.c.0.s8 %v5284
        %v5286 = vperm.slane %v5280, %v5285
        %v5288 = vunpack.c.l.s4 1934713408
        %v5289 = vunpack.c.0.s8 %v5288
        %v5290 = vperm.slane %v5282, %v5289
        %v5291 = vrot.slane %v5274, 4
        %v5292 = vsel %vm738, 0.0, %v5291
        %v5293 = vrot.slane %v5278, 4
        %v5294 = vsel %vm738, 0.0, %v5293
        %v5295 = vrot.slane %v5286, 4
        %v5296 = vsel %vm738, 0.0, %v5295
        %v5297 = vrot.slane %v5290, 4
        %v5298 = vsel %vm738, 0.0, %v5297
        %v5299 = vrot.slane %v5230, 4
        %v5300 = vsel %vm738, %v5299, %v5222
        %v5301 = vrot.slane %v5222, 4
        %v5302 = vsel %vm738, %v5230, %v5301
        %v5304 = vunpack.c.l.s4 1983009808
        %v5305 = vunpack.c.0.s8 %v5304
        %v5306 = vperm.slane %v5300, %v5305
        %v5308 = vunpack.c.l.s4 1983009808
        %v5309 = vunpack.c.0.s8 %v5308
        %v5310 = vperm.slane %v5302, %v5309
        %v5311 = vrot.slane %v5234, 4
        %v5312 = vsel %vm738, %v5311, %v5226
        %v5313 = vrot.slane %v5226, 4
        %v5314 = vsel %vm738, %v5234, %v5313
        %v5316 = vunpack.c.l.s4 1983009808
        %v5317 = vunpack.c.0.s8 %v5316
        %v5318 = vperm.slane %v5312, %v5317
        %v5320 = vunpack.c.l.s4 1983009808
        %v5321 = vunpack.c.0.s8 %v5320
        %v5322 = vperm.slane %v5314, %v5321
        %v5323 = vrot.slane %v5318, 4
        %v5324 = vsel %vm738, %v5323, %v5306
        %v5325 = vrot.slane %v5306, 4
        %v5326 = vsel %vm738, %v5318, %v5325
        %v5328 = vunpack.c.l.s4 1934713408
        %v5329 = vunpack.c.0.s8 %v5328
        %v5330 = vperm.slane %v5324, %v5329
        %v5332 = vunpack.c.l.s4 1934713408
        %v5333 = vunpack.c.0.s8 %v5332
        %v5334 = vperm.slane %v5326, %v5333
        %v5335 = vrot.slane %v5322, 4
        %v5336 = vsel %vm738, %v5335, %v5310
        %v5337 = vrot.slane %v5310, 4
        %v5338 = vsel %vm738, %v5322, %v5337
        %v5340 = vunpack.c.l.s4 1934713408
        %v5341 = vunpack.c.0.s8 %v5340
        %v5342 = vperm.slane %v5336, %v5341
        %v5344 = vunpack.c.l.s4 1934713408
        %v5345 = vunpack.c.0.s8 %v5344
        %v5346 = vperm.slane %v5338, %v5345
        %v5347 = vrot.slane %v5330, 4
        %v5348 = vsel %vm738, 0.0, %v5347
        %v5349 = vrot.slane %v5334, 4
        %v5350 = vsel %vm738, 0.0, %v5349
        %v5351 = vrot.slane %v5342, 4
        %v5352 = vsel %vm738, 0.0, %v5351
        %v5353 = vrot.slane %v5346, 4
        %v5354 = vsel %vm738, 0.0, %v5353
        %5356 = vrot.lane.b32.xlu0 %v5292, 16
        %v5357 = vpop.permute.xlu0 %5356
        %5360 = vrot.lane.b32.xlu0 %v5278, 32
        %v5361 = vpop.permute.xlu0 %5360
        %5364 = vrot.lane.b32.xlu0 %v5294, 48
        %v5365 = vpop.permute.xlu0 %5364
        %5368 = vrot.lane.b32.xlu0 %v5286, 64
        %v5369 = vpop.permute.xlu0 %5368
        %5372 = vrot.lane.b32.xlu0 %v5296, 80
        %v5373 = vpop.permute.xlu0 %5372
        %5376 = vrot.lane.b32.xlu0 %v5290, 96
        %v5377 = vpop.permute.xlu0 %5376
        %5380 = vrot.lane.b32.xlu0 %v5298, 112
        %v5381 = vpop.permute.xlu0 %5380
        %5384 = vrot.lane.b32.xlu0 %v5348, 16
        %v5385 = vpop.permute.xlu0 %5384
        %5388 = vrot.lane.b32.xlu0 %v5334, 32
        %v5389 = vpop.permute.xlu0 %5388
        %5392 = vrot.lane.b32.xlu0 %v5350, 48
        %v5393 = vpop.permute.xlu0 %5392
        %5396 = vrot.lane.b32.xlu0 %v5342, 64
        %v5397 = vpop.permute.xlu0 %5396
        %5400 = vrot.lane.b32.xlu0 %v5352, 80
        %v5401 = vpop.permute.xlu0 %5400
        %5404 = vrot.lane.b32.xlu0 %v5346, 96
        %v5405 = vpop.permute.xlu0 %5404
        %5408 = vrot.lane.b32.xlu0 %v5354, 112
        %v5409 = vpop.permute.xlu0 %5408
        %v5411 = vsel %vm1018, %v5274, %v5357
        %v5412 = vsel %vm1020, %v5411, %v5361
        %v5413 = vsel %vm1022, %v5412, %v5365
        %v5414 = vsel %vm1024, %v5413, %v5369
        %v5415 = vsel %vm1026, %v5414, %v5373
        %v5416 = vsel %vm1028, %v5415, %v5377
        %v5417 = vsel %vm1030, %v5416, %v5381
        %v5418 = vsel %vm1018, %v5330, %v5385
        %v5419 = vsel %vm1020, %v5418, %v5389
        %v5420 = vsel %vm1022, %v5419, %v5393
        %v5421 = vsel %vm1024, %v5420, %v5397
        %v5422 = vsel %vm1026, %v5421, %v5401
        %v5423 = vsel %vm1028, %v5422, %v5405
        %v5424 = vsel %vm1030, %v5423, %v5409
        %5425 = vst [vmem:[#allocation4 + $0x10] sm:$0xf] %v5417
        %5426 = vst [vmem:[#allocation4 + $0x18] sm:$0xf] %v5424
        %s5427 = scalar_lea.vmem [#allocation10], 8
        %v5428 = vld [vmem:[%s5427] sm:$0xff]
        %v5429 = vld [vmem:[#allocation4] sm:$0xff]
        %v5430 = vld [vmem:[#allocation4 + $0x8] sm:$0xff]
        %v5431 = vld [vmem:[#allocation4 + $0x10] sm:$0xf]
        %v5432 = vld [vmem:[#allocation4 + $0x18] sm:$0xf]
        %vm5433 = vcmask 97280
        %v5435 = vsel %vm5433, %v5428, 0
        %vm5437 = vcmask 1043456
        %v5439 = vsel %vm5437, %v5431, 0
        %v5442 = vsel %vm5437, %v5432, 0
        %5444 = vmatpush.msra.mxu0 0.0
        %5445 = vmatpush.msra.mxu0 0.0
        %5446 = vmatpush.msra.mxu0 0.0
        %5447 = vmatpush.msra.mxu0 0.0
        %5448 = vmatpush.msra.mxu0 0.0
        %5449 = vmatpush.msra.mxu0 0.0
        %5450 = vmatpush.msra.mxu0 0.0
        %5451 = vmatpush.msra.mxu0 0.0
        %5452 = vmatpush.msra.mxu0 0.0
        %5453 = vmatpush.msra.mxu0 0.0
        %5454 = vmatpush.msra.mxu0 0.0
        %5455 = vmatpush.msra.mxu0 0.0
        %5456 = vmatpush.msra.mxu0 0.0
        %5457 = vmatpush.msra.mxu0 0.0
        %5458 = vmatpush.msra.mxu0 %v5439
        %5459 = vmatpush.msra.mxu0 %v5429
        %5460 = vmatmul.f32.gmra.mxu0 %v5435
        %v5461 = vpop.f32.mrf.mxu0
        %v5462 = vadd.f32 0.0, %v5461
        %5463 = vdwg.mxu0
        %5464 = vmatpush.msra.mxu0 0.0
        %5465 = vmatpush.msra.mxu0 0.0
        %5466 = vmatpush.msra.mxu0 0.0
        %5467 = vmatpush.msra.mxu0 0.0
        %5468 = vmatpush.msra.mxu0 0.0
        %5469 = vmatpush.msra.mxu0 0.0
        %5470 = vmatpush.msra.mxu0 0.0
        %5471 = vmatpush.msra.mxu0 0.0
        %5472 = vmatpush.msra.mxu0 0.0
        %5473 = vmatpush.msra.mxu0 0.0
        %5474 = vmatpush.msra.mxu0 0.0
        %5475 = vmatpush.msra.mxu0 0.0
        %5476 = vmatpush.msra.mxu0 0.0
        %5477 = vmatpush.msra.mxu0 0.0
        %5478 = vmatpush.msra.mxu0 %v5442
        %5479 = vmatpush.msra.mxu0 %v5430
        %5480 = vmatmul.f32.gmra.mxu0 %v5435
        %v5481 = vpop.f32.mrf.mxu0
        %v5482 = vadd.f32 0.0, %v5481
        %5483 = vdwg.mxu0
        %v5485 = vsel %vm5433, %v4800, 0
        %v5488 = vsel %vm5437, %v4803, 0
        %v5491 = vsel %vm5437, %v4804, 0
        %5493 = vmatpush.msra.mxu0 0.0
        %5494 = vmatpush.msra.mxu0 0.0
        %5495 = vmatpush.msra.mxu0 0.0
        %5496 = vmatpush.msra.mxu0 0.0
        %5497 = vmatpush.msra.mxu0 0.0
        %5498 = vmatpush.msra.mxu0 0.0
        %5499 = vmatpush.msra.mxu0 0.0
        %5500 = vmatpush.msra.mxu0 0.0
        %5501 = vmatpush.msra.mxu0 0.0
        %5502 = vmatpush.msra.mxu0 0.0
        %5503 = vmatpush.msra.mxu0 0.0
        %5504 = vmatpush.msra.mxu0 0.0
        %5505 = vmatpush.msra.mxu0 0.0
        %5506 = vmatpush.msra.mxu0 0.0
        %5507 = vmatpush.msra.mxu0 %v5488
        %5508 = vmatpush.msra.mxu0 %v4801
        %5509 = vmatmul.f32.gmra.mxu0 %v5485
        %v5510 = vpop.f32.mrf.mxu0
        %v5511 = vadd.f32 %v5462, %v5510
        %5512 = vdwg.mxu0
        %5513 = vmatpush.msra.mxu0 0.0
        %5514 = vmatpush.msra.mxu0 0.0
        %5515 = vmatpush.msra.mxu0 0.0
        %5516 = vmatpush.msra.mxu0 0.0
        %5517 = vmatpush.msra.mxu0 0.0
        %5518 = vmatpush.msra.mxu0 0.0
        %5519 = vmatpush.msra.mxu0 0.0
        %5520 = vmatpush.msra.mxu0 0.0
        %5521 = vmatpush.msra.mxu0 0.0
        %5522 = vmatpush.msra.mxu0 0.0
        %5523 = vmatpush.msra.mxu0 0.0
        %5524 = vmatpush.msra.mxu0 0.0
        %5525 = vmatpush.msra.mxu0 0.0
        %5526 = vmatpush.msra.mxu0 0.0
        %5527 = vmatpush.msra.mxu0 %v5491
        %5528 = vmatpush.msra.mxu0 %v4802
        %5529 = vmatmul.f32.gmra.mxu0 %v5485
        %v5530 = vpop.f32.mrf.mxu0
        %v5531 = vadd.f32 %v5482, %v5530
        %5532 = vdwg.mxu0
        %v5533 = vld [vmem:[#allocation3 + $0x2] sm:$0xff]
        %v5534 = vld [vmem:[#allocation3 + $0xa] sm:$0xff]
        %v5535 = vld [vmem:[#allocation3 + $0x1a] sm:$0xff]
        %v5536 = vld [vmem:[#allocation3 + $0x22] sm:$0xff]
        %v5537 = vld [vmem:[#allocation3 + $0x32] sm:$0xff]
        %v5538 = vld [vmem:[#allocation3 + $0x3a] sm:$0xff]
        %v5539 = vld [vmem:[#allocation3 + $0x4a] sm:$0xff]
        %v5540 = vld [vmem:[#allocation3 + $0x52] sm:$0xff]
        %v5541 = vrot.slane %v5537, 4
        %v5542 = vsel %vm738, %v5541, %v5533
        %v5543 = vrot.slane %v5533, 4
        %v5544 = vsel %vm738, %v5537, %v5543
        %v5546 = vunpack.c.l.s4 1983009808
        %v5547 = vunpack.c.0.s8 %v5546
        %v5548 = vperm.slane %v5542, %v5547
        %v5550 = vunpack.c.l.s4 1983009808
        %v5551 = vunpack.c.0.s8 %v5550
        %v5552 = vperm.slane %v5544, %v5551
        %v5553 = vrot.slane %v5539, 4
        %v5554 = vsel %vm738, %v5553, %v5535
        %v5555 = vrot.slane %v5535, 4
        %v5556 = vsel %vm738, %v5539, %v5555
        %v5558 = vunpack.c.l.s4 1983009808
        %v5559 = vunpack.c.0.s8 %v5558
        %v5560 = vperm.slane %v5554, %v5559
        %v5562 = vunpack.c.l.s4 1983009808
        %v5563 = vunpack.c.0.s8 %v5562
        %v5564 = vperm.slane %v5556, %v5563
        %v5565 = vrot.slane %v5560, 4
        %v5566 = vsel %vm738, %v5565, %v5548
        %v5567 = vrot.slane %v5548, 4
        %v5568 = vsel %vm738, %v5560, %v5567
        %v5570 = vunpack.c.l.s4 1934713408
        %v5571 = vunpack.c.0.s8 %v5570
        %v5572 = vperm.slane %v5566, %v5571
        %v5574 = vunpack.c.l.s4 1934713408
        %v5575 = vunpack.c.0.s8 %v5574
        %v5576 = vperm.slane %v5568, %v5575
        %v5577 = vrot.slane %v5564, 4
        %v5578 = vsel %vm738, %v5577, %v5552
        %v5579 = vrot.slane %v5552, 4
        %v5580 = vsel %vm738, %v5564, %v5579
        %v5582 = vunpack.c.l.s4 1934713408
        %v5583 = vunpack.c.0.s8 %v5582
        %v5584 = vperm.slane %v5578, %v5583
        %v5586 = vunpack.c.l.s4 1934713408
        %v5587 = vunpack.c.0.s8 %v5586
        %v5588 = vperm.slane %v5580, %v5587
        %v5589 = vrot.slane %v5572, 4
        %v5590 = vsel %vm738, 0.0, %v5589
        %v5591 = vrot.slane %v5576, 4
        %v5592 = vsel %vm738, 0.0, %v5591
        %v5593 = vrot.slane %v5584, 4
        %v5594 = vsel %vm738, 0.0, %v5593
        %v5595 = vrot.slane %v5588, 4
        %v5596 = vsel %vm738, 0.0, %v5595
        %v5597 = vrot.slane %v5538, 4
        %v5598 = vsel %vm738, %v5597, %v5534
        %v5599 = vrot.slane %v5534, 4
        %v5600 = vsel %vm738, %v5538, %v5599
        %v5602 = vunpack.c.l.s4 1983009808
        %v5603 = vunpack.c.0.s8 %v5602
        %v5604 = vperm.slane %v5598, %v5603
        %v5606 = vunpack.c.l.s4 1983009808
        %v5607 = vunpack.c.0.s8 %v5606
        %v5608 = vperm.slane %v5600, %v5607
        %v5609 = vrot.slane %v5540, 4
        %v5610 = vsel %vm738, %v5609, %v5536
        %v5611 = vrot.slane %v5536, 4
        %v5612 = vsel %vm738, %v5540, %v5611
        %v5614 = vunpack.c.l.s4 1983009808
        %v5615 = vunpack.c.0.s8 %v5614
        %v5616 = vperm.slane %v5610, %v5615
        %v5618 = vunpack.c.l.s4 1983009808
        %v5619 = vunpack.c.0.s8 %v5618
        %v5620 = vperm.slane %v5612, %v5619
        %v5621 = vrot.slane %v5616, 4
        %v5622 = vsel %vm738, %v5621, %v5604
        %v5623 = vrot.slane %v5604, 4
        %v5624 = vsel %vm738, %v5616, %v5623
        %v5626 = vunpack.c.l.s4 1934713408
        %v5627 = vunpack.c.0.s8 %v5626
        %v5628 = vperm.slane %v5622, %v5627
        %v5630 = vunpack.c.l.s4 1934713408
        %v5631 = vunpack.c.0.s8 %v5630
        %v5632 = vperm.slane %v5624, %v5631
        %v5633 = vrot.slane %v5620, 4
        %v5634 = vsel %vm738, %v5633, %v5608
        %v5635 = vrot.slane %v5608, 4
        %v5636 = vsel %vm738, %v5620, %v5635
        %v5638 = vunpack.c.l.s4 1934713408
        %v5639 = vunpack.c.0.s8 %v5638
        %v5640 = vperm.slane %v5634, %v5639
        %v5642 = vunpack.c.l.s4 1934713408
        %v5643 = vunpack.c.0.s8 %v5642
        %v5644 = vperm.slane %v5636, %v5643
        %v5645 = vrot.slane %v5628, 4
        %v5646 = vsel %vm738, 0.0, %v5645
        %v5647 = vrot.slane %v5632, 4
        %v5648 = vsel %vm738, 0.0, %v5647
        %v5649 = vrot.slane %v5640, 4
        %v5650 = vsel %vm738, 0.0, %v5649
        %v5651 = vrot.slane %v5644, 4
        %v5652 = vsel %vm738, 0.0, %v5651
        %5654 = vrot.lane.b32.xlu0 %v5590, 16
        %v5655 = vpop.permute.xlu0 %5654
        %5658 = vrot.lane.b32.xlu0 %v5576, 32
        %v5659 = vpop.permute.xlu0 %5658
        %5662 = vrot.lane.b32.xlu0 %v5592, 48
        %v5663 = vpop.permute.xlu0 %5662
        %5666 = vrot.lane.b32.xlu0 %v5584, 64
        %v5667 = vpop.permute.xlu0 %5666
        %5670 = vrot.lane.b32.xlu0 %v5594, 80
        %v5671 = vpop.permute.xlu0 %5670
        %5674 = vrot.lane.b32.xlu0 %v5588, 96
        %v5675 = vpop.permute.xlu0 %5674
        %5678 = vrot.lane.b32.xlu0 %v5596, 112
        %v5679 = vpop.permute.xlu0 %5678
        %5682 = vrot.lane.b32.xlu0 %v5646, 16
        %v5683 = vpop.permute.xlu0 %5682
        %5686 = vrot.lane.b32.xlu0 %v5632, 32
        %v5687 = vpop.permute.xlu0 %5686
        %5690 = vrot.lane.b32.xlu0 %v5648, 48
        %v5691 = vpop.permute.xlu0 %5690
        %5694 = vrot.lane.b32.xlu0 %v5640, 64
        %v5695 = vpop.permute.xlu0 %5694
        %5698 = vrot.lane.b32.xlu0 %v5650, 80
        %v5699 = vpop.permute.xlu0 %5698
        %5702 = vrot.lane.b32.xlu0 %v5644, 96
        %v5703 = vpop.permute.xlu0 %5702
        %5706 = vrot.lane.b32.xlu0 %v5652, 112
        %v5707 = vpop.permute.xlu0 %5706
        %v5709 = vsel %vm1018, %v5572, %v5655
        %v5710 = vsel %vm1020, %v5709, %v5659
        %v5711 = vsel %vm1022, %v5710, %v5663
        %v5712 = vsel %vm1024, %v5711, %v5667
        %v5713 = vsel %vm1026, %v5712, %v5671
        %v5714 = vsel %vm1028, %v5713, %v5675
        %v5715 = vsel %vm1030, %v5714, %v5679
        %v5716 = vsel %vm1018, %v5628, %v5683
        %v5717 = vsel %vm1020, %v5716, %v5687
        %v5718 = vsel %vm1022, %v5717, %v5691
        %v5719 = vsel %vm1024, %v5718, %v5695
        %v5720 = vsel %vm1026, %v5719, %v5699
        %v5721 = vsel %vm1028, %v5720, %v5703
        %v5722 = vsel %vm1030, %v5721, %v5707
        %5723 = vst [vmem:[#allocation4] sm:$0xf] %v5715
        %5724 = vst [vmem:[#allocation4 + $0x8] sm:$0xf] %v5722
        %5733 = vrot.lane.b32.xlu0 %v5533, 127
        %v5734 = vpop.permute.xlu0 %5733
        %5735 = vrot.lane.b32.xlu0 %v5534, 127
        %v5736 = vpop.permute.xlu0 %5735
        %5737 = vrot.lane.b32.xlu0 %v5535, 127
        %v5738 = vpop.permute.xlu0 %5737
        %5739 = vrot.lane.b32.xlu0 %v5536, 127
        %v5740 = vpop.permute.xlu0 %5739
        %5741 = vrot.lane.b32.xlu0 %v5537, 127
        %v5742 = vpop.permute.xlu0 %5741
        %5743 = vrot.lane.b32.xlu0 %v5538, 127
        %v5744 = vpop.permute.xlu0 %5743
        %5745 = vrot.lane.b32.xlu0 %v5539, 127
        %v5746 = vpop.permute.xlu0 %5745
        %5747 = vrot.lane.b32.xlu0 %v5540, 127
        %v5748 = vpop.permute.xlu0 %5747
        %v5757 = vrot.slane %v5742, 4
        %v5758 = vsel %vm738, %v5757, %v5734
        %v5759 = vrot.slane %v5734, 4
        %v5760 = vsel %vm738, %v5742, %v5759
        %v5762 = vunpack.c.l.s4 1983009808
        %v5763 = vunpack.c.0.s8 %v5762
        %v5764 = vperm.slane %v5758, %v5763
        %v5766 = vunpack.c.l.s4 1983009808
        %v5767 = vunpack.c.0.s8 %v5766
        %v5768 = vperm.slane %v5760, %v5767
        %v5769 = vrot.slane %v5746, 4
        %v5770 = vsel %vm738, %v5769, %v5738
        %v5771 = vrot.slane %v5738, 4
        %v5772 = vsel %vm738, %v5746, %v5771
        %v5774 = vunpack.c.l.s4 1983009808
        %v5775 = vunpack.c.0.s8 %v5774
        %v5776 = vperm.slane %v5770, %v5775
        %v5778 = vunpack.c.l.s4 1983009808
        %v5779 = vunpack.c.0.s8 %v5778
        %v5780 = vperm.slane %v5772, %v5779
        %v5781 = vrot.slane %v5776, 4
        %v5782 = vsel %vm738, %v5781, %v5764
        %v5783 = vrot.slane %v5764, 4
        %v5784 = vsel %vm738, %v5776, %v5783
        %v5786 = vunpack.c.l.s4 1934713408
        %v5787 = vunpack.c.0.s8 %v5786
        %v5788 = vperm.slane %v5782, %v5787
        %v5790 = vunpack.c.l.s4 1934713408
        %v5791 = vunpack.c.0.s8 %v5790
        %v5792 = vperm.slane %v5784, %v5791
        %v5793 = vrot.slane %v5780, 4
        %v5794 = vsel %vm738, %v5793, %v5768
        %v5795 = vrot.slane %v5768, 4
        %v5796 = vsel %vm738, %v5780, %v5795
        %v5798 = vunpack.c.l.s4 1934713408
        %v5799 = vunpack.c.0.s8 %v5798
        %v5800 = vperm.slane %v5794, %v5799
        %v5802 = vunpack.c.l.s4 1934713408
        %v5803 = vunpack.c.0.s8 %v5802
        %v5804 = vperm.slane %v5796, %v5803
        %v5805 = vrot.slane %v5788, 4
        %v5806 = vsel %vm738, 0.0, %v5805
        %v5807 = vrot.slane %v5792, 4
        %v5808 = vsel %vm738, 0.0, %v5807
        %v5809 = vrot.slane %v5800, 4
        %v5810 = vsel %vm738, 0.0, %v5809
        %v5811 = vrot.slane %v5804, 4
        %v5812 = vsel %vm738, 0.0, %v5811
        %v5813 = vrot.slane %v5744, 4
        %v5814 = vsel %vm738, %v5813, %v5736
        %v5815 = vrot.slane %v5736, 4
        %v5816 = vsel %vm738, %v5744, %v5815
        %v5818 = vunpack.c.l.s4 1983009808
        %v5819 = vunpack.c.0.s8 %v5818
        %v5820 = vperm.slane %v5814, %v5819
        %v5822 = vunpack.c.l.s4 1983009808
        %v5823 = vunpack.c.0.s8 %v5822
        %v5824 = vperm.slane %v5816, %v5823
        %v5825 = vrot.slane %v5748, 4
        %v5826 = vsel %vm738, %v5825, %v5740
        %v5827 = vrot.slane %v5740, 4
        %v5828 = vsel %vm738, %v5748, %v5827
        %v5830 = vunpack.c.l.s4 1983009808
        %v5831 = vunpack.c.0.s8 %v5830
        %v5832 = vperm.slane %v5826, %v5831
        %v5834 = vunpack.c.l.s4 1983009808
        %v5835 = vunpack.c.0.s8 %v5834
        %v5836 = vperm.slane %v5828, %v5835
        %v5837 = vrot.slane %v5832, 4
        %v5838 = vsel %vm738, %v5837, %v5820
        %v5839 = vrot.slane %v5820, 4
        %v5840 = vsel %vm738, %v5832, %v5839
        %v5842 = vunpack.c.l.s4 1934713408
        %v5843 = vunpack.c.0.s8 %v5842
        %v5844 = vperm.slane %v5838, %v5843
        %v5846 = vunpack.c.l.s4 1934713408
        %v5847 = vunpack.c.0.s8 %v5846
        %v5848 = vperm.slane %v5840, %v5847
        %v5849 = vrot.slane %v5836, 4
        %v5850 = vsel %vm738, %v5849, %v5824
        %v5851 = vrot.slane %v5824, 4
        %v5852 = vsel %vm738, %v5836, %v5851
        %v5854 = vunpack.c.l.s4 1934713408
        %v5855 = vunpack.c.0.s8 %v5854
        %v5856 = vperm.slane %v5850, %v5855
        %v5858 = vunpack.c.l.s4 1934713408
        %v5859 = vunpack.c.0.s8 %v5858
        %v5860 = vperm.slane %v5852, %v5859
        %v5861 = vrot.slane %v5844, 4
        %v5862 = vsel %vm738, 0.0, %v5861
        %v5863 = vrot.slane %v5848, 4
        %v5864 = vsel %vm738, 0.0, %v5863
        %v5865 = vrot.slane %v5856, 4
        %v5866 = vsel %vm738, 0.0, %v5865
        %v5867 = vrot.slane %v5860, 4
        %v5868 = vsel %vm738, 0.0, %v5867
        %5870 = vrot.lane.b32.xlu0 %v5806, 16
        %v5871 = vpop.permute.xlu0 %5870
        %5874 = vrot.lane.b32.xlu0 %v5792, 32
        %v5875 = vpop.permute.xlu0 %5874
        %5878 = vrot.lane.b32.xlu0 %v5808, 48
        %v5879 = vpop.permute.xlu0 %5878
        %5882 = vrot.lane.b32.xlu0 %v5800, 64
        %v5883 = vpop.permute.xlu0 %5882
        %5886 = vrot.lane.b32.xlu0 %v5810, 80
        %v5887 = vpop.permute.xlu0 %5886
        %5890 = vrot.lane.b32.xlu0 %v5804, 96
        %v5891 = vpop.permute.xlu0 %5890
        %5894 = vrot.lane.b32.xlu0 %v5812, 112
        %v5895 = vpop.permute.xlu0 %5894
        %5898 = vrot.lane.b32.xlu0 %v5862, 16
        %v5899 = vpop.permute.xlu0 %5898
        %5902 = vrot.lane.b32.xlu0 %v5848, 32
        %v5903 = vpop.permute.xlu0 %5902
        %5906 = vrot.lane.b32.xlu0 %v5864, 48
        %v5907 = vpop.permute.xlu0 %5906
        %5910 = vrot.lane.b32.xlu0 %v5856, 64
        %v5911 = vpop.permute.xlu0 %5910
        %5914 = vrot.lane.b32.xlu0 %v5866, 80
        %v5915 = vpop.permute.xlu0 %5914
        %5918 = vrot.lane.b32.xlu0 %v5860, 96
        %v5919 = vpop.permute.xlu0 %5918
        %5922 = vrot.lane.b32.xlu0 %v5868, 112
        %v5923 = vpop.permute.xlu0 %5922
        %v5925 = vsel %vm1018, %v5788, %v5871
        %v5926 = vsel %vm1020, %v5925, %v5875
        %v5927 = vsel %vm1022, %v5926, %v5879
        %v5928 = vsel %vm1024, %v5927, %v5883
        %v5929 = vsel %vm1026, %v5928, %v5887
        %v5930 = vsel %vm1028, %v5929, %v5891
        %v5931 = vsel %vm1030, %v5930, %v5895
        %v5932 = vsel %vm1018, %v5844, %v5899
        %v5933 = vsel %vm1020, %v5932, %v5903
        %v5934 = vsel %vm1022, %v5933, %v5907
        %v5935 = vsel %vm1024, %v5934, %v5911
        %v5936 = vsel %vm1026, %v5935, %v5915
        %v5937 = vsel %vm1028, %v5936, %v5919
        %v5938 = vsel %vm1030, %v5937, %v5923
        %v5941 = vrot.slane %v5931, 4
        %v5942 = vrot.slane %v5938, 4
        %5945 = vst [vmem:[#allocation4] sm:$0xf0] %v5941
        %5946 = vst [vmem:[#allocation4 + $0x8] sm:$0xf0] %v5942
        %5947 = vrot.lane.b32.xlu0 %v5533, 126
        %v5948 = vpop.permute.xlu0 %5947
        %5949 = vrot.lane.b32.xlu0 %v5534, 126
        %v5950 = vpop.permute.xlu0 %5949
        %5951 = vrot.lane.b32.xlu0 %v5535, 126
        %v5952 = vpop.permute.xlu0 %5951
        %5953 = vrot.lane.b32.xlu0 %v5536, 126
        %v5954 = vpop.permute.xlu0 %5953
        %5955 = vrot.lane.b32.xlu0 %v5537, 126
        %v5956 = vpop.permute.xlu0 %5955
        %5957 = vrot.lane.b32.xlu0 %v5538, 126
        %v5958 = vpop.permute.xlu0 %5957
        %5959 = vrot.lane.b32.xlu0 %v5539, 126
        %v5960 = vpop.permute.xlu0 %5959
        %5961 = vrot.lane.b32.xlu0 %v5540, 126
        %v5962 = vpop.permute.xlu0 %5961
        %v5971 = vrot.slane %v5956, 4
        %v5972 = vsel %vm738, %v5971, %v5948
        %v5973 = vrot.slane %v5948, 4
        %v5974 = vsel %vm738, %v5956, %v5973
        %v5976 = vunpack.c.l.s4 1983009808
        %v5977 = vunpack.c.0.s8 %v5976
        %v5978 = vperm.slane %v5972, %v5977
        %v5980 = vunpack.c.l.s4 1983009808
        %v5981 = vunpack.c.0.s8 %v5980
        %v5982 = vperm.slane %v5974, %v5981
        %v5983 = vrot.slane %v5960, 4
        %v5984 = vsel %vm738, %v5983, %v5952
        %v5985 = vrot.slane %v5952, 4
        %v5986 = vsel %vm738, %v5960, %v5985
        %v5988 = vunpack.c.l.s4 1983009808
        %v5989 = vunpack.c.0.s8 %v5988
        %v5990 = vperm.slane %v5984, %v5989
        %v5992 = vunpack.c.l.s4 1983009808
        %v5993 = vunpack.c.0.s8 %v5992
        %v5994 = vperm.slane %v5986, %v5993
        %v5995 = vrot.slane %v5990, 4
        %v5996 = vsel %vm738, %v5995, %v5978
        %v5997 = vrot.slane %v5978, 4
        %v5998 = vsel %vm738, %v5990, %v5997
        %v6000 = vunpack.c.l.s4 1934713408
        %v6001 = vunpack.c.0.s8 %v6000
        %v6002 = vperm.slane %v5996, %v6001
        %v6004 = vunpack.c.l.s4 1934713408
        %v6005 = vunpack.c.0.s8 %v6004
        %v6006 = vperm.slane %v5998, %v6005
        %v6007 = vrot.slane %v5994, 4
        %v6008 = vsel %vm738, %v6007, %v5982
        %v6009 = vrot.slane %v5982, 4
        %v6010 = vsel %vm738, %v5994, %v6009
        %v6012 = vunpack.c.l.s4 1934713408
        %v6013 = vunpack.c.0.s8 %v6012
        %v6014 = vperm.slane %v6008, %v6013
        %v6016 = vunpack.c.l.s4 1934713408
        %v6017 = vunpack.c.0.s8 %v6016
        %v6018 = vperm.slane %v6010, %v6017
        %v6019 = vrot.slane %v6002, 4
        %v6020 = vsel %vm738, 0.0, %v6019
        %v6021 = vrot.slane %v6006, 4
        %v6022 = vsel %vm738, 0.0, %v6021
        %v6023 = vrot.slane %v6014, 4
        %v6024 = vsel %vm738, 0.0, %v6023
        %v6025 = vrot.slane %v6018, 4
        %v6026 = vsel %vm738, 0.0, %v6025
        %v6027 = vrot.slane %v5958, 4
        %v6028 = vsel %vm738, %v6027, %v5950
        %v6029 = vrot.slane %v5950, 4
        %v6030 = vsel %vm738, %v5958, %v6029
        %v6032 = vunpack.c.l.s4 1983009808
        %v6033 = vunpack.c.0.s8 %v6032
        %v6034 = vperm.slane %v6028, %v6033
        %v6036 = vunpack.c.l.s4 1983009808
        %v6037 = vunpack.c.0.s8 %v6036
        %v6038 = vperm.slane %v6030, %v6037
        %v6039 = vrot.slane %v5962, 4
        %v6040 = vsel %vm738, %v6039, %v5954
        %v6041 = vrot.slane %v5954, 4
        %v6042 = vsel %vm738, %v5962, %v6041
        %v6044 = vunpack.c.l.s4 1983009808
        %v6045 = vunpack.c.0.s8 %v6044
        %v6046 = vperm.slane %v6040, %v6045
        %v6048 = vunpack.c.l.s4 1983009808
        %v6049 = vunpack.c.0.s8 %v6048
        %v6050 = vperm.slane %v6042, %v6049
        %v6051 = vrot.slane %v6046, 4
        %v6052 = vsel %vm738, %v6051, %v6034
        %v6053 = vrot.slane %v6034, 4
        %v6054 = vsel %vm738, %v6046, %v6053
        %v6056 = vunpack.c.l.s4 1934713408
        %v6057 = vunpack.c.0.s8 %v6056
        %v6058 = vperm.slane %v6052, %v6057
        %v6060 = vunpack.c.l.s4 1934713408
        %v6061 = vunpack.c.0.s8 %v6060
        %v6062 = vperm.slane %v6054, %v6061
        %v6063 = vrot.slane %v6050, 4
        %v6064 = vsel %vm738, %v6063, %v6038
        %v6065 = vrot.slane %v6038, 4
        %v6066 = vsel %vm738, %v6050, %v6065
        %v6068 = vunpack.c.l.s4 1934713408
        %v6069 = vunpack.c.0.s8 %v6068
        %v6070 = vperm.slane %v6064, %v6069
        %v6072 = vunpack.c.l.s4 1934713408
        %v6073 = vunpack.c.0.s8 %v6072
        %v6074 = vperm.slane %v6066, %v6073
        %v6075 = vrot.slane %v6058, 4
        %v6076 = vsel %vm738, 0.0, %v6075
        %v6077 = vrot.slane %v6062, 4
        %v6078 = vsel %vm738, 0.0, %v6077
        %v6079 = vrot.slane %v6070, 4
        %v6080 = vsel %vm738, 0.0, %v6079
        %v6081 = vrot.slane %v6074, 4
        %v6082 = vsel %vm738, 0.0, %v6081
        %6084 = vrot.lane.b32.xlu0 %v6020, 16
        %v6085 = vpop.permute.xlu0 %6084
        %6088 = vrot.lane.b32.xlu0 %v6006, 32
        %v6089 = vpop.permute.xlu0 %6088
        %6092 = vrot.lane.b32.xlu0 %v6022, 48
        %v6093 = vpop.permute.xlu0 %6092
        %6096 = vrot.lane.b32.xlu0 %v6014, 64
        %v6097 = vpop.permute.xlu0 %6096
        %6100 = vrot.lane.b32.xlu0 %v6024, 80
        %v6101 = vpop.permute.xlu0 %6100
        %6104 = vrot.lane.b32.xlu0 %v6018, 96
        %v6105 = vpop.permute.xlu0 %6104
        %6108 = vrot.lane.b32.xlu0 %v6026, 112
        %v6109 = vpop.permute.xlu0 %6108
        %6112 = vrot.lane.b32.xlu0 %v6076, 16
        %v6113 = vpop.permute.xlu0 %6112
        %6116 = vrot.lane.b32.xlu0 %v6062, 32
        %v6117 = vpop.permute.xlu0 %6116
        %6120 = vrot.lane.b32.xlu0 %v6078, 48
        %v6121 = vpop.permute.xlu0 %6120
        %6124 = vrot.lane.b32.xlu0 %v6070, 64
        %v6125 = vpop.permute.xlu0 %6124
        %6128 = vrot.lane.b32.xlu0 %v6080, 80
        %v6129 = vpop.permute.xlu0 %6128
        %6132 = vrot.lane.b32.xlu0 %v6074, 96
        %v6133 = vpop.permute.xlu0 %6132
        %6136 = vrot.lane.b32.xlu0 %v6082, 112
        %v6137 = vpop.permute.xlu0 %6136
        %v6139 = vsel %vm1018, %v6002, %v6085
        %v6140 = vsel %vm1020, %v6139, %v6089
        %v6141 = vsel %vm1022, %v6140, %v6093
        %v6142 = vsel %vm1024, %v6141, %v6097
        %v6143 = vsel %vm1026, %v6142, %v6101
        %v6144 = vsel %vm1028, %v6143, %v6105
        %v6145 = vsel %vm1030, %v6144, %v6109
        %v6146 = vsel %vm1018, %v6058, %v6113
        %v6147 = vsel %vm1020, %v6146, %v6117
        %v6148 = vsel %vm1022, %v6147, %v6121
        %v6149 = vsel %vm1024, %v6148, %v6125
        %v6150 = vsel %vm1026, %v6149, %v6129
        %v6151 = vsel %vm1028, %v6150, %v6133
        %v6152 = vsel %vm1030, %v6151, %v6137
        %6153 = vst [vmem:[#allocation4 + $0x10] sm:$0xf] %v6145
        %6154 = vst [vmem:[#allocation4 + $0x18] sm:$0xf] %v6152
        %s6155 = scalar_lea.vmem [#allocation10], 16
        %v6156 = vld [vmem:[%s6155] sm:$0xff]
        %v6157 = vld [vmem:[#allocation4] sm:$0xff]
        %v6158 = vld [vmem:[#allocation4 + $0x8] sm:$0xff]
        %v6159 = vld [vmem:[#allocation4 + $0x10] sm:$0xf]
        %v6160 = vld [vmem:[#allocation4 + $0x18] sm:$0xf]
        %v6162 = vsel %vm5433, %v6156, 0
        %v6165 = vsel %vm5437, %v6159, 0
        %v6168 = vsel %vm5437, %v6160, 0
        %6170 = vmatpush.msra.mxu0 0.0
        %6171 = vmatpush.msra.mxu0 0.0
        %6172 = vmatpush.msra.mxu0 0.0
        %6173 = vmatpush.msra.mxu0 0.0
        %6174 = vmatpush.msra.mxu0 0.0
        %6175 = vmatpush.msra.mxu0 0.0
        %6176 = vmatpush.msra.mxu0 0.0
        %6177 = vmatpush.msra.mxu0 0.0
        %6178 = vmatpush.msra.mxu0 0.0
        %6179 = vmatpush.msra.mxu0 0.0
        %6180 = vmatpush.msra.mxu0 0.0
        %6181 = vmatpush.msra.mxu0 0.0
        %6182 = vmatpush.msra.mxu0 0.0
        %6183 = vmatpush.msra.mxu0 0.0
        %6184 = vmatpush.msra.mxu0 %v6165
        %6185 = vmatpush.msra.mxu0 %v6157
        %6186 = vmatmul.f32.gmra.mxu0 %v6162
        %v6187 = vpop.f32.mrf.mxu0
        %v6188 = vadd.f32 0.0, %v6187
        %6189 = vdwg.mxu0
        %6190 = vmatpush.msra.mxu0 0.0
        %6191 = vmatpush.msra.mxu0 0.0
        %6192 = vmatpush.msra.mxu0 0.0
        %6193 = vmatpush.msra.mxu0 0.0
        %6194 = vmatpush.msra.mxu0 0.0
        %6195 = vmatpush.msra.mxu0 0.0
        %6196 = vmatpush.msra.mxu0 0.0
        %6197 = vmatpush.msra.mxu0 0.0
        %6198 = vmatpush.msra.mxu0 0.0
        %6199 = vmatpush.msra.mxu0 0.0
        %6200 = vmatpush.msra.mxu0 0.0
        %6201 = vmatpush.msra.mxu0 0.0
        %6202 = vmatpush.msra.mxu0 0.0
        %6203 = vmatpush.msra.mxu0 0.0
        %6204 = vmatpush.msra.mxu0 %v6168
        %6205 = vmatpush.msra.mxu0 %v6158
        %6206 = vmatmul.f32.gmra.mxu0 %v6162
        %v6207 = vpop.f32.mrf.mxu0
        %v6208 = vadd.f32 0.0, %v6207
        %6209 = vdwg.mxu0
        %v6210 = vadd.f32 %v5511, %v6188
        %v6211 = vadd.f32 %v5531, %v6208
        %v6212 = vld [vmem:[%s8] sm:$0xff]
        %6214 = vset.pattern.permute.xlu0 0
        %6215 = vperm.xlu0 %6214, %v6212
        %v6216 = vpop.permute.xlu0 %6215
        %v6218 = vmul.f32 %v6210, %v6216
        %v6219 = vmul.f32 %v6211, %v6216
        %v6220 = vld [vmem:[%s9] sm:$0xff]
        %6222 = vset.pattern.permute.xlu0 0
        %6223 = vperm.xlu0 %6222, %v6220
        %v6224 = vpop.permute.xlu0 %6223
        %v6226 = vadd.f32 %v6218, %v6224
        %v6227 = vadd.f32 %v6219, %v6224
        %v6228 = vmax.f32 %v6226, 0.0
        %v6229 = vmax.f32 %v6227, 0.0
        %6230 = vst [vmem:[%s456] sm:$0xff] %v6228
        %6231 = vst [vmem:[%s456 + $0x8] sm:$0xff] %v6229
        %p6232 = scmp.lt.s32.totalorder %s28, 1
        %s6233 = scalar_select %p6232, %s28, 1
        %s6234 = smul.addr %s6233, 2
        %s6235 = smul.addr %s6234, 8
        %s6236 = scalar_lea.vmem %s10, %s6235
        // Predicated region
        $region77: #{up_forward.1} parent=59 // pred_check
          %p6237 = pneg %p266
        $region78: #{up_forward.1} parent=59 // pred_check_branch
          %6239 = sbr.rel (%p6237) target = $region80
        $region79: #{up_forward.1} parent=59 // pred_region
          _
        $region80: #{up_forward.1} parent=59 // pred_fallthru
          _
      $region60: #{up_forward.1} parent=5 // pred_fallthru
        _
      %p6240 = scmp.le.s32.totalorder 2, %s23
      // Predicated region
      $region81: #{up_forward.1} parent=5 // pred_check
        %p6241 = pneg %p6240
      $region82: #{up_forward.1} parent=5 // pred_check_branch
        %6243 = sbr.rel (%p6241) target = $region84
      $region83: #{up_forward.1} parent=5 // pred_region
        %s6244 = ssub.s32 %s23, 2
        // Predicated region
        $region85: #{up_forward.1} parent=83 // pred_check
          %p6245 = pneg %p272
        $region86: #{up_forward.1} parent=83 // pred_check_branch
          %6247 = sbr.rel (%p6245) target = $region88
        $region87: #{up_forward.1} parent=83 // pred_region
          %p6248 = scmp.lt.s32.totalorder %s29, 1
          %s6249 = scalar_select %p6248, %s29, 1
          %s6250 = smul.addr %s6249, 2
          %s6251 = smul.addr %s6250, 8
          %s6252 = scalar_lea.vmem %s10, %s6251
        $region88: #{up_forward.1} parent=83 // pred_fallthru
          _
      $region84: #{up_forward.1} parent=5 // pred_fallthru
        _
    $region6: #{up_forward.1} parent=1 // loop_footer
      %s27 = sadd.s32 1, %s23
    $region7: #{up_forward.1} parent=1 // loop_footer_branch
      %22 = sbr.rel target = $region3
    $region8: #{up_forward.1} parent=1 // loop_exit
      _
    %6253 = vsyncpa [#allocation6], 1
    %s6254 = scalar_lea.sflag [#allocation6], 1
    %6255 = vsyncpa %s6254, 1
    %6256 = vsyncpa [#allocation8], 1
    %s6257 = scalar_lea.sflag [#allocation8], 1
    %6258 = vsyncpa %s6257, 1
    %6259 = vsyncpa [#allocation11], 1

</llo_original>
